<compile_context>
chip_gen: v7x
topology: tpu7x:2x2x1
jax: 0.10.0
libtpu: 0.0.40
codegen_flags: <defaults>
</compile_context>

<pallas_src>
import functools
import math

import numpy as np
import jax
import jax.numpy as jnp
from jax.experimental import pallas as pl
from jax.experimental.pallas import tpu as pltpu


def transformer_block_kernel(x_ref, wqkv_ref, bqkv_ref, wo_ref, bo_ref, g_ref, b_ref,
                             w1_ref, b1_ref, w2_ref, b2_ref, gsum_ref, repd_ref,
                             o_ref, *, E, H, D, S, Bt, eps, compute_dtype):
    f32 = jnp.float32
    scale = 1.0 / math.sqrt(D)
    cd = jnp.dtype(compute_dtype)
    exact = cd == jnp.dtype(f32)

    if exact:
        def mm(a, b):
            return jnp.dot(a, b, preferred_element_type=f32)
    else:
        # bf16 MXU operands (weights already cast host-side); f32 accumulation.
        def mm(a, b):
            return jnp.dot(a.astype(cd), b.astype(cd), preferred_element_type=f32)

    def tile_lanes(t, n):
        return t if n == 1 else jnp.concatenate([t] * n, axis=1)

    x = x_ref[...]                                              # (R, E) float32

    # ---- fused Q/K/V projection: one (R, E) @ (E, 3E) MXU pass -----------------------
    qkv = mm(x, wqkv_ref[...]) + bqkv_ref[...]                  # (R, 3E) f32
    q = qkv[:, 0 * E:1 * E]
    k = qkv[:, 1 * E:2 * E]
    v = qkv[:, 2 * E:3 * E]

    gsum = gsum_ref[...]                                        # (E, H): D-group sum
    repd = repd_ref[...]                                        # (H, E): D-group bcast

    # ---- attention scores (module quirk: softmax over *key heads* per position) ------
    # Per key head hk: scores_blk[:, hq] = <q head hq, k head hk> (row-local).
    # Peak temporaries stay O(R*E); no (R, H*E) lane expansion is materialized.
    score_blocks = []
    for hk in range(H):
        kb = tile_lanes(k[:, hk * D:(hk + 1) * D], H)           # (R, E)
        score_blocks.append(mm(q * kb, gsum) * scale)           # (R, H)

    # softmax over hk: pure elementwise max/sum across the H (R, H) blocks (VALU only).
    m = score_blocks[0]
    for blk in score_blocks[1:]:
        m = jnp.maximum(m, blk)
    p_blocks = [jnp.exp(blk - m) for blk in score_blocks]
    den = p_blocks[0]
    for pb in p_blocks[1:]:
        den = den + pb
    inv_den = (1.0 / den) if exact else pl.reciprocal(den, approx=True)   # (R, H)

    # ---- attention @ V, accumulated per key head (replaces the gout matmul) ----------
    #   o_heads[:, hq*D+d] = sum_hk attn[:, hq | hk] * v[:, hk*D+d]
    o_heads = jnp.zeros_like(q)                                 # (R, E) f32
    for hk in range(H):
        a_exp = mm(p_blocks[hk] * inv_den, repd)                # (R, E): attn col bcast D-wide
        vb = tile_lanes(v[:, hk * D:(hk + 1) * D], H)           # (R, E)
        o_heads = o_heads + a_exp * vb

    # ---- head/seq merge: torch's per-batch (H, S, D) -> (S, E) reshape ---------------
    # Static contiguous slice copies (no permutation matmul, no quadratic-in-R constant).
    # TODO(synk): for large S*H*Bt switch this to a strided VMEM-scratch gather.
    rows = []
    for b in range(Bt):
        base = b * S
        for s in range(S):
            pieces = []
            for j in range(H):
                i = s * H + j
                h, sp = i // S, i % S
                pieces.append(o_heads[base + sp:base + sp + 1, h * D:(h + 1) * D])
            rows.append(jnp.concatenate(pieces, axis=1))        # (1, E)
    out_merged = jnp.concatenate(rows, axis=0)                  # (R, E)

    attn_out = mm(out_merged, wo_ref[...]) + bo_ref[...]        # (R, E)

    def layer_norm(y):                                          # f32 row LayerNorm
        mu = jnp.mean(y, axis=1, keepdims=True)
        var = jnp.mean((y - mu) * (y - mu), axis=1, keepdims=True)
        return (y - mu) * jax.lax.rsqrt(var + eps) * g_ref[...] + b_ref[...]

    # TODO(synk): nn.Dropout is treated as identity (eval-mode forward).
    x1 = layer_norm(x + attn_out)
    h1 = jnp.maximum(mm(x1, w1_ref[...]) + b1_ref[...], 0.0)    # (R, HID)
    ff = mm(h1, w2_ref[...]) + b2_ref[...]                      # (R, E)
    o_ref[...] = layer_norm(x1 + ff).astype(o_ref.dtype)


def transformer_block(x, params, *, num_heads, eps=1e-5, block_batch=None,
                      compute_dtype=jnp.bfloat16):
    N, S, E = x.shape
    H = num_heads
    D = E // H
    assert E == H * D

    (wq, bq, wk, bk, wv, bv, wo, bo, gamma, beta, w1, b1, w2, b2) = params

    # ---- row tile: whole batch elements per step, 8-sublane aligned, ~256 MXU rows,
    #      and >= 2 grid steps when possible so the v7x "parallel" axis splits over 2 TCs.
    if block_batch is None:
        target_rows = 256
        cands = [bb for bb in range(1, N + 1) if N % bb == 0 and (bb * S) % 8 == 0]
        multi = [bb for bb in cands if N // bb >= 2]
        pool = multi if multi else cands
        if pool:
            fit = [bb for bb in pool if bb * S <= target_rows]
            block_batch = max(fit) if fit else min(pool)
        else:
            block_batch = N          # single full-extent tile (full-array block is legal)
    assert N % block_batch == 0
    R = block_batch * S
    NROWS = N * S
    assert (R % 8 == 0) or (R == NROWS), (
        "row tile must be a multiple of 8 sublanes or cover the full array")

    cd = jnp.dtype(compute_dtype)

    def cast_w(w):
        return w if cd == jnp.dtype(jnp.float32) else w.astype(cd)

    # Fused QKV projection weight; matmul weights & 0/1 constants in the compute dtype.
    w_qkv = cast_w(jnp.concatenate([wq, wk, wv], axis=1))        # (E, 3E)
    b_qkv = jnp.concatenate([bq, bk, bv], axis=1)                # (1, 3E) f32
    wo_c, w1_c, w2_c = cast_w(wo), cast_w(w1), cast_w(w2)

    # gsum (E, H): sums each D-wide lane group hq into column hq.
    gsum = cast_w(jnp.asarray(
        np.kron(np.eye(H, dtype=np.float32), np.ones((D, 1), dtype=np.float32))))
    # repd (H, E): broadcasts column hq across its D-wide lane group.
    repd = cast_w(jnp.asarray(
        np.kron(np.eye(H, dtype=np.float32), np.ones((1, D), dtype=np.float32))))

    x2d = x.reshape(NROWS, E)
    consts = [w_qkv, b_qkv, wo_c, bo, gamma, beta, w1_c, b1, w2_c, b2, gsum, repd]

    kernel = functools.partial(transformer_block_kernel, E=E, H=H, D=D, S=S,
                               Bt=block_batch, eps=eps, compute_dtype=compute_dtype)

    # Generation-aware VMEM budget: ~48 MiB on v7x (64 MiB phys), ~96-100 MiB on v5e/v6e.
    try:
        vmem_cap = int(pltpu.get_tpu_info().vmem_capacity_bytes)
    except Exception:
        vmem_cap = 64 * 1024 * 1024
    vmem_limit = max(32 * 1024 * 1024, min(vmem_cap * 3 // 4, 100 * 1024 * 1024))

    def build(single_buffer_weights):
        in_specs = [pl.BlockSpec((R, E), lambda i: (i, 0))]
        for c in consts:
            if single_buffer_weights:
                # Grid-invariant block (index map always (0,0)): no pipelining needed,
                # single-buffering halves its VMEM footprint.
                spec = pl.BlockSpec(c.shape, lambda i: (0, 0),
                                    pipeline_mode=pl.Buffered(1))
            else:
                spec = pl.BlockSpec(c.shape, lambda i: (0, 0))
            in_specs.append(spec)
        return pl.pallas_call(
            kernel,
            out_shape=jax.ShapeDtypeStruct((NROWS, E), x.dtype),
            grid_spec=pltpu.PrefetchScalarGridSpec(
                num_scalar_prefetch=0,
                grid=(NROWS // R,),
                in_specs=in_specs,
                out_specs=pl.BlockSpec((R, E), lambda i: (i, 0)),
            ),
            compiler_params=pltpu.CompilerParams(
                dimension_semantics=("parallel",),   # independent row tiles (v7x: 2 TCs)
                vmem_limit_bytes=vmem_limit,
            ),
        )

    try:
        out2d = build(True)(x2d, *consts)
    except Exception:
        # Fallback for Pallas versions without BlockSpec.pipeline_mode / Buffered(1).
        out2d = build(False)(x2d, *consts)
    return out2d.reshape(N, S, E)


def init_params(key, E, H, HID):
    ks = jax.random.split(key, 12)

    def linear(kw, kb, fan_in, fan_out):
        bound = 1.0 / math.sqrt(fan_in)
        w = jax.random.uniform(kw, (fan_in, fan_out), jnp.float32, -bound, bound)  # (in, out)
        b = jax.random.uniform(kb, (1, fan_out), jnp.float32, -bound, bound)
        return w, b

    wq, bq = linear(ks[0], ks[1], E, E)
    wk, bk = linear(ks[2], ks[3], E, E)
    wv, bv = linear(ks[4], ks[5], E, E)
    wo, bo = linear(ks[6], ks[7], E, E)
    gamma = jnp.ones((1, E), jnp.float32)
    beta = jnp.zeros((1, E), jnp.float32)
    w1, b1 = linear(ks[8], ks[9], E, HID)
    w2, b2 = linear(ks[10], ks[11], HID, E)
    return [wq, bq, wk, bk, wv, bv, wo, bo, gamma, beta, w1, b1, w2, b2]


def reference_forward(x, params, num_heads, eps=1e-5):
    """Pure-JAX transliteration of the PyTorch module (including its einsum quirk)."""
    wq, bq, wk, bk, wv, bv, wo, bo, gamma, beta, w1, b1, w2, b2 = params
    N, S, E = x.shape
    H = num_heads
    D = E // H
    Q = (x @ wq + bq).reshape(N, S, H, D).transpose(0, 2, 1, 3)
    K = (x @ wk + bk).reshape(N, S, H, D).transpose(0, 2, 1, 3)
    V = (x @ wv + bv).reshape(N, S, H, D).transpose(0, 2, 1, 3)
    scores = jnp.einsum('nqhd,nkhd->nhqk', Q, K) / math.sqrt(D)
    attn = jax.nn.softmax(scores, axis=-1)
    out = jnp.einsum('nhql,nlhd->nqhd', attn, V).reshape(N, S, E)
    attn_out = out @ wo + bo

    def ln(y):
        mu = y.mean(-1, keepdims=True)
        var = ((y - mu) ** 2).mean(-1, keepdims=True)
        return (y - mu) / jnp.sqrt(var + eps) * gamma[0] + beta[0]

    x1 = ln(x + attn_out)
    ff = jnp.maximum(x1 @ w1 + b1, 0.0) @ w2 + b2
    return ln(x1 + ff)


if __name__ == "__main__":
    N, S, E, H, HID = 2, 8, 32, 4, 64   # batch=2, seq=8, emb=32, heads=4, hidden=64
    key = jax.random.PRNGKey(0)
    kx, kp = jax.random.split(key)
    x = jax.random.normal(kx, (N, S, E), jnp.float32)
    params = init_params(kp, E, H, HID)

    ref = reference_forward(x, params, H)

    # f32 path (exact check against the reference; exercises the 2-step grid).
    out_f32 = jax.block_until_ready(
        transformer_block(x, params, num_heads=H, compute_dtype=jnp.float32))
    assert out_f32.shape == (N, S, E)
    if not bool(jnp.allclose(out_f32, ref, atol=2e-3, rtol=2e-3)):
        raise AssertionError(
            f"Pallas/JAX mismatch (f32), max abs err = {float(jnp.max(jnp.abs(out_f32 - ref)))}")

    # Default bf16 fast path (MXU-native on v5e/v6e/v7x); loose sanity check.
    out_bf16 = jax.block_until_ready(transformer_block(x, params, num_heads=H))
    err_bf16 = float(jnp.max(jnp.abs(out_bf16 - ref)))
    if err_bf16 > 0.2:
        raise AssertionError(f"Pallas bf16 path diverged, max abs err = {err_bf16}")

    print("KERNEL_OK")
</pallas_src>

<mosaic_0001>
module attributes {stable_mosaic.version = 11 : i64} {
  func.func @transformer_block_kernel(%arg0: i32, %arg1: memref<8x32xf32, #tpu.memory_space<vmem>>, %arg2: memref<32x96xf32, #tpu.memory_space<vmem>>, %arg3: memref<1x96xf32, #tpu.memory_space<vmem>>, %arg4: memref<32x32xf32, #tpu.memory_space<vmem>>, %arg5: memref<1x32xf32, #tpu.memory_space<vmem>>, %arg6: memref<1x32xf32, #tpu.memory_space<vmem>>, %arg7: memref<1x32xf32, #tpu.memory_space<vmem>>, %arg8: memref<32x64xf32, #tpu.memory_space<vmem>>, %arg9: memref<1x64xf32, #tpu.memory_space<vmem>>, %arg10: memref<64x32xf32, #tpu.memory_space<vmem>>, %arg11: memref<1x32xf32, #tpu.memory_space<vmem>>, %arg12: memref<32x4xf32, #tpu.memory_space<vmem>>, %arg13: memref<4x32xf32, #tpu.memory_space<vmem>>, %arg14: memref<8x32xf32, #tpu.memory_space<vmem>>) attributes {dimension_semantics = [#tpu.dimension_semantics<parallel>], iteration_bounds = array<i64: 2>, scalar_prefetch = 0 : i64, scratch_operands = 0 : i64, tpu.core_type = #tpu.core_type<tc>, window_params = [{transform_indices = @transform_0, window_bounds = array<i64: 8, 32>}, {pipeline_mode = #tpu.pipeline_mode<synchronous>, transform_indices = @transform_1, window_bounds = array<i64: 32, 96>}, {pipeline_mode = #tpu.pipeline_mode<synchronous>, transform_indices = @transform_2, window_bounds = array<i64: 1, 96>}, {pipeline_mode = #tpu.pipeline_mode<synchronous>, transform_indices = @transform_3, window_bounds = array<i64: 32, 32>}, {pipeline_mode = #tpu.pipeline_mode<synchronous>, transform_indices = @transform_4, window_bounds = array<i64: 1, 32>}, {pipeline_mode = #tpu.pipeline_mode<synchronous>, transform_indices = @transform_5, window_bounds = array<i64: 1, 32>}, {pipeline_mode = #tpu.pipeline_mode<synchronous>, transform_indices = @transform_6, window_bounds = array<i64: 1, 32>}, {pipeline_mode = #tpu.pipeline_mode<synchronous>, transform_indices = @transform_7, window_bounds = array<i64: 32, 64>}, {pipeline_mode = #tpu.pipeline_mode<synchronous>, transform_indices = @transform_8, window_bounds = array<i64: 1, 64>}, {pipeline_mode = #tpu.pipeline_mode<synchronous>, transform_indices = @transform_9, window_bounds = array<i64: 64, 32>}, {pipeline_mode = #tpu.pipeline_mode<synchronous>, transform_indices = @transform_10, window_bounds = array<i64: 1, 32>}, {pipeline_mode = #tpu.pipeline_mode<synchronous>, transform_indices = @transform_11, window_bounds = array<i64: 32, 4>}, {pipeline_mode = #tpu.pipeline_mode<synchronous>, transform_indices = @transform_12, window_bounds = array<i64: 4, 32>}, {transform_indices = @transform_13, window_bounds = array<i64: 8, 32>}]} {
    %c0 = arith.constant 0 : index
    %c0_0 = arith.constant 0 : index
    %0 = vector.load %arg1[%c0, %c0_0] : memref<8x32xf32, #tpu.memory_space<vmem>>, vector<8x32xf32>
    %c0_1 = arith.constant 0 : index
    %c0_2 = arith.constant 0 : index
    %1 = vector.load %arg2[%c0_1, %c0_2] : memref<32x96xf32, #tpu.memory_space<vmem>>, vector<32x96xf32>
    %cst = arith.constant dense<0.000000e+00> : vector<8x96xf32>
    %2 = tpu.matmul %0, %1, %cst {dimension_numbers = #tpu.dot_dimension_numbers<[1], [0], [0], [1], [0, 0, 1, 1], [], []>} : vector<8x32xf32>, vector<32x96xf32>, vector<8x96xf32> -> vector<8x96xf32>
    %c0_3 = arith.constant 0 : index
    %c0_4 = arith.constant 0 : index
    %3 = vector.load %arg3[%c0_3, %c0_4] : memref<1x96xf32, #tpu.memory_space<vmem>>, vector<1x96xf32>
    %4 = vector.broadcast %3 : vector<1x96xf32> to vector<8x96xf32>
    %5 = arith.addf %2, %4 : vector<8x96xf32>
    %6 = vector.extract_strided_slice %5 {offsets = [0, 0], sizes = [8, 32], strides = [1, 1]} : vector<8x96xf32> to vector<8x32xf32>
    %7 = vector.extract_strided_slice %5 {offsets = [0, 32], sizes = [8, 32], strides = [1, 1]} : vector<8x96xf32> to vector<8x32xf32>
    %8 = vector.extract_strided_slice %5 {offsets = [0, 64], sizes = [8, 32], strides = [1, 1]} : vector<8x96xf32> to vector<8x32xf32>
    %c0_5 = arith.constant 0 : index
    %c0_6 = arith.constant 0 : index
    %9 = vector.load %arg12[%c0_5, %c0_6] : memref<32x4xf32, #tpu.memory_space<vmem>>, vector<32x4xf32>
    %c0_7 = arith.constant 0 : index
    %c0_8 = arith.constant 0 : index
    %10 = vector.load %arg13[%c0_7, %c0_8] : memref<4x32xf32, #tpu.memory_space<vmem>>, vector<4x32xf32>
    %11 = vector.extract_strided_slice %7 {offsets = [0, 0], sizes = [8, 8], strides = [1, 1]} : vector<8x32xf32> to vector<8x8xf32>
    %12 = tpu.concatenate %11, %11, %11, %11 in 1 : vector<8x8xf32>, vector<8x8xf32>, vector<8x8xf32>, vector<8x8xf32> -> vector<8x32xf32>
    %13 = arith.mulf %6, %12 : vector<8x32xf32>
    %cst_9 = arith.constant dense<0.000000e+00> : vector<8x4xf32>
    %14 = tpu.matmul %13, %9, %cst_9 {dimension_numbers = #tpu.dot_dimension_numbers<[1], [0], [0], [1], [0, 0, 1, 1], [], []>} : vector<8x32xf32>, vector<32x4xf32>, vector<8x4xf32> -> vector<8x4xf32>
    %cst_10 = arith.constant 0.353553385 : f32
    %15 = vector.broadcast %cst_10 : f32 to vector<8x4xf32>
    %16 = arith.mulf %14, %15 : vector<8x4xf32>
    %17 = vector.extract_strided_slice %7 {offsets = [0, 8], sizes = [8, 8], strides = [1, 1]} : vector<8x32xf32> to vector<8x8xf32>
    %18 = tpu.concatenate %17, %17, %17, %17 in 1 : vector<8x8xf32>, vector<8x8xf32>, vector<8x8xf32>, vector<8x8xf32> -> vector<8x32xf32>
    %19 = arith.mulf %6, %18 : vector<8x32xf32>
    %cst_11 = arith.constant dense<0.000000e+00> : vector<8x4xf32>
    %20 = tpu.matmul %19, %9, %cst_11 {dimension_numbers = #tpu.dot_dimension_numbers<[1], [0], [0], [1], [0, 0, 1, 1], [], []>} : vector<8x32xf32>, vector<32x4xf32>, vector<8x4xf32> -> vector<8x4xf32>
    %cst_12 = arith.constant 0.353553385 : f32
    %21 = vector.broadcast %cst_12 : f32 to vector<8x4xf32>
    %22 = arith.mulf %20, %21 : vector<8x4xf32>
    %23 = vector.extract_strided_slice %7 {offsets = [0, 16], sizes = [8, 8], strides = [1, 1]} : vector<8x32xf32> to vector<8x8xf32>
    %24 = tpu.concatenate %23, %23, %23, %23 in 1 : vector<8x8xf32>, vector<8x8xf32>, vector<8x8xf32>, vector<8x8xf32> -> vector<8x32xf32>
    %25 = arith.mulf %6, %24 : vector<8x32xf32>
    %cst_13 = arith.constant dense<0.000000e+00> : vector<8x4xf32>
    %26 = tpu.matmul %25, %9, %cst_13 {dimension_numbers = #tpu.dot_dimension_numbers<[1], [0], [0], [1], [0, 0, 1, 1], [], []>} : vector<8x32xf32>, vector<32x4xf32>, vector<8x4xf32> -> vector<8x4xf32>
    %cst_14 = arith.constant 0.353553385 : f32
    %27 = vector.broadcast %cst_14 : f32 to vector<8x4xf32>
    %28 = arith.mulf %26, %27 : vector<8x4xf32>
    %29 = vector.extract_strided_slice %7 {offsets = [0, 24], sizes = [8, 8], strides = [1, 1]} : vector<8x32xf32> to vector<8x8xf32>
    %30 = tpu.concatenate %29, %29, %29, %29 in 1 : vector<8x8xf32>, vector<8x8xf32>, vector<8x8xf32>, vector<8x8xf32> -> vector<8x32xf32>
    %31 = arith.mulf %6, %30 : vector<8x32xf32>
    %cst_15 = arith.constant dense<0.000000e+00> : vector<8x4xf32>
    %32 = tpu.matmul %31, %9, %cst_15 {dimension_numbers = #tpu.dot_dimension_numbers<[1], [0], [0], [1], [0, 0, 1, 1], [], []>} : vector<8x32xf32>, vector<32x4xf32>, vector<8x4xf32> -> vector<8x4xf32>
    %cst_16 = arith.constant 0.353553385 : f32
    %33 = vector.broadcast %cst_16 : f32 to vector<8x4xf32>
    %34 = arith.mulf %32, %33 : vector<8x4xf32>
    %35 = arith.maximumf %16, %22 : vector<8x4xf32>
    %36 = arith.maximumf %35, %28 : vector<8x4xf32>
    %37 = arith.maximumf %36, %34 : vector<8x4xf32>
    %38 = arith.subf %16, %37 : vector<8x4xf32>
    %39 = math.exp %38 : vector<8x4xf32>
    %40 = arith.subf %22, %37 : vector<8x4xf32>
    %41 = math.exp %40 : vector<8x4xf32>
    %42 = arith.subf %28, %37 : vector<8x4xf32>
    %43 = math.exp %42 : vector<8x4xf32>
    %44 = arith.subf %34, %37 : vector<8x4xf32>
    %45 = math.exp %44 : vector<8x4xf32>
    %46 = arith.addf %39, %41 : vector<8x4xf32>
    %47 = arith.addf %46, %43 : vector<8x4xf32>
    %48 = arith.addf %47, %45 : vector<8x4xf32>
    %cst_17 = arith.constant 1.000000e+00 : f32
    %49 = vector.broadcast %cst_17 : f32 to vector<8x4xf32>
    %50 = arith.divf %49, %48 : vector<8x4xf32>
    %cst_18 = arith.constant 0.000000e+00 : f32
    %51 = vector.broadcast %cst_18 : f32 to vector<8x32xf32>
    %52 = arith.mulf %39, %50 : vector<8x4xf32>
    %cst_19 = arith.constant dense<0.000000e+00> : vector<8x32xf32>
    %53 = tpu.matmul %52, %10, %cst_19 {dimension_numbers = #tpu.dot_dimension_numbers<[1], [0], [0], [1], [0, 0, 1, 1], [], []>} : vector<8x4xf32>, vector<4x32xf32>, vector<8x32xf32> -> vector<8x32xf32>
    %54 = vector.extract_strided_slice %8 {offsets = [0, 0], sizes = [8, 8], strides = [1, 1]} : vector<8x32xf32> to vector<8x8xf32>
    %55 = tpu.concatenate %54, %54, %54, %54 in 1 : vector<8x8xf32>, vector<8x8xf32>, vector<8x8xf32>, vector<8x8xf32> -> vector<8x32xf32>
    %56 = arith.mulf %53, %55 : vector<8x32xf32>
    %57 = arith.addf %51, %56 : vector<8x32xf32>
    %58 = arith.mulf %41, %50 : vector<8x4xf32>
    %cst_20 = arith.constant dense<0.000000e+00> : vector<8x32xf32>
    %59 = tpu.matmul %58, %10, %cst_20 {dimension_numbers = #tpu.dot_dimension_numbers<[1], [0], [0], [1], [0, 0, 1, 1], [], []>} : vector<8x4xf32>, vector<4x32xf32>, vector<8x32xf32> -> vector<8x32xf32>
    %60 = vector.extract_strided_slice %8 {offsets = [0, 8], sizes = [8, 8], strides = [1, 1]} : vector<8x32xf32> to vector<8x8xf32>
    %61 = tpu.concatenate %60, %60, %60, %60 in 1 : vector<8x8xf32>, vector<8x8xf32>, vector<8x8xf32>, vector<8x8xf32> -> vector<8x32xf32>
    %62 = arith.mulf %59, %61 : vector<8x32xf32>
    %63 = arith.addf %57, %62 : vector<8x32xf32>
    %64 = arith.mulf %43, %50 : vector<8x4xf32>
    %cst_21 = arith.constant dense<0.000000e+00> : vector<8x32xf32>
    %65 = tpu.matmul %64, %10, %cst_21 {dimension_numbers = #tpu.dot_dimension_numbers<[1], [0], [0], [1], [0, 0, 1, 1], [], []>} : vector<8x4xf32>, vector<4x32xf32>, vector<8x32xf32> -> vector<8x32xf32>
    %66 = vector.extract_strided_slice %8 {offsets = [0, 16], sizes = [8, 8], strides = [1, 1]} : vector<8x32xf32> to vector<8x8xf32>
    %67 = tpu.concatenate %66, %66, %66, %66 in 1 : vector<8x8xf32>, vector<8x8xf32>, vector<8x8xf32>, vector<8x8xf32> -> vector<8x32xf32>
    %68 = arith.mulf %65, %67 : vector<8x32xf32>
    %69 = arith.addf %63, %68 : vector<8x32xf32>
    %70 = arith.mulf %45, %50 : vector<8x4xf32>
    %cst_22 = arith.constant dense<0.000000e+00> : vector<8x32xf32>
    %71 = tpu.matmul %70, %10, %cst_22 {dimension_numbers = #tpu.dot_dimension_numbers<[1], [0], [0], [1], [0, 0, 1, 1], [], []>} : vector<8x4xf32>, vector<4x32xf32>, vector<8x32xf32> -> vector<8x32xf32>
    %72 = vector.extract_strided_slice %8 {offsets = [0, 24], sizes = [8, 8], strides = [1, 1]} : vector<8x32xf32> to vector<8x8xf32>
    %73 = tpu.concatenate %72, %72, %72, %72 in 1 : vector<8x8xf32>, vector<8x8xf32>, vector<8x8xf32>, vector<8x8xf32> -> vector<8x32xf32>
    %74 = arith.mulf %71, %73 : vector<8x32xf32>
    %75 = arith.addf %69, %74 : vector<8x32xf32>
    %76 = vector.extract_strided_slice %75 {offsets = [0, 0], sizes = [1, 8], strides = [1, 1]} : vector<8x32xf32> to vector<1x8xf32>
    %77 = vector.extract_strided_slice %75 {offsets = [1, 0], sizes = [1, 8], strides = [1, 1]} : vector<8x32xf32> to vector<1x8xf32>
    %78 = vector.extract_strided_slice %75 {offsets = [2, 0], sizes = [1, 8], strides = [1, 1]} : vector<8x32xf32> to vector<1x8xf32>
    %79 = vector.extract_strided_slice %75 {offsets = [3, 0], sizes = [1, 8], strides = [1, 1]} : vector<8x32xf32> to vector<1x8xf32>
    %80 = tpu.concatenate %76, %77, %78, %79 in 1 : vector<1x8xf32>, vector<1x8xf32>, vector<1x8xf32>, vector<1x8xf32> -> vector<1x32xf32>
    %81 = vector.extract_strided_slice %75 {offsets = [4, 0], sizes = [1, 8], strides = [1, 1]} : vector<8x32xf32> to vector<1x8xf32>
    %82 = vector.extract_strided_slice %75 {offsets = [5, 0], sizes = [1, 8], strides = [1, 1]} : vector<8x32xf32> to vector<1x8xf32>
    %83 = vector.extract_strided_slice %75 {offsets = [6, 0], sizes = [1, 8], strides = [1, 1]} : vector<8x32xf32> to vector<1x8xf32>
    %84 = vector.extract_strided_slice %75 {offsets = [7, 0], sizes = [1, 8], strides = [1, 1]} : vector<8x32xf32> to vector<1x8xf32>
    %85 = tpu.concatenate %81, %82, %83, %84 in 1 : vector<1x8xf32>, vector<1x8xf32>, vector<1x8xf32>, vector<1x8xf32> -> vector<1x32xf32>
    %86 = vector.extract_strided_slice %75 {offsets = [0, 8], sizes = [1, 8], strides = [1, 1]} : vector<8x32xf32> to vector<1x8xf32>
    %87 = vector.extract_strided_slice %75 {offsets = [1, 8], sizes = [1, 8], strides = [1, 1]} : vector<8x32xf32> to vector<1x8xf32>
    %88 = vector.extract_strided_slice %75 {offsets = [2, 8], sizes = [1, 8], strides = [1, 1]} : vector<8x32xf32> to vector<1x8xf32>
    %89 = vector.extract_strided_slice %75 {offsets = [3, 8], sizes = [1, 8], strides = [1, 1]} : vector<8x32xf32> to vector<1x8xf32>
    %90 = tpu.concatenate %86, %87, %88, %89 in 1 : vector<1x8xf32>, vector<1x8xf32>, vector<1x8xf32>, vector<1x8xf32> -> vector<1x32xf32>
    %91 = vector.extract_strided_slice %75 {offsets = [4, 8], sizes = [1, 8], strides = [1, 1]} : vector<8x32xf32> to vector<1x8xf32>
    %92 = vector.extract_strided_slice %75 {offsets = [5, 8], sizes = [1, 8], strides = [1, 1]} : vector<8x32xf32> to vector<1x8xf32>
    %93 = vector.extract_strided_slice %75 {offsets = [6, 8], sizes = [1, 8], strides = [1, 1]} : vector<8x32xf32> to vector<1x8xf32>
    %94 = vector.extract_strided_slice %75 {offsets = [7, 8], sizes = [1, 8], strides = [1, 1]} : vector<8x32xf32> to vector<1x8xf32>
    %95 = tpu.concatenate %91, %92, %93, %94 in 1 : vector<1x8xf32>, vector<1x8xf32>, vector<1x8xf32>, vector<1x8xf32> -> vector<1x32xf32>
    %96 = vector.extract_strided_slice %75 {offsets = [0, 16], sizes = [1, 8], strides = [1, 1]} : vector<8x32xf32> to vector<1x8xf32>
    %97 = vector.extract_strided_slice %75 {offsets = [1, 16], sizes = [1, 8], strides = [1, 1]} : vector<8x32xf32> to vector<1x8xf32>
    %98 = vector.extract_strided_slice %75 {offsets = [2, 16], sizes = [1, 8], strides = [1, 1]} : vector<8x32xf32> to vector<1x8xf32>
    %99 = vector.extract_strided_slice %75 {offsets = [3, 16], sizes = [1, 8], strides = [1, 1]} : vector<8x32xf32> to vector<1x8xf32>
    %100 = tpu.concatenate %96, %97, %98, %99 in 1 : vector<1x8xf32>, vector<1x8xf32>, vector<1x8xf32>, vector<1x8xf32> -> vector<1x32xf32>
    %101 = vector.extract_strided_slice %75 {offsets = [4, 16], sizes = [1, 8], strides = [1, 1]} : vector<8x32xf32> to vector<1x8xf32>
    %102 = vector.extract_strided_slice %75 {offsets = [5, 16], sizes = [1, 8], strides = [1, 1]} : vector<8x32xf32> to vector<1x8xf32>
    %103 = vector.extract_strided_slice %75 {offsets = [6, 16], sizes = [1, 8], strides = [1, 1]} : vector<8x32xf32> to vector<1x8xf32>
    %104 = vector.extract_strided_slice %75 {offsets = [7, 16], sizes = [1, 8], strides = [1, 1]} : vector<8x32xf32> to vector<1x8xf32>
    %105 = tpu.concatenate %101, %102, %103, %104 in 1 : vector<1x8xf32>, vector<1x8xf32>, vector<1x8xf32>, vector<1x8xf32> -> vector<1x32xf32>
    %106 = vector.extract_strided_slice %75 {offsets = [0, 24], sizes = [1, 8], strides = [1, 1]} : vector<8x32xf32> to vector<1x8xf32>
    %107 = vector.extract_strided_slice %75 {offsets = [1, 24], sizes = [1, 8], strides = [1, 1]} : vector<8x32xf32> to vector<1x8xf32>
    %108 = vector.extract_strided_slice %75 {offsets = [2, 24], sizes = [1, 8], strides = [1, 1]} : vector<8x32xf32> to vector<1x8xf32>
    %109 = vector.extract_strided_slice %75 {offsets = [3, 24], sizes = [1, 8], strides = [1, 1]} : vector<8x32xf32> to vector<1x8xf32>
    %110 = tpu.concatenate %106, %107, %108, %109 in 1 : vector<1x8xf32>, vector<1x8xf32>, vector<1x8xf32>, vector<1x8xf32> -> vector<1x32xf32>
    %111 = vector.extract_strided_slice %75 {offsets = [4, 24], sizes = [1, 8], strides = [1, 1]} : vector<8x32xf32> to vector<1x8xf32>
    %112 = vector.extract_strided_slice %75 {offsets = [5, 24], sizes = [1, 8], strides = [1, 1]} : vector<8x32xf32> to vector<1x8xf32>
    %113 = vector.extract_strided_slice %75 {offsets = [6, 24], sizes = [1, 8], strides = [1, 1]} : vector<8x32xf32> to vector<1x8xf32>
    %114 = vector.extract_strided_slice %75 {offsets = [7, 24], sizes = [1, 8], strides = [1, 1]} : vector<8x32xf32> to vector<1x8xf32>
    %115 = tpu.concatenate %111, %112, %113, %114 in 1 : vector<1x8xf32>, vector<1x8xf32>, vector<1x8xf32>, vector<1x8xf32> -> vector<1x32xf32>
    %116 = tpu.concatenate %80, %85, %90, %95, %100, %105, %110, %115 in 0 : vector<1x32xf32>, vector<1x32xf32>, vector<1x32xf32>, vector<1x32xf32>, vector<1x32xf32>, vector<1x32xf32>, vector<1x32xf32>, vector<1x32xf32> -> vector<8x32xf32>
    %c0_23 = arith.constant 0 : index
    %c0_24 = arith.constant 0 : index
    %117 = vector.load %arg4[%c0_23, %c0_24] : memref<32x32xf32, #tpu.memory_space<vmem>>, vector<32x32xf32>
    %cst_25 = arith.constant dense<0.000000e+00> : vector<8x32xf32>
    %118 = tpu.matmul %116, %117, %cst_25 {dimension_numbers = #tpu.dot_dimension_numbers<[1], [0], [0], [1], [0, 0, 1, 1], [], []>} : vector<8x32xf32>, vector<32x32xf32>, vector<8x32xf32> -> vector<8x32xf32>
    %c0_26 = arith.constant 0 : index
    %c0_27 = arith.constant 0 : index
    %119 = vector.load %arg5[%c0_26, %c0_27] : memref<1x32xf32, #tpu.memory_space<vmem>>, vector<1x32xf32>
    %120 = vector.broadcast %119 : vector<1x32xf32> to vector<8x32xf32>
    %121 = arith.addf %118, %120 : vector<8x32xf32>
    %122 = arith.addf %0, %121 : vector<8x32xf32>
    %cst_28 = arith.constant dense<0.000000e+00> : vector<8xf32>
    %123 = vector.multi_reduction <add>, %122, %cst_28 [1] : vector<8x32xf32> to vector<8xf32>
    %124 = vector.shape_cast %123 : vector<8xf32> to vector<8x1xf32>
    %cst_29 = arith.constant 3.200000e+01 : f32
    %125 = vector.broadcast %cst_29 : f32 to vector<8x1xf32>
    %126 = arith.divf %124, %125 : vector<8x1xf32>
    %127 = vector.broadcast %126 : vector<8x1xf32> to vector<8x32xf32>
    %128 = arith.subf %122, %127 : vector<8x32xf32>
    %129 = vector.broadcast %126 : vector<8x1xf32> to vector<8x32xf32>
    %130 = arith.subf %122, %129 : vector<8x32xf32>
    %131 = arith.mulf %128, %130 : vector<8x32xf32>
    %cst_30 = arith.constant dense<0.000000e+00> : vector<8xf32>
    %132 = vector.multi_reduction <add>, %131, %cst_30 [1] : vector<8x32xf32> to vector<8xf32>
    %133 = vector.shape_cast %132 : vector<8xf32> to vector<8x1xf32>
    %cst_31 = arith.constant 3.200000e+01 : f32
    %134 = vector.broadcast %cst_31 : f32 to vector<8x1xf32>
    %135 = arith.divf %133, %134 : vector<8x1xf32>
    %136 = vector.broadcast %126 : vector<8x1xf32> to vector<8x32xf32>
    %137 = arith.subf %122, %136 : vector<8x32xf32>
    %cst_32 = arith.constant 9.99999974E-6 : f32
    %138 = vector.broadcast %cst_32 : f32 to vector<8x1xf32>
    %139 = arith.addf %135, %138 : vector<8x1xf32>
    %140 = math.rsqrt %139 : vector<8x1xf32>
    %141 = vector.broadcast %140 : vector<8x1xf32> to vector<8x32xf32>
    %142 = arith.mulf %137, %141 : vector<8x32xf32>
    %c0_33 = arith.constant 0 : index
    %c0_34 = arith.constant 0 : index
    %143 = vector.load %arg6[%c0_33, %c0_34] : memref<1x32xf32, #tpu.memory_space<vmem>>, vector<1x32xf32>
    %144 = vector.broadcast %143 : vector<1x32xf32> to vector<8x32xf32>
    %145 = arith.mulf %142, %144 : vector<8x32xf32>
    %c0_35 = arith.constant 0 : index
    %c0_36 = arith.constant 0 : index
    %146 = vector.load %arg7[%c0_35, %c0_36] : memref<1x32xf32, #tpu.memory_space<vmem>>, vector<1x32xf32>
    %147 = vector.broadcast %146 : vector<1x32xf32> to vector<8x32xf32>
    %148 = arith.addf %145, %147 : vector<8x32xf32>
    %c0_37 = arith.constant 0 : index
    %c0_38 = arith.constant 0 : index
    %149 = vector.load %arg8[%c0_37, %c0_38] : memref<32x64xf32, #tpu.memory_space<vmem>>, vector<32x64xf32>
    %cst_39 = arith.constant dense<0.000000e+00> : vector<8x64xf32>
    %150 = tpu.matmul %148, %149, %cst_39 {dimension_numbers = #tpu.dot_dimension_numbers<[1], [0], [0], [1], [0, 0, 1, 1], [], []>} : vector<8x32xf32>, vector<32x64xf32>, vector<8x64xf32> -> vector<8x64xf32>
    %c0_40 = arith.constant 0 : index
    %c0_41 = arith.constant 0 : index
    %151 = vector.load %arg9[%c0_40, %c0_41] : memref<1x64xf32, #tpu.memory_space<vmem>>, vector<1x64xf32>
    %152 = vector.broadcast %151 : vector<1x64xf32> to vector<8x64xf32>
    %153 = arith.addf %150, %152 : vector<8x64xf32>
    %cst_42 = arith.constant 0.000000e+00 : f32
    %154 = vector.broadcast %cst_42 : f32 to vector<8x64xf32>
    %155 = arith.maximumf %153, %154 : vector<8x64xf32>
    %c0_43 = arith.constant 0 : index
    %c0_44 = arith.constant 0 : index
    %156 = vector.load %arg10[%c0_43, %c0_44] : memref<64x32xf32, #tpu.memory_space<vmem>>, vector<64x32xf32>
    %cst_45 = arith.constant dense<0.000000e+00> : vector<8x32xf32>
    %157 = tpu.matmul %155, %156, %cst_45 {dimension_numbers = #tpu.dot_dimension_numbers<[1], [0], [0], [1], [0, 0, 1, 1], [], []>} : vector<8x64xf32>, vector<64x32xf32>, vector<8x32xf32> -> vector<8x32xf32>
    %c0_46 = arith.constant 0 : index
    %c0_47 = arith.constant 0 : index
    %158 = vector.load %arg11[%c0_46, %c0_47] : memref<1x32xf32, #tpu.memory_space<vmem>>, vector<1x32xf32>
    %159 = vector.broadcast %158 : vector<1x32xf32> to vector<8x32xf32>
    %160 = arith.addf %157, %159 : vector<8x32xf32>
    %161 = arith.addf %148, %160 : vector<8x32xf32>
    %cst_48 = arith.constant dense<0.000000e+00> : vector<8xf32>
    %162 = vector.multi_reduction <add>, %161, %cst_48 [1] : vector<8x32xf32> to vector<8xf32>
    %163 = vector.shape_cast %162 : vector<8xf32> to vector<8x1xf32>
    %cst_49 = arith.constant 3.200000e+01 : f32
    %164 = vector.broadcast %cst_49 : f32 to vector<8x1xf32>
    %165 = arith.divf %163, %164 : vector<8x1xf32>
    %166 = vector.broadcast %165 : vector<8x1xf32> to vector<8x32xf32>
    %167 = arith.subf %161, %166 : vector<8x32xf32>
    %168 = vector.broadcast %165 : vector<8x1xf32> to vector<8x32xf32>
    %169 = arith.subf %161, %168 : vector<8x32xf32>
    %170 = arith.mulf %167, %169 : vector<8x32xf32>
    %cst_50 = arith.constant dense<0.000000e+00> : vector<8xf32>
    %171 = vector.multi_reduction <add>, %170, %cst_50 [1] : vector<8x32xf32> to vector<8xf32>
    %172 = vector.shape_cast %171 : vector<8xf32> to vector<8x1xf32>
    %cst_51 = arith.constant 3.200000e+01 : f32
    %173 = vector.broadcast %cst_51 : f32 to vector<8x1xf32>
    %174 = arith.divf %172, %173 : vector<8x1xf32>
    %175 = vector.broadcast %165 : vector<8x1xf32> to vector<8x32xf32>
    %176 = arith.subf %161, %175 : vector<8x32xf32>
    %cst_52 = arith.constant 9.99999974E-6 : f32
    %177 = vector.broadcast %cst_52 : f32 to vector<8x1xf32>
    %178 = arith.addf %174, %177 : vector<8x1xf32>
    %179 = math.rsqrt %178 : vector<8x1xf32>
    %180 = vector.broadcast %179 : vector<8x1xf32> to vector<8x32xf32>
    %181 = arith.mulf %176, %180 : vector<8x32xf32>
    %c0_53 = arith.constant 0 : index
    %c0_54 = arith.constant 0 : index
    %182 = vector.load %arg6[%c0_53, %c0_54] : memref<1x32xf32, #tpu.memory_space<vmem>>, vector<1x32xf32>
    %183 = vector.broadcast %182 : vector<1x32xf32> to vector<8x32xf32>
    %184 = arith.mulf %181, %183 : vector<8x32xf32>
    %c0_55 = arith.constant 0 : index
    %c0_56 = arith.constant 0 : index
    %185 = vector.load %arg7[%c0_55, %c0_56] : memref<1x32xf32, #tpu.memory_space<vmem>>, vector<1x32xf32>
    %186 = vector.broadcast %185 : vector<1x32xf32> to vector<8x32xf32>
    %187 = arith.addf %184, %186 : vector<8x32xf32>
    %c0_57 = arith.constant 0 : index
    %c0_58 = arith.constant 0 : index
    %188 = vector.load %arg14[%c0_57, %c0_58] : memref<8x32xf32, #tpu.memory_space<vmem>>, vector<8x32xf32>
    tpu.vector_store %arg14[%c0_57, %c0_58], %187 {strides = array<i32>} : memref<8x32xf32, #tpu.memory_space<vmem>>, vector<8x32xf32>,
    return
  }
  func.func @transform_0(%arg0: i32) -> (i32, i32) {
    %c0_i32 = arith.constant 0 : i32
    %c0_i32_0 = arith.constant 0 : i32
    return %arg0, %c0_i32 : i32, i32
  }
  func.func @transform_1(%arg0: i32) -> (i32, i32) {
    %c0_i32 = arith.constant 0 : i32
    %c0_i32_0 = arith.constant 0 : i32
    %c0_i32_1 = arith.constant 0 : i32
    return %c0_i32, %c0_i32_0 : i32, i32
  }
  func.func @transform_2(%arg0: i32) -> (i32, i32) {
    %c0_i32 = arith.constant 0 : i32
    %c0_i32_0 = arith.constant 0 : i32
    %c0_i32_1 = arith.constant 0 : i32
    return %c0_i32, %c0_i32_0 : i32, i32
  }
  func.func @transform_3(%arg0: i32) -> (i32, i32) {
    %c0_i32 = arith.constant 0 : i32
    %c0_i32_0 = arith.constant 0 : i32
    %c0_i32_1 = arith.constant 0 : i32
    return %c0_i32, %c0_i32_0 : i32, i32
  }
  func.func @transform_4(%arg0: i32) -> (i32, i32) {
    %c0_i32 = arith.constant 0 : i32
    %c0_i32_0 = arith.constant 0 : i32
    %c0_i32_1 = arith.constant 0 : i32
    return %c0_i32, %c0_i32_0 : i32, i32
  }
  func.func @transform_5(%arg0: i32) -> (i32, i32) {
    %c0_i32 = arith.constant 0 : i32
    %c0_i32_0 = arith.constant 0 : i32
    %c0_i32_1 = arith.constant 0 : i32
    return %c0_i32, %c0_i32_0 : i32, i32
  }
  func.func @transform_6(%arg0: i32) -> (i32, i32) {
    %c0_i32 = arith.constant 0 : i32
    %c0_i32_0 = arith.constant 0 : i32
    %c0_i32_1 = arith.constant 0 : i32
    return %c0_i32, %c0_i32_0 : i32, i32
  }
  func.func @transform_7(%arg0: i32) -> (i32, i32) {
    %c0_i32 = arith.constant 0 : i32
    %c0_i32_0 = arith.constant 0 : i32
    %c0_i32_1 = arith.constant 0 : i32
    return %c0_i32, %c0_i32_0 : i32, i32
  }
  func.func @transform_8(%arg0: i32) -> (i32, i32) {
    %c0_i32 = arith.constant 0 : i32
    %c0_i32_0 = arith.constant 0 : i32
    %c0_i32_1 = arith.constant 0 : i32
    return %c0_i32, %c0_i32_0 : i32, i32
  }
  func.func @transform_9(%arg0: i32) -> (i32, i32) {
    %c0_i32 = arith.constant 0 : i32
    %c0_i32_0 = arith.constant 0 : i32
    %c0_i32_1 = arith.constant 0 : i32
    return %c0_i32, %c0_i32_0 : i32, i32
  }
  func.func @transform_10(%arg0: i32) -> (i32, i32) {
    %c0_i32 = arith.constant 0 : i32
    %c0_i32_0 = arith.constant 0 : i32
    %c0_i32_1 = arith.constant 0 : i32
    return %c0_i32, %c0_i32_0 : i32, i32
  }
  func.func @transform_11(%arg0: i32) -> (i32, i32) {
    %c0_i32 = arith.constant 0 : i32
    %c0_i32_0 = arith.constant 0 : i32
    %c0_i32_1 = arith.constant 0 : i32
    return %c0_i32, %c0_i32_0 : i32, i32
  }
  func.func @transform_12(%arg0: i32) -> (i32, i32) {
    %c0_i32 = arith.constant 0 : i32
    %c0_i32_0 = arith.constant 0 : i32
    %c0_i32_1 = arith.constant 0 : i32
    return %c0_i32, %c0_i32_0 : i32, i32
  }
  func.func @transform_13(%arg0: i32) -> (i32, i32) {
    %c0_i32 = arith.constant 0 : i32
    %c0_i32_0 = arith.constant 0 : i32
    return %arg0, %c0_i32 : i32, i32
  }
}

module attributes {stable_mosaic.version = 11 : i64} {
  func.func @transformer_block_kernel(%arg0: i32, %arg1: memref<8x32xf32, #tpu.memory_space<vmem>>, %arg2: memref<32x96xf32, #tpu.memory_space<vmem>>, %arg3: memref<1x96xf32, #tpu.memory_space<vmem>>, %arg4: memref<32x32xf32, #tpu.memory_space<vmem>>, %arg5: memref<1x32xf32, #tpu.memory_space<vmem>>, %arg6: memref<1x32xf32, #tpu.memory_space<vmem>>, %arg7: memref<1x32xf32, #tpu.memory_space<vmem>>, %arg8: memref<32x64xf32, #tpu.memory_space<vmem>>, %arg9: memref<1x64xf32, #tpu.memory_space<vmem>>, %arg10: memref<64x32xf32, #tpu.memory_space<vmem>>, %arg11: memref<1x32xf32, #tpu.memory_space<vmem>>, %arg12: memref<32x4xf32, #tpu.memory_space<vmem>>, %arg13: memref<4x32xf32, #tpu.memory_space<vmem>>, %arg14: memref<8x32xf32, #tpu.memory_space<vmem>>) attributes {dimension_semantics = [#tpu.dimension_semantics<parallel>], iteration_bounds = array<i64: 2>, scalar_prefetch = 0 : i64, scratch_operands = 0 : i64, tpu.core_type = #tpu.core_type<tc>, window_params = [{transform_indices = @transform_0, window_bounds = array<i64: 8, 32>}, {pipeline_mode = #tpu.pipeline_mode<synchronous>, transform_indices = @transform_1, window_bounds = array<i64: 32, 96>}, {pipeline_mode = #tpu.pipeline_mode<synchronous>, transform_indices = @transform_2, window_bounds = array<i64: 1, 96>}, {pipeline_mode = #tpu.pipeline_mode<synchronous>, transform_indices = @transform_3, window_bounds = array<i64: 32, 32>}, {pipeline_mode = #tpu.pipeline_mode<synchronous>, transform_indices = @transform_4, window_bounds = array<i64: 1, 32>}, {pipeline_mode = #tpu.pipeline_mode<synchronous>, transform_indices = @transform_5, window_bounds = array<i64: 1, 32>}, {pipeline_mode = #tpu.pipeline_mode<synchronous>, transform_indices = @transform_6, window_bounds = array<i64: 1, 32>}, {pipeline_mode = #tpu.pipeline_mode<synchronous>, transform_indices = @transform_7, window_bounds = array<i64: 32, 64>}, {pipeline_mode = #tpu.pipeline_mode<synchronous>, transform_indices = @transform_8, window_bounds = array<i64: 1, 64>}, {pipeline_mode = #tpu.pipeline_mode<synchronous>, transform_indices = @transform_9, window_bounds = array<i64: 64, 32>}, {pipeline_mode = #tpu.pipeline_mode<synchronous>, transform_indices = @transform_10, window_bounds = array<i64: 1, 32>}, {pipeline_mode = #tpu.pipeline_mode<synchronous>, transform_indices = @transform_11, window_bounds = array<i64: 32, 4>}, {pipeline_mode = #tpu.pipeline_mode<synchronous>, transform_indices = @transform_12, window_bounds = array<i64: 4, 32>}, {transform_indices = @transform_13, window_bounds = array<i64: 8, 32>}]} {
    %c0 = arith.constant 0 : index
    %c0_0 = arith.constant 0 : index
    %0 = vector.load %arg1[%c0, %c0_0] : memref<8x32xf32, #tpu.memory_space<vmem>>, vector<8x32xf32>
    %c0_1 = arith.constant 0 : index
    %c0_2 = arith.constant 0 : index
    %1 = vector.load %arg2[%c0_1, %c0_2] : memref<32x96xf32, #tpu.memory_space<vmem>>, vector<32x96xf32>
    %cst = arith.constant dense<0.000000e+00> : vector<8x96xf32>
    %2 = tpu.matmul %0, %1, %cst {dimension_numbers = #tpu.dot_dimension_numbers<[1], [0], [0], [1], [0, 0, 1, 1], [], []>} : vector<8x32xf32>, vector<32x96xf32>, vector<8x96xf32> -> vector<8x96xf32>
    %c0_3 = arith.constant 0 : index
    %c0_4 = arith.constant 0 : index
    %3 = vector.load %arg3[%c0_3, %c0_4] : memref<1x96xf32, #tpu.memory_space<vmem>>, vector<1x96xf32>
    %4 = vector.broadcast %3 : vector<1x96xf32> to vector<8x96xf32>
    %5 = arith.addf %2, %4 : vector<8x96xf32>
    %6 = vector.extract_strided_slice %5 {offsets = [0, 0], sizes = [8, 32], strides = [1, 1]} : vector<8x96xf32> to vector<8x32xf32>
    %7 = vector.extract_strided_slice %5 {offsets = [0, 32], sizes = [8, 32], strides = [1, 1]} : vector<8x96xf32> to vector<8x32xf32>
    %8 = vector.extract_strided_slice %5 {offsets = [0, 64], sizes = [8, 32], strides = [1, 1]} : vector<8x96xf32> to vector<8x32xf32>
    %c0_5 = arith.constant 0 : index
    %c0_6 = arith.constant 0 : index
    %9 = vector.load %arg12[%c0_5, %c0_6] : memref<32x4xf32, #tpu.memory_space<vmem>>, vector<32x4xf32>
    %c0_7 = arith.constant 0 : index
    %c0_8 = arith.constant 0 : index
    %10 = vector.load %arg13[%c0_7, %c0_8] : memref<4x32xf32, #tpu.memory_space<vmem>>, vector<4x32xf32>
    %11 = vector.extract_strided_slice %7 {offsets = [0, 0], sizes = [8, 8], strides = [1, 1]} : vector<8x32xf32> to vector<8x8xf32>
    %12 = tpu.concatenate %11, %11, %11, %11 in 1 : vector<8x8xf32>, vector<8x8xf32>, vector<8x8xf32>, vector<8x8xf32> -> vector<8x32xf32>
    %13 = arith.mulf %6, %12 : vector<8x32xf32>
    %cst_9 = arith.constant dense<0.000000e+00> : vector<8x4xf32>
    %14 = tpu.matmul %13, %9, %cst_9 {dimension_numbers = #tpu.dot_dimension_numbers<[1], [0], [0], [1], [0, 0, 1, 1], [], []>} : vector<8x32xf32>, vector<32x4xf32>, vector<8x4xf32> -> vector<8x4xf32>
    %cst_10 = arith.constant 0.353553385 : f32
    %15 = vector.broadcast %cst_10 : f32 to vector<8x4xf32>
    %16 = arith.mulf %14, %15 : vector<8x4xf32>
    %17 = vector.extract_strided_slice %7 {offsets = [0, 8], sizes = [8, 8], strides = [1, 1]} : vector<8x32xf32> to vector<8x8xf32>
    %18 = tpu.concatenate %17, %17, %17, %17 in 1 : vector<8x8xf32>, vector<8x8xf32>, vector<8x8xf32>, vector<8x8xf32> -> vector<8x32xf32>
    %19 = arith.mulf %6, %18 : vector<8x32xf32>
    %cst_11 = arith.constant dense<0.000000e+00> : vector<8x4xf32>
    %20 = tpu.matmul %19, %9, %cst_11 {dimension_numbers = #tpu.dot_dimension_numbers<[1], [0], [0], [1], [0, 0, 1, 1], [], []>} : vector<8x32xf32>, vector<32x4xf32>, vector<8x4xf32> -> vector<8x4xf32>
    %cst_12 = arith.constant 0.353553385 : f32
    %21 = vector.broadcast %cst_12 : f32 to vector<8x4xf32>
    %22 = arith.mulf %20, %21 : vector<8x4xf32>
    %23 = vector.extract_strided_slice %7 {offsets = [0, 16], sizes = [8, 8], strides = [1, 1]} : vector<8x32xf32> to vector<8x8xf32>
    %24 = tpu.concatenate %23, %23, %23, %23 in 1 : vector<8x8xf32>, vector<8x8xf32>, vector<8x8xf32>, vector<8x8xf32> -> vector<8x32xf32>
    %25 = arith.mulf %6, %24 : vector<8x32xf32>
    %cst_13 = arith.constant dense<0.000000e+00> : vector<8x4xf32>
    %26 = tpu.matmul %25, %9, %cst_13 {dimension_numbers = #tpu.dot_dimension_numbers<[1], [0], [0], [1], [0, 0, 1, 1], [], []>} : vector<8x32xf32>, vector<32x4xf32>, vector<8x4xf32> -> vector<8x4xf32>
    %cst_14 = arith.constant 0.353553385 : f32
    %27 = vector.broadcast %cst_14 : f32 to vector<8x4xf32>
    %28 = arith.mulf %26, %27 : vector<8x4xf32>
    %29 = vector.extract_strided_slice %7 {offsets = [0, 24], sizes = [8, 8], strides = [1, 1]} : vector<8x32xf32> to vector<8x8xf32>
    %30 = tpu.concatenate %29, %29, %29, %29 in 1 : vector<8x8xf32>, vector<8x8xf32>, vector<8x8xf32>, vector<8x8xf32> -> vector<8x32xf32>
    %31 = arith.mulf %6, %30 : vector<8x32xf32>
    %cst_15 = arith.constant dense<0.000000e+00> : vector<8x4xf32>
    %32 = tpu.matmul %31, %9, %cst_15 {dimension_numbers = #tpu.dot_dimension_numbers<[1], [0], [0], [1], [0, 0, 1, 1], [], []>} : vector<8x32xf32>, vector<32x4xf32>, vector<8x4xf32> -> vector<8x4xf32>
    %cst_16 = arith.constant 0.353553385 : f32
    %33 = vector.broadcast %cst_16 : f32 to vector<8x4xf32>
    %34 = arith.mulf %32, %33 : vector<8x4xf32>
    %35 = arith.maximumf %16, %22 : vector<8x4xf32>
    %36 = arith.maximumf %35, %28 : vector<8x4xf32>
    %37 = arith.maximumf %36, %34 : vector<8x4xf32>
    %38 = arith.subf %16, %37 : vector<8x4xf32>
    %39 = math.exp %38 : vector<8x4xf32>
    %40 = arith.subf %22, %37 : vector<8x4xf32>
    %41 = math.exp %40 : vector<8x4xf32>
    %42 = arith.subf %28, %37 : vector<8x4xf32>
    %43 = math.exp %42 : vector<8x4xf32>
    %44 = arith.subf %34, %37 : vector<8x4xf32>
    %45 = math.exp %44 : vector<8x4xf32>
    %46 = arith.addf %39, %41 : vector<8x4xf32>
    %47 = arith.addf %46, %43 : vector<8x4xf32>
    %48 = arith.addf %47, %45 : vector<8x4xf32>
    %cst_17 = arith.constant 1.000000e+00 : f32
    %49 = vector.broadcast %cst_17 : f32 to vector<8x4xf32>
    %50 = arith.divf %49, %48 : vector<8x4xf32>
    %cst_18 = arith.constant 0.000000e+00 : f32
    %51 = vector.broadcast %cst_18 : f32 to vector<8x32xf32>
    %52 = arith.mulf %39, %50 : vector<8x4xf32>
    %cst_19 = arith.constant dense<0.000000e+00> : vector<8x32xf32>
    %53 = tpu.matmul %52, %10, %cst_19 {dimension_numbers = #tpu.dot_dimension_numbers<[1], [0], [0], [1], [0, 0, 1, 1], [], []>} : vector<8x4xf32>, vector<4x32xf32>, vector<8x32xf32> -> vector<8x32xf32>
    %54 = vector.extract_strided_slice %8 {offsets = [0, 0], sizes = [8, 8], strides = [1, 1]} : vector<8x32xf32> to vector<8x8xf32>
    %55 = tpu.concatenate %54, %54, %54, %54 in 1 : vector<8x8xf32>, vector<8x8xf32>, vector<8x8xf32>, vector<8x8xf32> -> vector<8x32xf32>
    %56 = arith.mulf %53, %55 : vector<8x32xf32>
    %57 = arith.addf %51, %56 : vector<8x32xf32>
    %58 = arith.mulf %41, %50 : vector<8x4xf32>
    %cst_20 = arith.constant dense<0.000000e+00> : vector<8x32xf32>
    %59 = tpu.matmul %58, %10, %cst_20 {dimension_numbers = #tpu.dot_dimension_numbers<[1], [0], [0], [1], [0, 0, 1, 1], [], []>} : vector<8x4xf32>, vector<4x32xf32>, vector<8x32xf32> -> vector<8x32xf32>
    %60 = vector.extract_strided_slice %8 {offsets = [0, 8], sizes = [8, 8], strides = [1, 1]} : vector<8x32xf32> to vector<8x8xf32>
    %61 = tpu.concatenate %60, %60, %60, %60 in 1 : vector<8x8xf32>, vector<8x8xf32>, vector<8x8xf32>, vector<8x8xf32> -> vector<8x32xf32>
    %62 = arith.mulf %59, %61 : vector<8x32xf32>
    %63 = arith.addf %57, %62 : vector<8x32xf32>
    %64 = arith.mulf %43, %50 : vector<8x4xf32>
    %cst_21 = arith.constant dense<0.000000e+00> : vector<8x32xf32>
    %65 = tpu.matmul %64, %10, %cst_21 {dimension_numbers = #tpu.dot_dimension_numbers<[1], [0], [0], [1], [0, 0, 1, 1], [], []>} : vector<8x4xf32>, vector<4x32xf32>, vector<8x32xf32> -> vector<8x32xf32>
    %66 = vector.extract_strided_slice %8 {offsets = [0, 16], sizes = [8, 8], strides = [1, 1]} : vector<8x32xf32> to vector<8x8xf32>
    %67 = tpu.concatenate %66, %66, %66, %66 in 1 : vector<8x8xf32>, vector<8x8xf32>, vector<8x8xf32>, vector<8x8xf32> -> vector<8x32xf32>
    %68 = arith.mulf %65, %67 : vector<8x32xf32>
    %69 = arith.addf %63, %68 : vector<8x32xf32>
    %70 = arith.mulf %45, %50 : vector<8x4xf32>
    %cst_22 = arith.constant dense<0.000000e+00> : vector<8x32xf32>
    %71 = tpu.matmul %70, %10, %cst_22 {dimension_numbers = #tpu.dot_dimension_numbers<[1], [0], [0], [1], [0, 0, 1, 1], [], []>} : vector<8x4xf32>, vector<4x32xf32>, vector<8x32xf32> -> vector<8x32xf32>
    %72 = vector.extract_strided_slice %8 {offsets = [0, 24], sizes = [8, 8], strides = [1, 1]} : vector<8x32xf32> to vector<8x8xf32>
    %73 = tpu.concatenate %72, %72, %72, %72 in 1 : vector<8x8xf32>, vector<8x8xf32>, vector<8x8xf32>, vector<8x8xf32> -> vector<8x32xf32>
    %74 = arith.mulf %71, %73 : vector<8x32xf32>
    %75 = arith.addf %69, %74 : vector<8x32xf32>
    %76 = vector.extract_strided_slice %75 {offsets = [0, 0], sizes = [1, 8], strides = [1, 1]} : vector<8x32xf32> to vector<1x8xf32>
    %77 = vector.extract_strided_slice %75 {offsets = [1, 0], sizes = [1, 8], strides = [1, 1]} : vector<8x32xf32> to vector<1x8xf32>
    %78 = vector.extract_strided_slice %75 {offsets = [2, 0], sizes = [1, 8], strides = [1, 1]} : vector<8x32xf32> to vector<1x8xf32>
    %79 = vector.extract_strided_slice %75 {offsets = [3, 0], sizes = [1, 8], strides = [1, 1]} : vector<8x32xf32> to vector<1x8xf32>
    %80 = tpu.concatenate %76, %77, %78, %79 in 1 : vector<1x8xf32>, vector<1x8xf32>, vector<1x8xf32>, vector<1x8xf32> -> vector<1x32xf32>
    %81 = vector.extract_strided_slice %75 {offsets = [4, 0], sizes = [1, 8], strides = [1, 1]} : vector<8x32xf32> to vector<1x8xf32>
    %82 = vector.extract_strided_slice %75 {offsets = [5, 0], sizes = [1, 8], strides = [1, 1]} : vector<8x32xf32> to vector<1x8xf32>
    %83 = vector.extract_strided_slice %75 {offsets = [6, 0], sizes = [1, 8], strides = [1, 1]} : vector<8x32xf32> to vector<1x8xf32>
    %84 = vector.extract_strided_slice %75 {offsets = [7, 0], sizes = [1, 8], strides = [1, 1]} : vector<8x32xf32> to vector<1x8xf32>
    %85 = tpu.concatenate %81, %82, %83, %84 in 1 : vector<1x8xf32>, vector<1x8xf32>, vector<1x8xf32>, vector<1x8xf32> -> vector<1x32xf32>
    %86 = vector.extract_strided_slice %75 {offsets = [0, 8], sizes = [1, 8], strides = [1, 1]} : vector<8x32xf32> to vector<1x8xf32>
    %87 = vector.extract_strided_slice %75 {offsets = [1, 8], sizes = [1, 8], strides = [1, 1]} : vector<8x32xf32> to vector<1x8xf32>
    %88 = vector.extract_strided_slice %75 {offsets = [2, 8], sizes = [1, 8], strides = [1, 1]} : vector<8x32xf32> to vector<1x8xf32>
    %89 = vector.extract_strided_slice %75 {offsets = [3, 8], sizes = [1, 8], strides = [1, 1]} : vector<8x32xf32> to vector<1x8xf32>
    %90 = tpu.concatenate %86, %87, %88, %89 in 1 : vector<1x8xf32>, vector<1x8xf32>, vector<1x8xf32>, vector<1x8xf32> -> vector<1x32xf32>
    %91 = vector.extract_strided_slice %75 {offsets = [4, 8], sizes = [1, 8], strides = [1, 1]} : vector<8x32xf32> to vector<1x8xf32>
    %92 = vector.extract_strided_slice %75 {offsets = [5, 8], sizes = [1, 8], strides = [1, 1]} : vector<8x32xf32> to vector<1x8xf32>
    %93 = vector.extract_strided_slice %75 {offsets = [6, 8], sizes = [1, 8], strides = [1, 1]} : vector<8x32xf32> to vector<1x8xf32>
    %94 = vector.extract_strided_slice %75 {offsets = [7, 8], sizes = [1, 8], strides = [1, 1]} : vector<8x32xf32> to vector<1x8xf32>
    %95 = tpu.concatenate %91, %92, %93, %94 in 1 : vector<1x8xf32>, vector<1x8xf32>, vector<1x8xf32>, vector<1x8xf32> -> vector<1x32xf32>
    %96 = vector.extract_strided_slice %75 {offsets = [0, 16], sizes = [1, 8], strides = [1, 1]} : vector<8x32xf32> to vector<1x8xf32>
    %97 = vector.extract_strided_slice %75 {offsets = [1, 16], sizes = [1, 8], strides = [1, 1]} : vector<8x32xf32> to vector<1x8xf32>
    %98 = vector.extract_strided_slice %75 {offsets = [2, 16], sizes = [1, 8], strides = [1, 1]} : vector<8x32xf32> to vector<1x8xf32>
    %99 = vector.extract_strided_slice %75 {offsets = [3, 16], sizes = [1, 8], strides = [1, 1]} : vector<8x32xf32> to vector<1x8xf32>
    %100 = tpu.concatenate %96, %97, %98, %99 in 1 : vector<1x8xf32>, vector<1x8xf32>, vector<1x8xf32>, vector<1x8xf32> -> vector<1x32xf32>
    %101 = vector.extract_strided_slice %75 {offsets = [4, 16], sizes = [1, 8], strides = [1, 1]} : vector<8x32xf32> to vector<1x8xf32>
    %102 = vector.extract_strided_slice %75 {offsets = [5, 16], sizes = [1, 8], strides = [1, 1]} : vector<8x32xf32> to vector<1x8xf32>
    %103 = vector.extract_strided_slice %75 {offsets = [6, 16], sizes = [1, 8], strides = [1, 1]} : vector<8x32xf32> to vector<1x8xf32>
    %104 = vector.extract_strided_slice %75 {offsets = [7, 16], sizes = [1, 8], strides = [1, 1]} : vector<8x32xf32> to vector<1x8xf32>
    %105 = tpu.concatenate %101, %102, %103, %104 in 1 : vector<1x8xf32>, vector<1x8xf32>, vector<1x8xf32>, vector<1x8xf32> -> vector<1x32xf32>
    %106 = vector.extract_strided_slice %75 {offsets = [0, 24], sizes = [1, 8], strides = [1, 1]} : vector<8x32xf32> to vector<1x8xf32>
    %107 = vector.extract_strided_slice %75 {offsets = [1, 24], sizes = [1, 8], strides = [1, 1]} : vector<8x32xf32> to vector<1x8xf32>
    %108 = vector.extract_strided_slice %75 {offsets = [2, 24], sizes = [1, 8], strides = [1, 1]} : vector<8x32xf32> to vector<1x8xf32>
    %109 = vector.extract_strided_slice %75 {offsets = [3, 24], sizes = [1, 8], strides = [1, 1]} : vector<8x32xf32> to vector<1x8xf32>
    %110 = tpu.concatenate %106, %107, %108, %109 in 1 : vector<1x8xf32>, vector<1x8xf32>, vector<1x8xf32>, vector<1x8xf32> -> vector<1x32xf32>
    %111 = vector.extract_strided_slice %75 {offsets = [4, 24], sizes = [1, 8], strides = [1, 1]} : vector<8x32xf32> to vector<1x8xf32>
    %112 = vector.extract_strided_slice %75 {offsets = [5, 24], sizes = [1, 8], strides = [1, 1]} : vector<8x32xf32> to vector<1x8xf32>
    %113 = vector.extract_strided_slice %75 {offsets = [6, 24], sizes = [1, 8], strides = [1, 1]} : vector<8x32xf32> to vector<1x8xf32>
    %114 = vector.extract_strided_slice %75 {offsets = [7, 24], sizes = [1, 8], strides = [1, 1]} : vector<8x32xf32> to vector<1x8xf32>
    %115 = tpu.concatenate %111, %112, %113, %114 in 1 : vector<1x8xf32>, vector<1x8xf32>, vector<1x8xf32>, vector<1x8xf32> -> vector<1x32xf32>
    %116 = tpu.concatenate %80, %85, %90, %95, %100, %105, %110, %115 in 0 : vector<1x32xf32>, vector<1x32xf32>, vector<1x32xf32>, vector<1x32xf32>, vector<1x32xf32>, vector<1x32xf32>, vector<1x32xf32>, vector<1x32xf32> -> vector<8x32xf32>
    %c0_23 = arith.constant 0 : index
    %c0_24 = arith.constant 0 : index
    %117 = vector.load %arg4[%c0_23, %c0_24] : memref<32x32xf32, #tpu.memory_space<vmem>>, vector<32x32xf32>
    %cst_25 = arith.constant dense<0.000000e+00> : vector<8x32xf32>
    %118 = tpu.matmul %116, %117, %cst_25 {dimension_numbers = #tpu.dot_dimension_numbers<[1], [0], [0], [1], [0, 0, 1, 1], [], []>} : vector<8x32xf32>, vector<32x32xf32>, vector<8x32xf32> -> vector<8x32xf32>
    %c0_26 = arith.constant 0 : index
    %c0_27 = arith.constant 0 : index
    %119 = vector.load %arg5[%c0_26, %c0_27] : memref<1x32xf32, #tpu.memory_space<vmem>>, vector<1x32xf32>
    %120 = vector.broadcast %119 : vector<1x32xf32> to vector<8x32xf32>
    %121 = arith.addf %118, %120 : vector<8x32xf32>
    %122 = arith.addf %0, %121 : vector<8x32xf32>
    %cst_28 = arith.constant dense<0.000000e+00> : vector<8xf32>
    %123 = vector.multi_reduction <add>, %122, %cst_28 [1] : vector<8x32xf32> to vector<8xf32>
    %124 = vector.shape_cast %123 : vector<8xf32> to vector<8x1xf32>
    %cst_29 = arith.constant 3.200000e+01 : f32
    %125 = vector.broadcast %cst_29 : f32 to vector<8x1xf32>
    %126 = arith.divf %124, %125 : vector<8x1xf32>
    %127 = vector.broadcast %126 : vector<8x1xf32> to vector<8x32xf32>
    %128 = arith.subf %122, %127 : vector<8x32xf32>
    %129 = vector.broadcast %126 : vector<8x1xf32> to vector<8x32xf32>
    %130 = arith.subf %122, %129 : vector<8x32xf32>
    %131 = arith.mulf %128, %130 : vector<8x32xf32>
    %cst_30 = arith.constant dense<0.000000e+00> : vector<8xf32>
    %132 = vector.multi_reduction <add>, %131, %cst_30 [1] : vector<8x32xf32> to vector<8xf32>
    %133 = vector.shape_cast %132 : vector<8xf32> to vector<8x1xf32>
    %cst_31 = arith.constant 3.200000e+01 : f32
    %134 = vector.broadcast %cst_31 : f32 to vector<8x1xf32>
    %135 = arith.divf %133, %134 : vector<8x1xf32>
    %136 = vector.broadcast %126 : vector<8x1xf32> to vector<8x32xf32>
    %137 = arith.subf %122, %136 : vector<8x32xf32>
    %cst_32 = arith.constant 9.99999974E-6 : f32
    %138 = vector.broadcast %cst_32 : f32 to vector<8x1xf32>
    %139 = arith.addf %135, %138 : vector<8x1xf32>
    %140 = math.rsqrt %139 : vector<8x1xf32>
    %141 = vector.broadcast %140 : vector<8x1xf32> to vector<8x32xf32>
    %142 = arith.mulf %137, %141 : vector<8x32xf32>
    %c0_33 = arith.constant 0 : index
    %c0_34 = arith.constant 0 : index
    %143 = vector.load %arg6[%c0_33, %c0_34] : memref<1x32xf32, #tpu.memory_space<vmem>>, vector<1x32xf32>
    %144 = vector.broadcast %143 : vector<1x32xf32> to vector<8x32xf32>
    %145 = arith.mulf %142, %144 : vector<8x32xf32>
    %c0_35 = arith.constant 0 : index
    %c0_36 = arith.constant 0 : index
    %146 = vector.load %arg7[%c0_35, %c0_36] : memref<1x32xf32, #tpu.memory_space<vmem>>, vector<1x32xf32>
    %147 = vector.broadcast %146 : vector<1x32xf32> to vector<8x32xf32>
    %148 = arith.addf %145, %147 : vector<8x32xf32>
    %c0_37 = arith.constant 0 : index
    %c0_38 = arith.constant 0 : index
    %149 = vector.load %arg8[%c0_37, %c0_38] : memref<32x64xf32, #tpu.memory_space<vmem>>, vector<32x64xf32>
    %cst_39 = arith.constant dense<0.000000e+00> : vector<8x64xf32>
    %150 = tpu.matmul %148, %149, %cst_39 {dimension_numbers = #tpu.dot_dimension_numbers<[1], [0], [0], [1], [0, 0, 1, 1], [], []>} : vector<8x32xf32>, vector<32x64xf32>, vector<8x64xf32> -> vector<8x64xf32>
    %c0_40 = arith.constant 0 : index
    %c0_41 = arith.constant 0 : index
    %151 = vector.load %arg9[%c0_40, %c0_41] : memref<1x64xf32, #tpu.memory_space<vmem>>, vector<1x64xf32>
    %152 = vector.broadcast %151 : vector<1x64xf32> to vector<8x64xf32>
    %153 = arith.addf %150, %152 : vector<8x64xf32>
    %cst_42 = arith.constant 0.000000e+00 : f32
    %154 = vector.broadcast %cst_42 : f32 to vector<8x64xf32>
    %155 = arith.maximumf %153, %154 : vector<8x64xf32>
    %c0_43 = arith.constant 0 : index
    %c0_44 = arith.constant 0 : index
    %156 = vector.load %arg10[%c0_43, %c0_44] : memref<64x32xf32, #tpu.memory_space<vmem>>, vector<64x32xf32>
    %cst_45 = arith.constant dense<0.000000e+00> : vector<8x32xf32>
    %157 = tpu.matmul %155, %156, %cst_45 {dimension_numbers = #tpu.dot_dimension_numbers<[1], [0], [0], [1], [0, 0, 1, 1], [], []>} : vector<8x64xf32>, vector<64x32xf32>, vector<8x32xf32> -> vector<8x32xf32>
    %c0_46 = arith.constant 0 : index
    %c0_47 = arith.constant 0 : index
    %158 = vector.load %arg11[%c0_46, %c0_47] : memref<1x32xf32, #tpu.memory_space<vmem>>, vector<1x32xf32>
    %159 = vector.broadcast %158 : vector<1x32xf32> to vector<8x32xf32>
    %160 = arith.addf %157, %159 : vector<8x32xf32>
    %161 = arith.addf %148, %160 : vector<8x32xf32>
    %cst_48 = arith.constant dense<0.000000e+00> : vector<8xf32>
    %162 = vector.multi_reduction <add>, %161, %cst_48 [1] : vector<8x32xf32> to vector<8xf32>
    %163 = vector.shape_cast %162 : vector<8xf32> to vector<8x1xf32>
    %cst_49 = arith.constant 3.200000e+01 : f32
    %164 = vector.broadcast %cst_49 : f32 to vector<8x1xf32>
    %165 = arith.divf %163, %164 : vector<8x1xf32>
    %166 = vector.broadcast %165 : vector<8x1xf32> to vector<8x32xf32>
    %167 = arith.subf %161, %166 : vector<8x32xf32>
    %168 = vector.broadcast %165 : vector<8x1xf32> to vector<8x32xf32>
    %169 = arith.subf %161, %168 : vector<8x32xf32>
    %170 = arith.mulf %167, %169 : vector<8x32xf32>
    %cst_50 = arith.constant dense<0.000000e+00> : vector<8xf32>
    %171 = vector.multi_reduction <add>, %170, %cst_50 [1] : vector<8x32xf32> to vector<8xf32>
    %172 = vector.shape_cast %171 : vector<8xf32> to vector<8x1xf32>
    %cst_51 = arith.constant 3.200000e+01 : f32
    %173 = vector.broadcast %cst_51 : f32 to vector<8x1xf32>
    %174 = arith.divf %172, %173 : vector<8x1xf32>
    %175 = vector.broadcast %165 : vector<8x1xf32> to vector<8x32xf32>
    %176 = arith.subf %161, %175 : vector<8x32xf32>
    %cst_52 = arith.constant 9.99999974E-6 : f32
    %177 = vector.broadcast %cst_52 : f32 to vector<8x1xf32>
    %178 = arith.addf %174, %177 : vector<8x1xf32>
    %179 = math.rsqrt %178 : vector<8x1xf32>
    %180 = vector.broadcast %179 : vector<8x1xf32> to vector<8x32xf32>
    %181 = arith.mulf %176, %180 : vector<8x32xf32>
    %c0_53 = arith.constant 0 : index
    %c0_54 = arith.constant 0 : index
    %182 = vector.load %arg6[%c0_53, %c0_54] : memref<1x32xf32, #tpu.memory_space<vmem>>, vector<1x32xf32>
    %183 = vector.broadcast %182 : vector<1x32xf32> to vector<8x32xf32>
    %184 = arith.mulf %181, %183 : vector<8x32xf32>
    %c0_55 = arith.constant 0 : index
    %c0_56 = arith.constant 0 : index
    %185 = vector.load %arg7[%c0_55, %c0_56] : memref<1x32xf32, #tpu.memory_space<vmem>>, vector<1x32xf32>
    %186 = vector.broadcast %185 : vector<1x32xf32> to vector<8x32xf32>
    %187 = arith.addf %184, %186 : vector<8x32xf32>
    %c0_57 = arith.constant 0 : index
    %c0_58 = arith.constant 0 : index
    %188 = vector.load %arg14[%c0_57, %c0_58] : memref<8x32xf32, #tpu.memory_space<vmem>>, vector<8x32xf32>
    tpu.vector_store %arg14[%c0_57, %c0_58], %187 {strides = array<i32>} : memref<8x32xf32, #tpu.memory_space<vmem>>, vector<8x32xf32>,
    return
  }
  func.func @transform_0(%arg0: i32) -> (i32, i32) {
    %c0_i32 = arith.constant 0 : i32
    %c0_i32_0 = arith.constant 0 : i32
    return %arg0, %c0_i32 : i32, i32
  }
  func.func @transform_1(%arg0: i32) -> (i32, i32) {
    %c0_i32 = arith.constant 0 : i32
    %c0_i32_0 = arith.constant 0 : i32
    %c0_i32_1 = arith.constant 0 : i32
    return %c0_i32, %c0_i32_0 : i32, i32
  }
  func.func @transform_2(%arg0: i32) -> (i32, i32) {
    %c0_i32 = arith.constant 0 : i32
    %c0_i32_0 = arith.constant 0 : i32
    %c0_i32_1 = arith.constant 0 : i32
    return %c0_i32, %c0_i32_0 : i32, i32
  }
  func.func @transform_3(%arg0: i32) -> (i32, i32) {
    %c0_i32 = arith.constant 0 : i32
    %c0_i32_0 = arith.constant 0 : i32
    %c0_i32_1 = arith.constant 0 : i32
    return %c0_i32, %c0_i32_0 : i32, i32
  }
  func.func @transform_4(%arg0: i32) -> (i32, i32) {
    %c0_i32 = arith.constant 0 : i32
    %c0_i32_0 = arith.constant 0 : i32
    %c0_i32_1 = arith.constant 0 : i32
    return %c0_i32, %c0_i32_0 : i32, i32
  }
  func.func @transform_5(%arg0: i32) -> (i32, i32) {
    %c0_i32 = arith.constant 0 : i32
    %c0_i32_0 = arith.constant 0 : i32
    %c0_i32_1 = arith.constant 0 : i32
    return %c0_i32, %c0_i32_0 : i32, i32
  }
  func.func @transform_6(%arg0: i32) -> (i32, i32) {
    %c0_i32 = arith.constant 0 : i32
    %c0_i32_0 = arith.constant 0 : i32
    %c0_i32_1 = arith.constant 0 : i32
    return %c0_i32, %c0_i32_0 : i32, i32
  }
  func.func @transform_7(%arg0: i32) -> (i32, i32) {
    %c0_i32 = arith.constant 0 : i32
    %c0_i32_0 = arith.constant 0 : i32
    %c0_i32_1 = arith.constant 0 : i32
    return %c0_i32, %c0_i32_0 : i32, i32
  }
  func.func @transform_8(%arg0: i32) -> (i32, i32) {
    %c0_i32 = arith.constant 0 : i32
    %c0_i32_0 = arith.constant 0 : i32
    %c0_i32_1 = arith.constant 0 : i32
    return %c0_i32, %c0_i32_0 : i32, i32
  }
  func.func @transform_9(%arg0: i32) -> (i32, i32) {
    %c0_i32 = arith.constant 0 : i32
    %c0_i32_0 = arith.constant 0 : i32
    %c0_i32_1 = arith.constant 0 : i32
    return %c0_i32, %c0_i32_0 : i32, i32
  }
  func.func @transform_10(%arg0: i32) -> (i32, i32) {
    %c0_i32 = arith.constant 0 : i32
    %c0_i32_0 = arith.constant 0 : i32
    %c0_i32_1 = arith.constant 0 : i32
    return %c0_i32, %c0_i32_0 : i32, i32
  }
  func.func @transform_11(%arg0: i32) -> (i32, i32) {
    %c0_i32 = arith.constant 0 : i32
    %c0_i32_0 = arith.constant 0 : i32
    %c0_i32_1 = arith.constant 0 : i32
    return %c0_i32, %c0_i32_0 : i32, i32
  }
  func.func @transform_12(%arg0: i32) -> (i32, i32) {
    %c0_i32 = arith.constant 0 : i32
    %c0_i32_0 = arith.constant 0 : i32
    %c0_i32_1 = arith.constant 0 : i32
    return %c0_i32, %c0_i32_0 : i32, i32
  }
  func.func @transform_13(%arg0: i32) -> (i32, i32) {
    %c0_i32 = arith.constant 0 : i32
    %c0_i32_0 = arith.constant 0 : i32
    return %arg0, %c0_i32 : i32, i32
  }
}

</mosaic_0001>

<llo_original>
// kernel: tpu_custom_call.1
$region0: #{tpu_custom_call.1}
  #allocation0 [shape = 'u32[]', space=smem, size = 0x4, offset = 0x4, fixed_abs, tag = 'smem constant byte address 0x4 - core index']
  #allocation1 [shape = 'u32[144,128]{1,0:T(1,128)}', space=vmem, size = 0x12000, scoped, tag = 'internal scratch']
  %s0 = inlined_call_operand.vmem [shape: f32[16,32], index: 0, kind: input, shape index: {}]
  %s1 = inlined_call_operand.vmem [shape: f32[32,96], index: 1, kind: input, shape index: {}]
  %s2 = inlined_call_operand.vmem [shape: f32[1,96], index: 2, kind: input, shape index: {}]
  %s3 = inlined_call_operand.vmem [shape: f32[32,32], index: 3, kind: input, shape index: {}]
  %s4 = inlined_call_operand.vmem [shape: f32[1,32], index: 4, kind: input, shape index: {}]
  %s5 = inlined_call_operand.vmem [shape: f32[1,32], index: 5, kind: input, shape index: {}]
  %s6 = inlined_call_operand.vmem [shape: f32[1,32], index: 6, kind: input, shape index: {}]
  %s7 = inlined_call_operand.vmem [shape: f32[32,64], index: 7, kind: input, shape index: {}]
  %s8 = inlined_call_operand.vmem [shape: f32[1,64], index: 8, kind: input, shape index: {}]
  %s9 = inlined_call_operand.vmem [shape: f32[64,32], index: 9, kind: input, shape index: {}]
  %s10 = inlined_call_operand.vmem [shape: f32[1,32], index: 10, kind: input, shape index: {}]
  %s11 = inlined_call_operand.vmem [shape: f32[32,4], index: 11, kind: input, shape index: {}]
  %s12 = inlined_call_operand.vmem [shape: f32[4,32], index: 12, kind: input, shape index: {}]
  %s13 = inlined_call_operand.hbm [shape: f32[16,32], index: 13, kind: output, shape index: {}]
  %s14 = sld [smem:[#allocation0]]
  $region85: #{tpu_custom_call.1} parent=0
    _
  %s16 = ssub.s32 1, %s14
  %s17 = scalar_select 0, %s16, %s14
  $region1: #{tpu_custom_call.1} parent=0
    #allocation2 [shape = 'u8[8192]{0}', space=vmem, size = 0x2000, scoped, tag = 'output window, operand 0']
    #allocation3 [shape = 's32[2]{0}', space=sflag, size = 0x8, scoped, tag = 'scoped memory for tpu_custom_call.1']
    %18 = vsyncpa [#allocation3], 0
    %s19 = scalar_lea.sflag [#allocation3], 1
    %20 = vsyncpa %s19, 0
    loop: start=0, step=1, limit=4
    $region2: #{tpu_custom_call.1} parent=1 // loop_pre_header
      _
    $region3: #{tpu_custom_call.1} parent=1 // loop_header
      %s22 = sphi 0, %s26
      %p23 = scmp.ge.s32.totalorder %s22, 4
      %s32 = sphi 0, %s34
      %s35 = sphi 0, %s32
      %s36 = sphi 0, %s35
      %s52 = sphi 0, %s36
      %s56 = sphi 0, %s56
      %s58 = sphi 0, %s56
      %s59 = sphi 0, %s58
      %s73 = sphi 0, %s59
      %s77 = sphi 0, %s77
      %s79 = sphi 0, %s77
      %s80 = sphi 0, %s79
      %s94 = sphi 0, %s80
      %s98 = sphi 0, %s98
      %s100 = sphi 0, %s98
      %s101 = sphi 0, %s100
      %s115 = sphi 0, %s101
      %s119 = sphi 0, %s119
      %s121 = sphi 0, %s119
      %s122 = sphi 0, %s121
      %s136 = sphi 0, %s122
      %s140 = sphi 0, %s140
      %s142 = sphi 0, %s140
      %s143 = sphi 0, %s142
      %s157 = sphi 0, %s143
      %s161 = sphi 0, %s161
      %s163 = sphi 0, %s161
      %s164 = sphi 0, %s163
      %s178 = sphi 0, %s164
      %s182 = sphi 0, %s182
      %s184 = sphi 0, %s182
      %s185 = sphi 0, %s184
      %s199 = sphi 0, %s185
      %s203 = sphi 0, %s203
      %s205 = sphi 0, %s203
      %s206 = sphi 0, %s205
      %s220 = sphi 0, %s206
      %s224 = sphi 0, %s224
      %s226 = sphi 0, %s224
      %s227 = sphi 0, %s226
      %s241 = sphi 0, %s227
      %s245 = sphi 0, %s245
      %s247 = sphi 0, %s245
      %s248 = sphi 0, %s247
      %s262 = sphi 0, %s248
      %s266 = sphi 0, %s266
      %s268 = sphi 0, %s266
      %s269 = sphi 0, %s268
      %s283 = sphi 0, %s269
      %s287 = sphi 0, %s287
      %s289 = sphi 0, %s287
      %s290 = sphi 0, %s289
      %s304 = sphi 0, %s290
      %s310 = sphi 0, %s312
      %s313 = sphi 0, %s310
      %s314 = sphi 0, %s313
      %s330 = sphi 0, %s314
    $region4: #{tpu_custom_call.1} parent=1 // loop_header_branch
      %25 = sbr.rel (%p23) target = $region8
    $region5: #{tpu_custom_call.1} parent=1 // loop_body
      %s27 = ssub.s32 %s22, 1
      %s28 = ssub.s32 %s22, 2
      %s29 = sadd.s32 %s22, 1
      %s30 = ssub.s32 %s22, %s29
      %p31 = scmp.eq.s32.totalorder %s30, 0
      %s33 = sadd.s32 %s32, 1
      %s34 = scalar_select %p31, %s32, %s33
      %p37 = pneg %p31
      %p38 = scmp.eq.s32.totalorder %s22, 1
      %p39 = por %p37, %p38
      %p40 = scmp.ne.s32.totalorder %s32, %s35
      %p41 = scmp.eq.s32.totalorder %s22, 0
      %p42 = por %p40, %p41
      %p43 = scmp.ne.s32.totalorder %s32, %s35
      %p44 = scmp.eq.s32.totalorder %s27, 1
      %p45 = por %p43, %p44
      %p46 = scmp.ne.s32.totalorder %s35, %s36
      %p47 = scmp.eq.s32.totalorder %s27, 0
      %p48 = por %p46, %p47
      %p49 = scmp.ne.s32.totalorder %s35, %s36
      %p50 = scmp.eq.s32.totalorder %s28, 1
      %p51 = por %p49, %p50
      %p53 = scmp.ne.s32.totalorder %s36, %s52
      %p54 = scmp.eq.s32.totalorder %s28, 0
      %p55 = por %p53, %p54
      %s57 = sadd.s32 %s56, 1
      %p60 = scmp.eq.s32.totalorder %s22, 1
      %p61 = scmp.ne.s32.totalorder %s56, %s58
      %p62 = scmp.eq.s32.totalorder %s22, 0
      %p63 = por %p61, %p62
      %p64 = scmp.ne.s32.totalorder %s56, %s58
      %p65 = scmp.eq.s32.totalorder %s27, 1
      %p66 = por %p64, %p65
      %p67 = scmp.ne.s32.totalorder %s58, %s59
      %p68 = scmp.eq.s32.totalorder %s27, 0
      %p69 = por %p67, %p68
      %p70 = scmp.ne.s32.totalorder %s58, %s59
      %p71 = scmp.eq.s32.totalorder %s28, 1
      %p72 = por %p70, %p71
      %p74 = scmp.ne.s32.totalorder %s59, %s73
      %p75 = scmp.eq.s32.totalorder %s28, 0
      %p76 = por %p74, %p75
      %s78 = sadd.s32 %s77, 1
      %p81 = scmp.eq.s32.totalorder %s22, 1
      %p82 = scmp.ne.s32.totalorder %s77, %s79
      %p83 = scmp.eq.s32.totalorder %s22, 0
      %p84 = por %p82, %p83
      %p85 = scmp.ne.s32.totalorder %s77, %s79
      %p86 = scmp.eq.s32.totalorder %s27, 1
      %p87 = por %p85, %p86
      %p88 = scmp.ne.s32.totalorder %s79, %s80
      %p89 = scmp.eq.s32.totalorder %s27, 0
      %p90 = por %p88, %p89
      %p91 = scmp.ne.s32.totalorder %s79, %s80
      %p92 = scmp.eq.s32.totalorder %s28, 1
      %p93 = por %p91, %p92
      %p95 = scmp.ne.s32.totalorder %s80, %s94
      %p96 = scmp.eq.s32.totalorder %s28, 0
      %p97 = por %p95, %p96
      %s99 = sadd.s32 %s98, 1
      %p102 = scmp.eq.s32.totalorder %s22, 1
      %p103 = scmp.ne.s32.totalorder %s98, %s100
      %p104 = scmp.eq.s32.totalorder %s22, 0
      %p105 = por %p103, %p104
      %p106 = scmp.ne.s32.totalorder %s98, %s100
      %p107 = scmp.eq.s32.totalorder %s27, 1
      %p108 = por %p106, %p107
      %p109 = scmp.ne.s32.totalorder %s100, %s101
      %p110 = scmp.eq.s32.totalorder %s27, 0
      %p111 = por %p109, %p110
      %p112 = scmp.ne.s32.totalorder %s100, %s101
      %p113 = scmp.eq.s32.totalorder %s28, 1
      %p114 = por %p112, %p113
      %p116 = scmp.ne.s32.totalorder %s101, %s115
      %p117 = scmp.eq.s32.totalorder %s28, 0
      %p118 = por %p116, %p117
      %s120 = sadd.s32 %s119, 1
      %p123 = scmp.eq.s32.totalorder %s22, 1
      %p124 = scmp.ne.s32.totalorder %s119, %s121
      %p125 = scmp.eq.s32.totalorder %s22, 0
      %p126 = por %p124, %p125
      %p127 = scmp.ne.s32.totalorder %s119, %s121
      %p128 = scmp.eq.s32.totalorder %s27, 1
      %p129 = por %p127, %p128
      %p130 = scmp.ne.s32.totalorder %s121, %s122
      %p131 = scmp.eq.s32.totalorder %s27, 0
      %p132 = por %p130, %p131
      %p133 = scmp.ne.s32.totalorder %s121, %s122
      %p134 = scmp.eq.s32.totalorder %s28, 1
      %p135 = por %p133, %p134
      %p137 = scmp.ne.s32.totalorder %s122, %s136
      %p138 = scmp.eq.s32.totalorder %s28, 0
      %p139 = por %p137, %p138
      %s141 = sadd.s32 %s140, 1
      %p144 = scmp.eq.s32.totalorder %s22, 1
      %p145 = scmp.ne.s32.totalorder %s140, %s142
      %p146 = scmp.eq.s32.totalorder %s22, 0
      %p147 = por %p145, %p146
      %p148 = scmp.ne.s32.totalorder %s140, %s142
      %p149 = scmp.eq.s32.totalorder %s27, 1
      %p150 = por %p148, %p149
      %p151 = scmp.ne.s32.totalorder %s142, %s143
      %p152 = scmp.eq.s32.totalorder %s27, 0
      %p153 = por %p151, %p152
      %p154 = scmp.ne.s32.totalorder %s142, %s143
      %p155 = scmp.eq.s32.totalorder %s28, 1
      %p156 = por %p154, %p155
      %p158 = scmp.ne.s32.totalorder %s143, %s157
      %p159 = scmp.eq.s32.totalorder %s28, 0
      %p160 = por %p158, %p159
      %s162 = sadd.s32 %s161, 1
      %p165 = scmp.eq.s32.totalorder %s22, 1
      %p166 = scmp.ne.s32.totalorder %s161, %s163
      %p167 = scmp.eq.s32.totalorder %s22, 0
      %p168 = por %p166, %p167
      %p169 = scmp.ne.s32.totalorder %s161, %s163
      %p170 = scmp.eq.s32.totalorder %s27, 1
      %p171 = por %p169, %p170
      %p172 = scmp.ne.s32.totalorder %s163, %s164
      %p173 = scmp.eq.s32.totalorder %s27, 0
      %p174 = por %p172, %p173
      %p175 = scmp.ne.s32.totalorder %s163, %s164
      %p176 = scmp.eq.s32.totalorder %s28, 1
      %p177 = por %p175, %p176
      %p179 = scmp.ne.s32.totalorder %s164, %s178
      %p180 = scmp.eq.s32.totalorder %s28, 0
      %p181 = por %p179, %p180
      %s183 = sadd.s32 %s182, 1
      %p186 = scmp.eq.s32.totalorder %s22, 1
      %p187 = scmp.ne.s32.totalorder %s182, %s184
      %p188 = scmp.eq.s32.totalorder %s22, 0
      %p189 = por %p187, %p188
      %p190 = scmp.ne.s32.totalorder %s182, %s184
      %p191 = scmp.eq.s32.totalorder %s27, 1
      %p192 = por %p190, %p191
      %p193 = scmp.ne.s32.totalorder %s184, %s185
      %p194 = scmp.eq.s32.totalorder %s27, 0
      %p195 = por %p193, %p194
      %p196 = scmp.ne.s32.totalorder %s184, %s185
      %p197 = scmp.eq.s32.totalorder %s28, 1
      %p198 = por %p196, %p197
      %p200 = scmp.ne.s32.totalorder %s185, %s199
      %p201 = scmp.eq.s32.totalorder %s28, 0
      %p202 = por %p200, %p201
      %s204 = sadd.s32 %s203, 1
      %p207 = scmp.eq.s32.totalorder %s22, 1
      %p208 = scmp.ne.s32.totalorder %s203, %s205
      %p209 = scmp.eq.s32.totalorder %s22, 0
      %p210 = por %p208, %p209
      %p211 = scmp.ne.s32.totalorder %s203, %s205
      %p212 = scmp.eq.s32.totalorder %s27, 1
      %p213 = por %p211, %p212
      %p214 = scmp.ne.s32.totalorder %s205, %s206
      %p215 = scmp.eq.s32.totalorder %s27, 0
      %p216 = por %p214, %p215
      %p217 = scmp.ne.s32.totalorder %s205, %s206
      %p218 = scmp.eq.s32.totalorder %s28, 1
      %p219 = por %p217, %p218
      %p221 = scmp.ne.s32.totalorder %s206, %s220
      %p222 = scmp.eq.s32.totalorder %s28, 0
      %p223 = por %p221, %p222
      %s225 = sadd.s32 %s224, 1
      %p228 = scmp.eq.s32.totalorder %s22, 1
      %p229 = scmp.ne.s32.totalorder %s224, %s226
      %p230 = scmp.eq.s32.totalorder %s22, 0
      %p231 = por %p229, %p230
      %p232 = scmp.ne.s32.totalorder %s224, %s226
      %p233 = scmp.eq.s32.totalorder %s27, 1
      %p234 = por %p232, %p233
      %p235 = scmp.ne.s32.totalorder %s226, %s227
      %p236 = scmp.eq.s32.totalorder %s27, 0
      %p237 = por %p235, %p236
      %p238 = scmp.ne.s32.totalorder %s226, %s227
      %p239 = scmp.eq.s32.totalorder %s28, 1
      %p240 = por %p238, %p239
      %p242 = scmp.ne.s32.totalorder %s227, %s241
      %p243 = scmp.eq.s32.totalorder %s28, 0
      %p244 = por %p242, %p243
      %s246 = sadd.s32 %s245, 1
      %p249 = scmp.eq.s32.totalorder %s22, 1
      %p250 = scmp.ne.s32.totalorder %s245, %s247
      %p251 = scmp.eq.s32.totalorder %s22, 0
      %p252 = por %p250, %p251
      %p253 = scmp.ne.s32.totalorder %s245, %s247
      %p254 = scmp.eq.s32.totalorder %s27, 1
      %p255 = por %p253, %p254
      %p256 = scmp.ne.s32.totalorder %s247, %s248
      %p257 = scmp.eq.s32.totalorder %s27, 0
      %p258 = por %p256, %p257
      %p259 = scmp.ne.s32.totalorder %s247, %s248
      %p260 = scmp.eq.s32.totalorder %s28, 1
      %p261 = por %p259, %p260
      %p263 = scmp.ne.s32.totalorder %s248, %s262
      %p264 = scmp.eq.s32.totalorder %s28, 0
      %p265 = por %p263, %p264
      %s267 = sadd.s32 %s266, 1
      %p270 = scmp.eq.s32.totalorder %s22, 1
      %p271 = scmp.ne.s32.totalorder %s266, %s268
      %p272 = scmp.eq.s32.totalorder %s22, 0
      %p273 = por %p271, %p272
      %p274 = scmp.ne.s32.totalorder %s266, %s268
      %p275 = scmp.eq.s32.totalorder %s27, 1
      %p276 = por %p274, %p275
      %p277 = scmp.ne.s32.totalorder %s268, %s269
      %p278 = scmp.eq.s32.totalorder %s27, 0
      %p279 = por %p277, %p278
      %p280 = scmp.ne.s32.totalorder %s268, %s269
      %p281 = scmp.eq.s32.totalorder %s28, 1
      %p282 = por %p280, %p281
      %p284 = scmp.ne.s32.totalorder %s269, %s283
      %p285 = scmp.eq.s32.totalorder %s28, 0
      %p286 = por %p284, %p285
      %s288 = sadd.s32 %s287, 1
      %p291 = scmp.eq.s32.totalorder %s22, 1
      %p292 = scmp.ne.s32.totalorder %s287, %s289
      %p293 = scmp.eq.s32.totalorder %s22, 0
      %p294 = por %p292, %p293
      %p295 = scmp.ne.s32.totalorder %s287, %s289
      %p296 = scmp.eq.s32.totalorder %s27, 1
      %p297 = por %p295, %p296
      %p298 = scmp.ne.s32.totalorder %s289, %s290
      %p299 = scmp.eq.s32.totalorder %s27, 0
      %p300 = por %p298, %p299
      %p301 = scmp.ne.s32.totalorder %s289, %s290
      %p302 = scmp.eq.s32.totalorder %s28, 1
      %p303 = por %p301, %p302
      %p305 = scmp.ne.s32.totalorder %s290, %s304
      %p306 = scmp.eq.s32.totalorder %s28, 0
      %p307 = por %p305, %p306
      %s308 = ssub.s32 %s22, %s29
      %p309 = scmp.eq.s32.totalorder %s308, 0
      %s311 = sadd.s32 %s310, 1
      %s312 = scalar_select %p309, %s310, %s311
      %p315 = pneg %p309
      %p316 = scmp.eq.s32.totalorder %s22, 1
      %p317 = por %p315, %p316
      %p318 = scmp.ne.s32.totalorder %s310, %s313
      %p319 = scmp.eq.s32.totalorder %s22, 0
      %p320 = por %p318, %p319
      %p321 = scmp.ne.s32.totalorder %s310, %s313
      %p322 = scmp.eq.s32.totalorder %s27, 1
      %p323 = por %p321, %p322
      %p324 = scmp.ne.s32.totalorder %s313, %s314
      %p325 = scmp.eq.s32.totalorder %s27, 0
      %p326 = por %p324, %p325
      %p327 = scmp.ne.s32.totalorder %s313, %s314
      %p328 = scmp.eq.s32.totalorder %s28, 1
      %p329 = por %p327, %p328
      %p331 = scmp.ne.s32.totalorder %s314, %s330
      %p332 = scmp.eq.s32.totalorder %s28, 0
      %p333 = por %p331, %p332
      %p334 = scmp.le.s32.totalorder 1, %s22
      %p335 = scmp.lt.s32.totalorder %s22, 3
      %p336 = pnand %p334, %p335
      %p337 = pneg %p336
      // Predicated region
      $region9: #{tpu_custom_call.1} parent=5 // pred_check
        _
      $region10: #{tpu_custom_call.1} parent=5 // pred_check_branch
        %339 = sbr.rel (%p336) target = $region12
      $region11: #{tpu_custom_call.1} parent=5 // pred_region
        %s340 = ssub.s32 %s22, 1
        // Predicated region
        $region13: #{tpu_custom_call.1} parent=11 // pred_check
          %p341 = pneg %p69
        $region14: #{tpu_custom_call.1} parent=11 // pred_check_branch
          %343 = sbr.rel (%p341) target = $region16
        $region15: #{tpu_custom_call.1} parent=11 // pred_region
          _
        $region16: #{tpu_custom_call.1} parent=11 // pred_fallthru
          _
        // Predicated region
        $region17: #{tpu_custom_call.1} parent=11 // pred_check
          %p344 = pneg %p90
        $region18: #{tpu_custom_call.1} parent=11 // pred_check_branch
          %346 = sbr.rel (%p344) target = $region20
        $region19: #{tpu_custom_call.1} parent=11 // pred_region
          _
        $region20: #{tpu_custom_call.1} parent=11 // pred_fallthru
          _
        // Predicated region
        $region21: #{tpu_custom_call.1} parent=11 // pred_check
          %p347 = pneg %p111
        $region22: #{tpu_custom_call.1} parent=11 // pred_check_branch
          %349 = sbr.rel (%p347) target = $region24
        $region23: #{tpu_custom_call.1} parent=11 // pred_region
          _
        $region24: #{tpu_custom_call.1} parent=11 // pred_fallthru
          _
        // Predicated region
        $region25: #{tpu_custom_call.1} parent=11 // pred_check
          %p350 = pneg %p132
        $region26: #{tpu_custom_call.1} parent=11 // pred_check_branch
          %352 = sbr.rel (%p350) target = $region28
        $region27: #{tpu_custom_call.1} parent=11 // pred_region
          _
        $region28: #{tpu_custom_call.1} parent=11 // pred_fallthru
          _
        // Predicated region
        $region29: #{tpu_custom_call.1} parent=11 // pred_check
          %p353 = pneg %p153
        $region30: #{tpu_custom_call.1} parent=11 // pred_check_branch
          %355 = sbr.rel (%p353) target = $region32
        $region31: #{tpu_custom_call.1} parent=11 // pred_region
          _
        $region32: #{tpu_custom_call.1} parent=11 // pred_fallthru
          _
        // Predicated region
        $region33: #{tpu_custom_call.1} parent=11 // pred_check
          %p356 = pneg %p174
        $region34: #{tpu_custom_call.1} parent=11 // pred_check_branch
          %358 = sbr.rel (%p356) target = $region36
        $region35: #{tpu_custom_call.1} parent=11 // pred_region
          _
        $region36: #{tpu_custom_call.1} parent=11 // pred_fallthru
          _
        // Predicated region
        $region37: #{tpu_custom_call.1} parent=11 // pred_check
          %p359 = pneg %p195
        $region38: #{tpu_custom_call.1} parent=11 // pred_check_branch
          %361 = sbr.rel (%p359) target = $region40
        $region39: #{tpu_custom_call.1} parent=11 // pred_region
          _
        $region40: #{tpu_custom_call.1} parent=11 // pred_fallthru
          _
        // Predicated region
        $region41: #{tpu_custom_call.1} parent=11 // pred_check
          %p362 = pneg %p216
        $region42: #{tpu_custom_call.1} parent=11 // pred_check_branch
          %364 = sbr.rel (%p362) target = $region44
        $region43: #{tpu_custom_call.1} parent=11 // pred_region
          _
        $region44: #{tpu_custom_call.1} parent=11 // pred_fallthru
          _
        // Predicated region
        $region45: #{tpu_custom_call.1} parent=11 // pred_check
          %p365 = pneg %p237
        $region46: #{tpu_custom_call.1} parent=11 // pred_check_branch
          %367 = sbr.rel (%p365) target = $region48
        $region47: #{tpu_custom_call.1} parent=11 // pred_region
          _
        $region48: #{tpu_custom_call.1} parent=11 // pred_fallthru
          _
        // Predicated region
        $region49: #{tpu_custom_call.1} parent=11 // pred_check
          %p368 = pneg %p258
        $region50: #{tpu_custom_call.1} parent=11 // pred_check_branch
          %370 = sbr.rel (%p368) target = $region52
        $region51: #{tpu_custom_call.1} parent=11 // pred_region
          _
        $region52: #{tpu_custom_call.1} parent=11 // pred_fallthru
          _
        // Predicated region
        $region53: #{tpu_custom_call.1} parent=11 // pred_check
          %p371 = pneg %p279
        $region54: #{tpu_custom_call.1} parent=11 // pred_check_branch
          %373 = sbr.rel (%p371) target = $region56
        $region55: #{tpu_custom_call.1} parent=11 // pred_region
          _
        $region56: #{tpu_custom_call.1} parent=11 // pred_fallthru
          _
        // Predicated region
        $region57: #{tpu_custom_call.1} parent=11 // pred_check
          %p374 = pneg %p300
        $region58: #{tpu_custom_call.1} parent=11 // pred_check_branch
          %376 = sbr.rel (%p374) target = $region60
        $region59: #{tpu_custom_call.1} parent=11 // pred_region
          _
        $region60: #{tpu_custom_call.1} parent=11 // pred_fallthru
          _
      $region12: #{tpu_custom_call.1} parent=5 // pred_fallthru
        _
      %p377 = scmp.lt.s32.totalorder %s22, 2
      // Predicated region
      $region61: #{tpu_custom_call.1} parent=5 // pred_check
        %p378 = pneg %p377
      $region62: #{tpu_custom_call.1} parent=5 // pred_check_branch
        %380 = sbr.rel (%p378) target = $region64
      $region63: #{tpu_custom_call.1} parent=5 // pred_region
        // Predicated region
        $region65: #{tpu_custom_call.1} parent=63 // pred_check
          %p381 = pneg %p42
        $region66: #{tpu_custom_call.1} parent=63 // pred_check_branch
          %383 = sbr.rel (%p381) target = $region68
        $region67: #{tpu_custom_call.1} parent=63 // pred_region
          %p384 = scmp.lt.s32.totalorder %s22, 1
          %s385 = scalar_select %p384, %s22, 1
          %s386 = smul.addr %s385, 8
          %s387 = scalar_lea.vmem %s0, %s386
        $region68: #{tpu_custom_call.1} parent=63 // pred_fallthru
          _
      $region64: #{tpu_custom_call.1} parent=5 // pred_fallthru
        _
      %p388 = scmp.le.s32.totalorder 1, %s22
      %p389 = scmp.lt.s32.totalorder %s22, 3
      %p390 = pnand %p388, %p389
      %p391 = pneg %p390
      // Predicated region
      $region69: #{tpu_custom_call.1} parent=5 // pred_check
        _
      $region70: #{tpu_custom_call.1} parent=5 // pred_check_branch
        %393 = sbr.rel (%p390) target = $region72
      $region71: #{tpu_custom_call.1} parent=5 // pred_region
        %s394 = ssub.s32 %s22, 1
        %p395 = scmp.lt.s32.totalorder %s27, 1
        %s396 = scalar_select %p395, %s27, 1
        %s397 = smul.addr %s396, 8
        %s398 = scalar_lea.vmem %s0, %s397
        %p399 = pneg %p48
        %p400 = pneg %p45
        %p401 = pneg %p69
        %p402 = pneg %p66
        %p403 = pneg %p90
        %p404 = pneg %p87
        %p405 = pneg %p111
        %p406 = pneg %p108
        %p407 = pneg %p132
        %p408 = pneg %p129
        %p409 = pneg %p153
        %p410 = pneg %p150
        %p411 = pneg %p174
        %p412 = pneg %p171
        %p413 = pneg %p195
        %p414 = pneg %p192
        %p415 = pneg %p216
        %p416 = pneg %p213
        %p417 = pneg %p237
        %p418 = pneg %p234
        %p419 = pneg %p258
        %p420 = pneg %p255
        %p421 = pneg %p279
        %p422 = pneg %p276
        %p423 = pneg %p300
        %p424 = pneg %p297
        %p425 = pneg %p326
        %p426 = pneg %p323
        %s427 = sand.u32 %s313, 1
        %s428 = scalar_lea.sflag [#allocation3], %s427
        %s429 = sand.u32 %s313, 1
        %s430 = smul.addr %s429, 8
        %s431 = scalar_lea.vmem [#allocation2], %s430
        %p432 = scmp.lt.s32.totalorder %s27, 1
        %s433 = scalar_select %p432, %s27, 1
        %s434 = smul.addr %s433, 8
        %s435 = scalar_lea.vmem %s0, %s434
        %v436 = vld [vmem:[%s435] sm:$0xff]
        %v437 = vld [vmem:[%s1] sm:$0xff]
        %v438 = vld [vmem:[%s1 + $0x8] sm:$0xff]
        %v439 = vld [vmem:[%s1 + $0x10] sm:$0xff]
        %v440 = vld [vmem:[%s1 + $0x18] sm:$0xff]
        %v441 = vld [vmem:[%s2] sm:$0x1]
        %v443 = vlaneseq
        %v444 = vshrl.u32 %v443, 7
        %v445 = vsub.s32 0, %v444
        %v446 = vrot.slane %v441, %v445
        %vm448 = vcmask 261120
        %v450 = vsel %vm448, %v436, 0
        %452 = vmatprep.subr.mxu0 0.0
        %453 = vmatpush1.msra.mxu0 %v437
        %454 = vmatprep.subr.mxu0 0.0
        %455 = vmatpush1.msra.mxu0 %v438
        %456 = vmatprep.subr.mxu0 0.0
        %457 = vmatpush1.msra.mxu0 %v439
        %458 = vmatprep.subr.mxu0 0.0
        %459 = vmatpush1.msra.mxu0 %v440
        %460 = vmatprep.subr.mxu0 0.0
        %461 = vmatpush1.msra.mxu0 0.0
        %462 = vmatprep.subr.mxu0 0.0
        %463 = vmatpush1.msra.mxu0 0.0
        %464 = vmatprep.subr.mxu0 0.0
        %465 = vmatpush1.msra.mxu0 0.0
        %466 = vmatprep.subr.mxu0 0.0
        %467 = vmatpush1.msra.mxu0 0.0
        %468 = vmatprep.subr.mxu0 0.0
        %469 = vmatpush1.msra.mxu0 0.0
        %470 = vmatprep.subr.mxu0 0.0
        %471 = vmatpush1.msra.mxu0 0.0
        %472 = vmatprep.subr.mxu0 0.0
        %473 = vmatpush1.msra.mxu0 0.0
        %474 = vmatprep.subr.mxu0 0.0
        %475 = vmatpush1.msra.mxu0 0.0
        %476 = vmatprep.subr.mxu0 0.0
        %477 = vmatpush1.msra.mxu0 0.0
        %478 = vmatprep.subr.mxu0 0.0
        %479 = vmatpush1.msra.mxu0 0.0
        %480 = vmatprep.subr.mxu0 0.0
        %481 = vmatpush1.msra.mxu0 0.0
        %482 = vmatprep.subr.mxu0 0.0
        %483 = vmatpush1.msra.mxu0 0.0
        %484 = vmatprep.subr.mxu0 0.0
        %485 = vmatpush1.msra.mxu0 0.0
        %486 = vmatprep.subr.mxu0 0.0
        %487 = vmatpush1.msra.mxu0 0.0
        %488 = vmatprep.subr.mxu0 0.0
        %489 = vmatpush1.msra.mxu0 0.0
        %490 = vmatprep.subr.mxu0 0.0
        %491 = vmatpush1.msra.mxu0 0.0
        %492 = vmatprep.subr.mxu0 0.0
        %493 = vmatpush1.msra.mxu0 0.0
        %494 = vmatprep.subr.mxu0 0.0
        %495 = vmatpush1.msra.mxu0 0.0
        %496 = vmatprep.subr.mxu0 0.0
        %497 = vmatpush1.msra.mxu0 0.0
        %498 = vmatprep.subr.mxu0 0.0
        %499 = vmatpush1.msra.mxu0 0.0
        %500 = vmatprep.subr.mxu0 0.0
        %501 = vmatpush1.msra.mxu0 0.0
        %502 = vmatprep.subr.mxu0 0.0
        %503 = vmatpush1.msra.mxu0 0.0
        %504 = vmatprep.subr.mxu0 0.0
        %505 = vmatpush1.msra.mxu0 0.0
        %506 = vmatprep.subr.mxu0 0.0
        %507 = vmatpush1.msra.mxu0 0.0
        %508 = vmatprep.subr.mxu0 0.0
        %509 = vmatpush1.msra.mxu0 0.0
        %510 = vmatprep.subr.mxu0 0.0
        %511 = vmatpush1.msra.mxu0 0.0
        %512 = vmatprep.subr.mxu0 0.0
        %513 = vmatpush1.msra.mxu0 0.0
        %514 = vmatprep.subr.mxu0 0.0
        %515 = vmatpush1.msra.mxu0 0.0
        %516 = vmatprep.mubr.f32.mxu0 0.0
        %517 = vmatmul.mubr.f32.gmra.mrb[0].mxu0 %v450
        %v518 = vpop.f32.mrb[0].mxu0
        %v519 = vadd.f32 %v446, %v518
        %v520 = vpop.f32.mrb[0].mxu0
        %521 = vdwg.mxu0
        %v522 = vld [vmem:[%s11] sm:$0xff]
        %v523 = vld [vmem:[%s11 + $0x8] sm:$0xff]
        %v524 = vld [vmem:[%s11 + $0x10] sm:$0xff]
        %v525 = vld [vmem:[%s11 + $0x18] sm:$0xff]
        %v526 = vld [vmem:[%s12] sm:$0xf]
        %528 = vrot.lane.b32.xlu0 %v519, 96
        %v529 = vpop.permute.xlu0 %528
        %531 = vrot.lane.b32.xlu0 %v519, 104
        %v532 = vpop.permute.xlu0 %531
        %534 = vrot.lane.b32.xlu0 %v519, 112
        %v535 = vpop.permute.xlu0 %534
        %537 = vrot.lane.b32.xlu0 %v519, 120
        %v538 = vpop.permute.xlu0 %537
        %vm540 = vcmask 64512
        %v541 = vsel %vm540, %v529, %v532
        %vm542 = vcmask 130048
        %v543 = vsel %vm542, %v541, %v535
        %vm544 = vcmask 195584
        %v545 = vsel %vm544, %v543, %v538
        %v546 = vmul.f32 %v519, %v545
        %v548 = vsel %vm448, %v546, 0
        %550 = vmatprep.subr.mxu0 0.0
        %551 = vmatpush1.msra.mxu0 %v522
        %552 = vmatprep.subr.mxu0 0.0
        %553 = vmatpush1.msra.mxu0 %v523
        %554 = vmatprep.subr.mxu0 0.0
        %555 = vmatpush1.msra.mxu0 %v524
        %556 = vmatprep.subr.mxu0 0.0
        %557 = vmatpush1.msra.mxu0 %v525
        %558 = vmatprep.subr.mxu0 0.0
        %559 = vmatpush1.msra.mxu0 0.0
        %560 = vmatprep.subr.mxu0 0.0
        %561 = vmatpush1.msra.mxu0 0.0
        %562 = vmatprep.subr.mxu0 0.0
        %563 = vmatpush1.msra.mxu0 0.0
        %564 = vmatprep.subr.mxu0 0.0
        %565 = vmatpush1.msra.mxu0 0.0
        %566 = vmatprep.subr.mxu0 0.0
        %567 = vmatpush1.msra.mxu0 0.0
        %568 = vmatprep.subr.mxu0 0.0
        %569 = vmatpush1.msra.mxu0 0.0
        %570 = vmatprep.subr.mxu0 0.0
        %571 = vmatpush1.msra.mxu0 0.0
        %572 = vmatprep.subr.mxu0 0.0
        %573 = vmatpush1.msra.mxu0 0.0
        %574 = vmatprep.subr.mxu0 0.0
        %575 = vmatpush1.msra.mxu0 0.0
        %576 = vmatprep.subr.mxu0 0.0
        %577 = vmatpush1.msra.mxu0 0.0
        %578 = vmatprep.subr.mxu0 0.0
        %579 = vmatpush1.msra.mxu0 0.0
        %580 = vmatprep.subr.mxu0 0.0
        %581 = vmatpush1.msra.mxu0 0.0
        %582 = vmatprep.subr.mxu0 0.0
        %583 = vmatpush1.msra.mxu0 0.0
        %584 = vmatprep.subr.mxu0 0.0
        %585 = vmatpush1.msra.mxu0 0.0
        %586 = vmatprep.subr.mxu0 0.0
        %587 = vmatpush1.msra.mxu0 0.0
        %588 = vmatprep.subr.mxu0 0.0
        %589 = vmatpush1.msra.mxu0 0.0
        %590 = vmatprep.subr.mxu0 0.0
        %591 = vmatpush1.msra.mxu0 0.0
        %592 = vmatprep.subr.mxu0 0.0
        %593 = vmatpush1.msra.mxu0 0.0
        %594 = vmatprep.subr.mxu0 0.0
        %595 = vmatpush1.msra.mxu0 0.0
        %596 = vmatprep.subr.mxu0 0.0
        %597 = vmatpush1.msra.mxu0 0.0
        %598 = vmatprep.subr.mxu0 0.0
        %599 = vmatpush1.msra.mxu0 0.0
        %600 = vmatprep.subr.mxu0 0.0
        %601 = vmatpush1.msra.mxu0 0.0
        %602 = vmatprep.subr.mxu0 0.0
        %603 = vmatpush1.msra.mxu0 0.0
        %604 = vmatprep.subr.mxu0 0.0
        %605 = vmatpush1.msra.mxu0 0.0
        %606 = vmatprep.subr.mxu0 0.0
        %607 = vmatpush1.msra.mxu0 0.0
        %608 = vmatprep.subr.mxu0 0.0
        %609 = vmatpush1.msra.mxu0 0.0
        %610 = vmatprep.subr.mxu0 0.0
        %611 = vmatpush1.msra.mxu0 0.0
        %612 = vmatprep.subr.mxu0 0.0
        %613 = vmatpush1.msra.mxu0 0.0
        %614 = vmatprep.mubr.f32.mxu0 0.0
        %615 = vmatmul.mubr.f32.gmra.mrb[0].mxu0 %v548
        %v616 = vpop.f32.mrb[0].mxu0
        %v617 = vadd.f32 0.0, %v616
        %v618 = vpop.f32.mrb[0].mxu0
        %619 = vdwg.mxu0
        %v620 = vmul.f32 %v617, 0.35355338
        %621 = vrot.lane.b32.xlu0 %v519, 88
        %v622 = vpop.permute.xlu0 %621
        %v624 = vsel %vm540, %v622, %v529
        %v625 = vsel %vm542, %v624, %v532
        %v626 = vsel %vm544, %v625, %v535
        %v627 = vmul.f32 %v519, %v626
        %v629 = vsel %vm448, %v627, 0
        %631 = vmatprep.subr.mxu0 0.0
        %632 = vmatpush1.msra.mxu0 %v522
        %633 = vmatprep.subr.mxu0 0.0
        %634 = vmatpush1.msra.mxu0 %v523
        %635 = vmatprep.subr.mxu0 0.0
        %636 = vmatpush1.msra.mxu0 %v524
        %637 = vmatprep.subr.mxu0 0.0
        %638 = vmatpush1.msra.mxu0 %v525
        %639 = vmatprep.subr.mxu0 0.0
        %640 = vmatpush1.msra.mxu0 0.0
        %641 = vmatprep.subr.mxu0 0.0
        %642 = vmatpush1.msra.mxu0 0.0
        %643 = vmatprep.subr.mxu0 0.0
        %644 = vmatpush1.msra.mxu0 0.0
        %645 = vmatprep.subr.mxu0 0.0
        %646 = vmatpush1.msra.mxu0 0.0
        %647 = vmatprep.subr.mxu0 0.0
        %648 = vmatpush1.msra.mxu0 0.0
        %649 = vmatprep.subr.mxu0 0.0
        %650 = vmatpush1.msra.mxu0 0.0
        %651 = vmatprep.subr.mxu0 0.0
        %652 = vmatpush1.msra.mxu0 0.0
        %653 = vmatprep.subr.mxu0 0.0
        %654 = vmatpush1.msra.mxu0 0.0
        %655 = vmatprep.subr.mxu0 0.0
        %656 = vmatpush1.msra.mxu0 0.0
        %657 = vmatprep.subr.mxu0 0.0
        %658 = vmatpush1.msra.mxu0 0.0
        %659 = vmatprep.subr.mxu0 0.0
        %660 = vmatpush1.msra.mxu0 0.0
        %661 = vmatprep.subr.mxu0 0.0
        %662 = vmatpush1.msra.mxu0 0.0
        %663 = vmatprep.subr.mxu0 0.0
        %664 = vmatpush1.msra.mxu0 0.0
        %665 = vmatprep.subr.mxu0 0.0
        %666 = vmatpush1.msra.mxu0 0.0
        %667 = vmatprep.subr.mxu0 0.0
        %668 = vmatpush1.msra.mxu0 0.0
        %669 = vmatprep.subr.mxu0 0.0
        %670 = vmatpush1.msra.mxu0 0.0
        %671 = vmatprep.subr.mxu0 0.0
        %672 = vmatpush1.msra.mxu0 0.0
        %673 = vmatprep.subr.mxu0 0.0
        %674 = vmatpush1.msra.mxu0 0.0
        %675 = vmatprep.subr.mxu0 0.0
        %676 = vmatpush1.msra.mxu0 0.0
        %677 = vmatprep.subr.mxu0 0.0
        %678 = vmatpush1.msra.mxu0 0.0
        %679 = vmatprep.subr.mxu0 0.0
        %680 = vmatpush1.msra.mxu0 0.0
        %681 = vmatprep.subr.mxu0 0.0
        %682 = vmatpush1.msra.mxu0 0.0
        %683 = vmatprep.subr.mxu0 0.0
        %684 = vmatpush1.msra.mxu0 0.0
        %685 = vmatprep.subr.mxu0 0.0
        %686 = vmatpush1.msra.mxu0 0.0
        %687 = vmatprep.subr.mxu0 0.0
        %688 = vmatpush1.msra.mxu0 0.0
        %689 = vmatprep.subr.mxu0 0.0
        %690 = vmatpush1.msra.mxu0 0.0
        %691 = vmatprep.subr.mxu0 0.0
        %692 = vmatpush1.msra.mxu0 0.0
        %693 = vmatprep.subr.mxu0 0.0
        %694 = vmatpush1.msra.mxu0 0.0
        %695 = vmatprep.mubr.f32.mxu0 0.0
        %696 = vmatmul.mubr.f32.gmra.mrb[0].mxu0 %v629
        %v697 = vpop.f32.mrb[0].mxu0
        %v698 = vadd.f32 0.0, %v697
        %v699 = vpop.f32.mrb[0].mxu0
        %700 = vdwg.mxu0
        %v701 = vmul.f32 %v698, 0.35355338
        %702 = vrot.lane.b32.xlu0 %v519, 80
        %v703 = vpop.permute.xlu0 %702
        %v705 = vsel %vm540, %v703, %v622
        %v706 = vsel %vm542, %v705, %v529
        %v707 = vsel %vm544, %v706, %v532
        %v708 = vmul.f32 %v519, %v707
        %v710 = vsel %vm448, %v708, 0
        %712 = vmatprep.subr.mxu0 0.0
        %713 = vmatpush1.msra.mxu0 %v522
        %714 = vmatprep.subr.mxu0 0.0
        %715 = vmatpush1.msra.mxu0 %v523
        %716 = vmatprep.subr.mxu0 0.0
        %717 = vmatpush1.msra.mxu0 %v524
        %718 = vmatprep.subr.mxu0 0.0
        %719 = vmatpush1.msra.mxu0 %v525
        %720 = vmatprep.subr.mxu0 0.0
        %721 = vmatpush1.msra.mxu0 0.0
        %722 = vmatprep.subr.mxu0 0.0
        %723 = vmatpush1.msra.mxu0 0.0
        %724 = vmatprep.subr.mxu0 0.0
        %725 = vmatpush1.msra.mxu0 0.0
        %726 = vmatprep.subr.mxu0 0.0
        %727 = vmatpush1.msra.mxu0 0.0
        %728 = vmatprep.subr.mxu0 0.0
        %729 = vmatpush1.msra.mxu0 0.0
        %730 = vmatprep.subr.mxu0 0.0
        %731 = vmatpush1.msra.mxu0 0.0
        %732 = vmatprep.subr.mxu0 0.0
        %733 = vmatpush1.msra.mxu0 0.0
        %734 = vmatprep.subr.mxu0 0.0
        %735 = vmatpush1.msra.mxu0 0.0
        %736 = vmatprep.subr.mxu0 0.0
        %737 = vmatpush1.msra.mxu0 0.0
        %738 = vmatprep.subr.mxu0 0.0
        %739 = vmatpush1.msra.mxu0 0.0
        %740 = vmatprep.subr.mxu0 0.0
        %741 = vmatpush1.msra.mxu0 0.0
        %742 = vmatprep.subr.mxu0 0.0
        %743 = vmatpush1.msra.mxu0 0.0
        %744 = vmatprep.subr.mxu0 0.0
        %745 = vmatpush1.msra.mxu0 0.0
        %746 = vmatprep.subr.mxu0 0.0
        %747 = vmatpush1.msra.mxu0 0.0
        %748 = vmatprep.subr.mxu0 0.0
        %749 = vmatpush1.msra.mxu0 0.0
        %750 = vmatprep.subr.mxu0 0.0
        %751 = vmatpush1.msra.mxu0 0.0
        %752 = vmatprep.subr.mxu0 0.0
        %753 = vmatpush1.msra.mxu0 0.0
        %754 = vmatprep.subr.mxu0 0.0
        %755 = vmatpush1.msra.mxu0 0.0
        %756 = vmatprep.subr.mxu0 0.0
        %757 = vmatpush1.msra.mxu0 0.0
        %758 = vmatprep.subr.mxu0 0.0
        %759 = vmatpush1.msra.mxu0 0.0
        %760 = vmatprep.subr.mxu0 0.0
        %761 = vmatpush1.msra.mxu0 0.0
        %762 = vmatprep.subr.mxu0 0.0
        %763 = vmatpush1.msra.mxu0 0.0
        %764 = vmatprep.subr.mxu0 0.0
        %765 = vmatpush1.msra.mxu0 0.0
        %766 = vmatprep.subr.mxu0 0.0
        %767 = vmatpush1.msra.mxu0 0.0
        %768 = vmatprep.subr.mxu0 0.0
        %769 = vmatpush1.msra.mxu0 0.0
        %770 = vmatprep.subr.mxu0 0.0
        %771 = vmatpush1.msra.mxu0 0.0
        %772 = vmatprep.subr.mxu0 0.0
        %773 = vmatpush1.msra.mxu0 0.0
        %774 = vmatprep.subr.mxu0 0.0
        %775 = vmatpush1.msra.mxu0 0.0
        %776 = vmatprep.mubr.f32.mxu0 0.0
        %777 = vmatmul.mubr.f32.gmra.mrb[0].mxu0 %v710
        %v778 = vpop.f32.mrb[0].mxu0
        %v779 = vadd.f32 0.0, %v778
        %v780 = vpop.f32.mrb[0].mxu0
        %781 = vdwg.mxu0
        %v782 = vmul.f32 %v779, 0.35355338
        %783 = vrot.lane.b32.xlu0 %v519, 72
        %v784 = vpop.permute.xlu0 %783
        %v786 = vsel %vm540, %v784, %v703
        %v787 = vsel %vm542, %v786, %v622
        %v788 = vsel %vm544, %v787, %v529
        %v789 = vmul.f32 %v519, %v788
        %v791 = vsel %vm448, %v789, 0
        %793 = vmatprep.subr.mxu0 0.0
        %794 = vmatpush1.msra.mxu0 %v522
        %795 = vmatprep.subr.mxu0 0.0
        %796 = vmatpush1.msra.mxu0 %v523
        %797 = vmatprep.subr.mxu0 0.0
        %798 = vmatpush1.msra.mxu0 %v524
        %799 = vmatprep.subr.mxu0 0.0
        %800 = vmatpush1.msra.mxu0 %v525
        %801 = vmatprep.subr.mxu0 0.0
        %802 = vmatpush1.msra.mxu0 0.0
        %803 = vmatprep.subr.mxu0 0.0
        %804 = vmatpush1.msra.mxu0 0.0
        %805 = vmatprep.subr.mxu0 0.0
        %806 = vmatpush1.msra.mxu0 0.0
        %807 = vmatprep.subr.mxu0 0.0
        %808 = vmatpush1.msra.mxu0 0.0
        %809 = vmatprep.subr.mxu0 0.0
        %810 = vmatpush1.msra.mxu0 0.0
        %811 = vmatprep.subr.mxu0 0.0
        %812 = vmatpush1.msra.mxu0 0.0
        %813 = vmatprep.subr.mxu0 0.0
        %814 = vmatpush1.msra.mxu0 0.0
        %815 = vmatprep.subr.mxu0 0.0
        %816 = vmatpush1.msra.mxu0 0.0
        %817 = vmatprep.subr.mxu0 0.0
        %818 = vmatpush1.msra.mxu0 0.0
        %819 = vmatprep.subr.mxu0 0.0
        %820 = vmatpush1.msra.mxu0 0.0
        %821 = vmatprep.subr.mxu0 0.0
        %822 = vmatpush1.msra.mxu0 0.0
        %823 = vmatprep.subr.mxu0 0.0
        %824 = vmatpush1.msra.mxu0 0.0
        %825 = vmatprep.subr.mxu0 0.0
        %826 = vmatpush1.msra.mxu0 0.0
        %827 = vmatprep.subr.mxu0 0.0
        %828 = vmatpush1.msra.mxu0 0.0
        %829 = vmatprep.subr.mxu0 0.0
        %830 = vmatpush1.msra.mxu0 0.0
        %831 = vmatprep.subr.mxu0 0.0
        %832 = vmatpush1.msra.mxu0 0.0
        %833 = vmatprep.subr.mxu0 0.0
        %834 = vmatpush1.msra.mxu0 0.0
        %835 = vmatprep.subr.mxu0 0.0
        %836 = vmatpush1.msra.mxu0 0.0
        %837 = vmatprep.subr.mxu0 0.0
        %838 = vmatpush1.msra.mxu0 0.0
        %839 = vmatprep.subr.mxu0 0.0
        %840 = vmatpush1.msra.mxu0 0.0
        %841 = vmatprep.subr.mxu0 0.0
        %842 = vmatpush1.msra.mxu0 0.0
        %843 = vmatprep.subr.mxu0 0.0
        %844 = vmatpush1.msra.mxu0 0.0
        %845 = vmatprep.subr.mxu0 0.0
        %846 = vmatpush1.msra.mxu0 0.0
        %847 = vmatprep.subr.mxu0 0.0
        %848 = vmatpush1.msra.mxu0 0.0
        %849 = vmatprep.subr.mxu0 0.0
        %850 = vmatpush1.msra.mxu0 0.0
        %851 = vmatprep.subr.mxu0 0.0
        %852 = vmatpush1.msra.mxu0 0.0
        %853 = vmatprep.subr.mxu0 0.0
        %854 = vmatpush1.msra.mxu0 0.0
        %855 = vmatprep.subr.mxu0 0.0
        %856 = vmatpush1.msra.mxu0 0.0
        %857 = vmatprep.mubr.f32.mxu0 0.0
        %858 = vmatmul.mubr.f32.gmra.mrb[0].mxu0 %v791
        %v859 = vpop.f32.mrb[0].mxu0
        %v860 = vadd.f32 0.0, %v859
        %v861 = vpop.f32.mrb[0].mxu0
        %862 = vdwg.mxu0
        %v863 = vmul.f32 %v860, 0.35355338
        %v864 = vmax.f32 %v620, %v701
        %v865 = vmax.f32 %v864, %v782
        %v866 = vmax.f32 %v865, %v863
        %v867 = vsub.f32 %v620, %v866
        %v868 = vmul.f32 %v867, 1.442695
        %v869 = vpow.pop %v868
        %v870 = vsub.f32 %v701, %v866
        %v871 = vmul.f32 %v870, 1.442695
        %v872 = vpow.pop %v871
        %v873 = vsub.f32 %v782, %v866
        %v874 = vmul.f32 %v873, 1.442695
        %v875 = vpow.pop %v874
        %v876 = vsub.f32 %v863, %v866
        %v877 = vmul.f32 %v876, 1.442695
        %v878 = vpow.pop %v877
        %v879 = vadd.f32 %v869, %v872
        %v880 = vadd.f32 %v879, %v875
        %v881 = vadd.f32 %v880, %v878
        %v882 = vrcp.pop %v881
        %v883 = vmul.f32 1.0, %v882
        %v884 = vmul.f32 %v869, %v883
        %vm885 = vcmask 31744
        %v887 = vsel %vm885, %v884, 0
        %vm889 = vcmask 1043456
        %v891 = vsel %vm889, %v526, 0
        %893 = vmatprep.subr.mxu0 0.0
        %894 = vmatpush1.msra.mxu0 %v891
        %895 = vmatprep.subr.mxu0 0.0
        %896 = vmatpush1.msra.mxu0 0.0
        %897 = vmatprep.subr.mxu0 0.0
        %898 = vmatpush1.msra.mxu0 0.0
        %899 = vmatprep.subr.mxu0 0.0
        %900 = vmatpush1.msra.mxu0 0.0
        %901 = vmatprep.subr.mxu0 0.0
        %902 = vmatpush1.msra.mxu0 0.0
        %903 = vmatprep.subr.mxu0 0.0
        %904 = vmatpush1.msra.mxu0 0.0
        %905 = vmatprep.subr.mxu0 0.0
        %906 = vmatpush1.msra.mxu0 0.0
        %907 = vmatprep.subr.mxu0 0.0
        %908 = vmatpush1.msra.mxu0 0.0
        %909 = vmatprep.subr.mxu0 0.0
        %910 = vmatpush1.msra.mxu0 0.0
        %911 = vmatprep.subr.mxu0 0.0
        %912 = vmatpush1.msra.mxu0 0.0
        %913 = vmatprep.subr.mxu0 0.0
        %914 = vmatpush1.msra.mxu0 0.0
        %915 = vmatprep.subr.mxu0 0.0
        %916 = vmatpush1.msra.mxu0 0.0
        %917 = vmatprep.subr.mxu0 0.0
        %918 = vmatpush1.msra.mxu0 0.0
        %919 = vmatprep.subr.mxu0 0.0
        %920 = vmatpush1.msra.mxu0 0.0
        %921 = vmatprep.subr.mxu0 0.0
        %922 = vmatpush1.msra.mxu0 0.0
        %923 = vmatprep.subr.mxu0 0.0
        %924 = vmatpush1.msra.mxu0 0.0
        %925 = vmatprep.subr.mxu0 0.0
        %926 = vmatpush1.msra.mxu0 0.0
        %927 = vmatprep.subr.mxu0 0.0
        %928 = vmatpush1.msra.mxu0 0.0
        %929 = vmatprep.subr.mxu0 0.0
        %930 = vmatpush1.msra.mxu0 0.0
        %931 = vmatprep.subr.mxu0 0.0
        %932 = vmatpush1.msra.mxu0 0.0
        %933 = vmatprep.subr.mxu0 0.0
        %934 = vmatpush1.msra.mxu0 0.0
        %935 = vmatprep.subr.mxu0 0.0
        %936 = vmatpush1.msra.mxu0 0.0
        %937 = vmatprep.subr.mxu0 0.0
        %938 = vmatpush1.msra.mxu0 0.0
        %939 = vmatprep.subr.mxu0 0.0
        %940 = vmatpush1.msra.mxu0 0.0
        %941 = vmatprep.subr.mxu0 0.0
        %942 = vmatpush1.msra.mxu0 0.0
        %943 = vmatprep.subr.mxu0 0.0
        %944 = vmatpush1.msra.mxu0 0.0
        %945 = vmatprep.subr.mxu0 0.0
        %946 = vmatpush1.msra.mxu0 0.0
        %947 = vmatprep.subr.mxu0 0.0
        %948 = vmatpush1.msra.mxu0 0.0
        %949 = vmatprep.subr.mxu0 0.0
        %950 = vmatpush1.msra.mxu0 0.0
        %951 = vmatprep.subr.mxu0 0.0
        %952 = vmatpush1.msra.mxu0 0.0
        %953 = vmatprep.subr.mxu0 0.0
        %954 = vmatpush1.msra.mxu0 0.0
        %955 = vmatprep.subr.mxu0 0.0
        %956 = vmatpush1.msra.mxu0 0.0
        %957 = vmatprep.mubr.f32.mxu0 0.0
        %958 = vmatmul.mubr.f32.gmra.mrb[0].mxu0 %v887
        %v959 = vpop.f32.mrb[0].mxu0
        %v960 = vadd.f32 0.0, %v959
        %v961 = vpop.f32.mrb[0].mxu0
        %962 = vdwg.mxu0
        %963 = vrot.lane.b32.xlu0 %v519, 64
        %v964 = vpop.permute.xlu0 %963
        %v966 = vsel %vm540, %v964, %v784
        %v967 = vsel %vm542, %v966, %v703
        %v968 = vsel %vm544, %v967, %v622
        %v969 = vmul.f32 %v960, %v968
        %v970 = vadd.f32 %v969, 0.0
        %v971 = vmul.f32 %v872, %v883
        %v973 = vsel %vm885, %v971, 0
        %975 = vmatprep.subr.mxu0 0.0
        %976 = vmatpush1.msra.mxu0 %v891
        %977 = vmatprep.subr.mxu0 0.0
        %978 = vmatpush1.msra.mxu0 0.0
        %979 = vmatprep.subr.mxu0 0.0
        %980 = vmatpush1.msra.mxu0 0.0
        %981 = vmatprep.subr.mxu0 0.0
        %982 = vmatpush1.msra.mxu0 0.0
        %983 = vmatprep.subr.mxu0 0.0
        %984 = vmatpush1.msra.mxu0 0.0
        %985 = vmatprep.subr.mxu0 0.0
        %986 = vmatpush1.msra.mxu0 0.0
        %987 = vmatprep.subr.mxu0 0.0
        %988 = vmatpush1.msra.mxu0 0.0
        %989 = vmatprep.subr.mxu0 0.0
        %990 = vmatpush1.msra.mxu0 0.0
        %991 = vmatprep.subr.mxu0 0.0
        %992 = vmatpush1.msra.mxu0 0.0
        %993 = vmatprep.subr.mxu0 0.0
        %994 = vmatpush1.msra.mxu0 0.0
        %995 = vmatprep.subr.mxu0 0.0
        %996 = vmatpush1.msra.mxu0 0.0
        %997 = vmatprep.subr.mxu0 0.0
        %998 = vmatpush1.msra.mxu0 0.0
        %999 = vmatprep.subr.mxu0 0.0
        %1000 = vmatpush1.msra.mxu0 0.0
        %1001 = vmatprep.subr.mxu0 0.0
        %1002 = vmatpush1.msra.mxu0 0.0
        %1003 = vmatprep.subr.mxu0 0.0
        %1004 = vmatpush1.msra.mxu0 0.0
        %1005 = vmatprep.subr.mxu0 0.0
        %1006 = vmatpush1.msra.mxu0 0.0
        %1007 = vmatprep.subr.mxu0 0.0
        %1008 = vmatpush1.msra.mxu0 0.0
        %1009 = vmatprep.subr.mxu0 0.0
        %1010 = vmatpush1.msra.mxu0 0.0
        %1011 = vmatprep.subr.mxu0 0.0
        %1012 = vmatpush1.msra.mxu0 0.0
        %1013 = vmatprep.subr.mxu0 0.0
        %1014 = vmatpush1.msra.mxu0 0.0
        %1015 = vmatprep.subr.mxu0 0.0
        %1016 = vmatpush1.msra.mxu0 0.0
        %1017 = vmatprep.subr.mxu0 0.0
        %1018 = vmatpush1.msra.mxu0 0.0
        %1019 = vmatprep.subr.mxu0 0.0
        %1020 = vmatpush1.msra.mxu0 0.0
        %1021 = vmatprep.subr.mxu0 0.0
        %1022 = vmatpush1.msra.mxu0 0.0
        %1023 = vmatprep.subr.mxu0 0.0
        %1024 = vmatpush1.msra.mxu0 0.0
        %1025 = vmatprep.subr.mxu0 0.0
        %1026 = vmatpush1.msra.mxu0 0.0
        %1027 = vmatprep.subr.mxu0 0.0
        %1028 = vmatpush1.msra.mxu0 0.0
        %1029 = vmatprep.subr.mxu0 0.0
        %1030 = vmatpush1.msra.mxu0 0.0
        %1031 = vmatprep.subr.mxu0 0.0
        %1032 = vmatpush1.msra.mxu0 0.0
        %1033 = vmatprep.subr.mxu0 0.0
        %1034 = vmatpush1.msra.mxu0 0.0
        %1035 = vmatprep.subr.mxu0 0.0
        %1036 = vmatpush1.msra.mxu0 0.0
        %1037 = vmatprep.subr.mxu0 0.0
        %1038 = vmatpush1.msra.mxu0 0.0
        %1039 = vmatprep.mubr.f32.mxu0 0.0
        %1040 = vmatmul.mubr.f32.gmra.mrb[0].mxu0 %v973
        %v1041 = vpop.f32.mrb[0].mxu0
        %v1042 = vadd.f32 0.0, %v1041
        %v1043 = vpop.f32.mrb[0].mxu0
        %1044 = vdwg.mxu0
        %1045 = vrot.lane.b32.xlu0 %v519, 56
        %v1046 = vpop.permute.xlu0 %1045
        %v1048 = vsel %vm540, %v1046, %v964
        %v1049 = vsel %vm542, %v1048, %v784
        %v1050 = vsel %vm544, %v1049, %v703
        %v1051 = vmul.f32 %v1042, %v1050
        %v1052 = vadd.f32 %v970, %v1051
        %v1053 = vmul.f32 %v875, %v883
        %v1055 = vsel %vm885, %v1053, 0
        %1057 = vmatprep.subr.mxu0 0.0
        %1058 = vmatpush1.msra.mxu0 %v891
        %1059 = vmatprep.subr.mxu0 0.0
        %1060 = vmatpush1.msra.mxu0 0.0
        %1061 = vmatprep.subr.mxu0 0.0
        %1062 = vmatpush1.msra.mxu0 0.0
        %1063 = vmatprep.subr.mxu0 0.0
        %1064 = vmatpush1.msra.mxu0 0.0
        %1065 = vmatprep.subr.mxu0 0.0
        %1066 = vmatpush1.msra.mxu0 0.0
        %1067 = vmatprep.subr.mxu0 0.0
        %1068 = vmatpush1.msra.mxu0 0.0
        %1069 = vmatprep.subr.mxu0 0.0
        %1070 = vmatpush1.msra.mxu0 0.0
        %1071 = vmatprep.subr.mxu0 0.0
        %1072 = vmatpush1.msra.mxu0 0.0
        %1073 = vmatprep.subr.mxu0 0.0
        %1074 = vmatpush1.msra.mxu0 0.0
        %1075 = vmatprep.subr.mxu0 0.0
        %1076 = vmatpush1.msra.mxu0 0.0
        %1077 = vmatprep.subr.mxu0 0.0
        %1078 = vmatpush1.msra.mxu0 0.0
        %1079 = vmatprep.subr.mxu0 0.0
        %1080 = vmatpush1.msra.mxu0 0.0
        %1081 = vmatprep.subr.mxu0 0.0
        %1082 = vmatpush1.msra.mxu0 0.0
        %1083 = vmatprep.subr.mxu0 0.0
        %1084 = vmatpush1.msra.mxu0 0.0
        %1085 = vmatprep.subr.mxu0 0.0
        %1086 = vmatpush1.msra.mxu0 0.0
        %1087 = vmatprep.subr.mxu0 0.0
        %1088 = vmatpush1.msra.mxu0 0.0
        %1089 = vmatprep.subr.mxu0 0.0
        %1090 = vmatpush1.msra.mxu0 0.0
        %1091 = vmatprep.subr.mxu0 0.0
        %1092 = vmatpush1.msra.mxu0 0.0
        %1093 = vmatprep.subr.mxu0 0.0
        %1094 = vmatpush1.msra.mxu0 0.0
        %1095 = vmatprep.subr.mxu0 0.0
        %1096 = vmatpush1.msra.mxu0 0.0
        %1097 = vmatprep.subr.mxu0 0.0
        %1098 = vmatpush1.msra.mxu0 0.0
        %1099 = vmatprep.subr.mxu0 0.0
        %1100 = vmatpush1.msra.mxu0 0.0
        %1101 = vmatprep.subr.mxu0 0.0
        %1102 = vmatpush1.msra.mxu0 0.0
        %1103 = vmatprep.subr.mxu0 0.0
        %1104 = vmatpush1.msra.mxu0 0.0
        %1105 = vmatprep.subr.mxu0 0.0
        %1106 = vmatpush1.msra.mxu0 0.0
        %1107 = vmatprep.subr.mxu0 0.0
        %1108 = vmatpush1.msra.mxu0 0.0
        %1109 = vmatprep.subr.mxu0 0.0
        %1110 = vmatpush1.msra.mxu0 0.0
        %1111 = vmatprep.subr.mxu0 0.0
        %1112 = vmatpush1.msra.mxu0 0.0
        %1113 = vmatprep.subr.mxu0 0.0
        %1114 = vmatpush1.msra.mxu0 0.0
        %1115 = vmatprep.subr.mxu0 0.0
        %1116 = vmatpush1.msra.mxu0 0.0
        %1117 = vmatprep.subr.mxu0 0.0
        %1118 = vmatpush1.msra.mxu0 0.0
        %1119 = vmatprep.subr.mxu0 0.0
        %1120 = vmatpush1.msra.mxu0 0.0
        %1121 = vmatprep.mubr.f32.mxu0 0.0
        %1122 = vmatmul.mubr.f32.gmra.mrb[0].mxu0 %v1055
        %v1123 = vpop.f32.mrb[0].mxu0
        %v1124 = vadd.f32 0.0, %v1123
        %v1125 = vpop.f32.mrb[0].mxu0
        %1126 = vdwg.mxu0
        %1127 = vrot.lane.b32.xlu0 %v519, 48
        %v1128 = vpop.permute.xlu0 %1127
        %v1130 = vsel %vm540, %v1128, %v1046
        %v1131 = vsel %vm542, %v1130, %v964
        %v1132 = vsel %vm544, %v1131, %v784
        %v1133 = vmul.f32 %v1124, %v1132
        %v1134 = vadd.f32 %v1052, %v1133
        %v1135 = vmul.f32 %v878, %v883
        %v1137 = vsel %vm885, %v1135, 0
        %1139 = vmatprep.subr.mxu0 0.0
        %1140 = vmatpush1.msra.mxu0 %v891
        %1141 = vmatprep.subr.mxu0 0.0
        %1142 = vmatpush1.msra.mxu0 0.0
        %1143 = vmatprep.subr.mxu0 0.0
        %1144 = vmatpush1.msra.mxu0 0.0
        %1145 = vmatprep.subr.mxu0 0.0
        %1146 = vmatpush1.msra.mxu0 0.0
        %1147 = vmatprep.subr.mxu0 0.0
        %1148 = vmatpush1.msra.mxu0 0.0
        %1149 = vmatprep.subr.mxu0 0.0
        %1150 = vmatpush1.msra.mxu0 0.0
        %1151 = vmatprep.subr.mxu0 0.0
        %1152 = vmatpush1.msra.mxu0 0.0
        %1153 = vmatprep.subr.mxu0 0.0
        %1154 = vmatpush1.msra.mxu0 0.0
        %1155 = vmatprep.subr.mxu0 0.0
        %1156 = vmatpush1.msra.mxu0 0.0
        %1157 = vmatprep.subr.mxu0 0.0
        %1158 = vmatpush1.msra.mxu0 0.0
        %1159 = vmatprep.subr.mxu0 0.0
        %1160 = vmatpush1.msra.mxu0 0.0
        %1161 = vmatprep.subr.mxu0 0.0
        %1162 = vmatpush1.msra.mxu0 0.0
        %1163 = vmatprep.subr.mxu0 0.0
        %1164 = vmatpush1.msra.mxu0 0.0
        %1165 = vmatprep.subr.mxu0 0.0
        %1166 = vmatpush1.msra.mxu0 0.0
        %1167 = vmatprep.subr.mxu0 0.0
        %1168 = vmatpush1.msra.mxu0 0.0
        %1169 = vmatprep.subr.mxu0 0.0
        %1170 = vmatpush1.msra.mxu0 0.0
        %1171 = vmatprep.subr.mxu0 0.0
        %1172 = vmatpush1.msra.mxu0 0.0
        %1173 = vmatprep.subr.mxu0 0.0
        %1174 = vmatpush1.msra.mxu0 0.0
        %1175 = vmatprep.subr.mxu0 0.0
        %1176 = vmatpush1.msra.mxu0 0.0
        %1177 = vmatprep.subr.mxu0 0.0
        %1178 = vmatpush1.msra.mxu0 0.0
        %1179 = vmatprep.subr.mxu0 0.0
        %1180 = vmatpush1.msra.mxu0 0.0
        %1181 = vmatprep.subr.mxu0 0.0
        %1182 = vmatpush1.msra.mxu0 0.0
        %1183 = vmatprep.subr.mxu0 0.0
        %1184 = vmatpush1.msra.mxu0 0.0
        %1185 = vmatprep.subr.mxu0 0.0
        %1186 = vmatpush1.msra.mxu0 0.0
        %1187 = vmatprep.subr.mxu0 0.0
        %1188 = vmatpush1.msra.mxu0 0.0
        %1189 = vmatprep.subr.mxu0 0.0
        %1190 = vmatpush1.msra.mxu0 0.0
        %1191 = vmatprep.subr.mxu0 0.0
        %1192 = vmatpush1.msra.mxu0 0.0
        %1193 = vmatprep.subr.mxu0 0.0
        %1194 = vmatpush1.msra.mxu0 0.0
        %1195 = vmatprep.subr.mxu0 0.0
        %1196 = vmatpush1.msra.mxu0 0.0
        %1197 = vmatprep.subr.mxu0 0.0
        %1198 = vmatpush1.msra.mxu0 0.0
        %1199 = vmatprep.subr.mxu0 0.0
        %1200 = vmatpush1.msra.mxu0 0.0
        %1201 = vmatprep.subr.mxu0 0.0
        %1202 = vmatpush1.msra.mxu0 0.0
        %1203 = vmatprep.mubr.f32.mxu0 0.0
        %1204 = vmatmul.mubr.f32.gmra.mrb[0].mxu0 %v1137
        %v1205 = vpop.f32.mrb[0].mxu0
        %v1206 = vadd.f32 0.0, %v1205
        %v1207 = vpop.f32.mrb[0].mxu0
        %1208 = vdwg.mxu0
        %1209 = vrot.lane.b32.xlu0 %v519, 40
        %v1210 = vpop.permute.xlu0 %1209
        %v1212 = vsel %vm540, %v1210, %v1128
        %v1213 = vsel %vm542, %v1212, %v1046
        %v1214 = vsel %vm544, %v1213, %v964
        %v1215 = vmul.f32 %v1206, %v1214
        %v1216 = vadd.f32 %v1134, %v1215
        %v1218 = vrot.slane %v1216, 1
        %1219 = vrot.lane.b32.xlu0 %v1218, 8
        %v1220 = vpop.permute.xlu0 %1219
        %v1222 = vrot.slane %v1216, 2
        %1223 = vrot.lane.b32.xlu0 %v1222, 16
        %v1224 = vpop.permute.xlu0 %1223
        %v1226 = vrot.slane %v1216, 3
        %1227 = vrot.lane.b32.xlu0 %v1226, 24
        %v1228 = vpop.permute.xlu0 %1227
        %v1230 = vsel %vm540, %v1216, %v1220
        %v1231 = vsel %vm542, %v1230, %v1224
        %v1232 = vsel %vm544, %v1231, %v1228
        %1233 = vrot.lane.b32.xlu0 %v1216, 120
        %v1234 = vpop.permute.xlu0 %1233
        %1237 = vrot.lane.b32.xlu0 %v1222, 8
        %v1238 = vpop.permute.xlu0 %1237
        %1240 = vrot.lane.b32.xlu0 %v1226, 16
        %v1241 = vpop.permute.xlu0 %1240
        %v1243 = vsel %vm540, %v1234, %v1218
        %v1244 = vsel %vm542, %v1243, %v1238
        %v1245 = vsel %vm544, %v1244, %v1241
        %1246 = vrot.lane.b32.xlu0 %v1216, 112
        %v1247 = vpop.permute.xlu0 %1246
        %1249 = vrot.lane.b32.xlu0 %v1218, 120
        %v1250 = vpop.permute.xlu0 %1249
        %1253 = vrot.lane.b32.xlu0 %v1226, 8
        %v1254 = vpop.permute.xlu0 %1253
        %v1256 = vsel %vm540, %v1247, %v1250
        %v1257 = vsel %vm542, %v1256, %v1222
        %v1258 = vsel %vm544, %v1257, %v1254
        %1259 = vrot.lane.b32.xlu0 %v1216, 104
        %v1260 = vpop.permute.xlu0 %1259
        %1262 = vrot.lane.b32.xlu0 %v1218, 112
        %v1263 = vpop.permute.xlu0 %1262
        %1265 = vrot.lane.b32.xlu0 %v1222, 120
        %v1266 = vpop.permute.xlu0 %1265
        %v1269 = vsel %vm540, %v1260, %v1263
        %v1270 = vsel %vm542, %v1269, %v1266
        %v1271 = vsel %vm544, %v1270, %v1226
        %v1273 = vrot.slane %v1232, 3
        %v1276 = vrot.slane %v1245, 6
        %v1278 = vrot.slane %v1245, 1
        %v1281 = vrot.slane %v1258, 4
        %v1283 = vrot.slane %v1258, 7
        %v1286 = vrot.slane %v1271, 2
        %v1288 = vrot.slane %v1271, 5
        %vm1290 = vcmask 1040384
        %v1291 = vsel %vm1290, %v1232, %v1273
        %vm1292 = vcmask 1041408
        %v1293 = vsel %vm1292, %v1291, %v1276
        %vm1294 = vcmask 1042432
        %v1295 = vsel %vm1294, %v1293, %v1278
        %v1296 = vsel %vm889, %v1295, %v1281
        %vm1297 = vcmask 1044480
        %v1298 = vsel %vm1297, %v1296, %v1283
        %vm1299 = vcmask 1045504
        %v1300 = vsel %vm1299, %v1298, %v1286
        %vm1301 = vcmask 1046528
        %v1302 = vsel %vm1301, %v1300, %v1288
        %v1303 = vld [vmem:[%s3] sm:$0xff]
        %v1304 = vld [vmem:[%s3 + $0x8] sm:$0xff]
        %v1305 = vld [vmem:[%s3 + $0x10] sm:$0xff]
        %v1306 = vld [vmem:[%s3 + $0x18] sm:$0xff]
        %v1307 = vld [vmem:[%s4] sm:$0x1]
        %v1309 = vlaneseq
        %v1310 = vshrl.u32 %v1309, 7
        %v1311 = vsub.s32 0, %v1310
        %v1312 = vrot.slane %v1307, %v1311
        %v1315 = vsel %vm448, %v1302, 0
        %1317 = vmatprep.subr.mxu0 0.0
        %1318 = vmatpush1.msra.mxu0 %v1303
        %1319 = vmatprep.subr.mxu0 0.0
        %1320 = vmatpush1.msra.mxu0 %v1304
        %1321 = vmatprep.subr.mxu0 0.0
        %1322 = vmatpush1.msra.mxu0 %v1305
        %1323 = vmatprep.subr.mxu0 0.0
        %1324 = vmatpush1.msra.mxu0 %v1306
        %1325 = vmatprep.subr.mxu0 0.0
        %1326 = vmatpush1.msra.mxu0 0.0
        %1327 = vmatprep.subr.mxu0 0.0
        %1328 = vmatpush1.msra.mxu0 0.0
        %1329 = vmatprep.subr.mxu0 0.0
        %1330 = vmatpush1.msra.mxu0 0.0
        %1331 = vmatprep.subr.mxu0 0.0
        %1332 = vmatpush1.msra.mxu0 0.0
        %1333 = vmatprep.subr.mxu0 0.0
        %1334 = vmatpush1.msra.mxu0 0.0
        %1335 = vmatprep.subr.mxu0 0.0
        %1336 = vmatpush1.msra.mxu0 0.0
        %1337 = vmatprep.subr.mxu0 0.0
        %1338 = vmatpush1.msra.mxu0 0.0
        %1339 = vmatprep.subr.mxu0 0.0
        %1340 = vmatpush1.msra.mxu0 0.0
        %1341 = vmatprep.subr.mxu0 0.0
        %1342 = vmatpush1.msra.mxu0 0.0
        %1343 = vmatprep.subr.mxu0 0.0
        %1344 = vmatpush1.msra.mxu0 0.0
        %1345 = vmatprep.subr.mxu0 0.0
        %1346 = vmatpush1.msra.mxu0 0.0
        %1347 = vmatprep.subr.mxu0 0.0
        %1348 = vmatpush1.msra.mxu0 0.0
        %1349 = vmatprep.subr.mxu0 0.0
        %1350 = vmatpush1.msra.mxu0 0.0
        %1351 = vmatprep.subr.mxu0 0.0
        %1352 = vmatpush1.msra.mxu0 0.0
        %1353 = vmatprep.subr.mxu0 0.0
        %1354 = vmatpush1.msra.mxu0 0.0
        %1355 = vmatprep.subr.mxu0 0.0
        %1356 = vmatpush1.msra.mxu0 0.0
        %1357 = vmatprep.subr.mxu0 0.0
        %1358 = vmatpush1.msra.mxu0 0.0
        %1359 = vmatprep.subr.mxu0 0.0
        %1360 = vmatpush1.msra.mxu0 0.0
        %1361 = vmatprep.subr.mxu0 0.0
        %1362 = vmatpush1.msra.mxu0 0.0
        %1363 = vmatprep.subr.mxu0 0.0
        %1364 = vmatpush1.msra.mxu0 0.0
        %1365 = vmatprep.subr.mxu0 0.0
        %1366 = vmatpush1.msra.mxu0 0.0
        %1367 = vmatprep.subr.mxu0 0.0
        %1368 = vmatpush1.msra.mxu0 0.0
        %1369 = vmatprep.subr.mxu0 0.0
        %1370 = vmatpush1.msra.mxu0 0.0
        %1371 = vmatprep.subr.mxu0 0.0
        %1372 = vmatpush1.msra.mxu0 0.0
        %1373 = vmatprep.subr.mxu0 0.0
        %1374 = vmatpush1.msra.mxu0 0.0
        %1375 = vmatprep.subr.mxu0 0.0
        %1376 = vmatpush1.msra.mxu0 0.0
        %1377 = vmatprep.subr.mxu0 0.0
        %1378 = vmatpush1.msra.mxu0 0.0
        %1379 = vmatprep.subr.mxu0 0.0
        %1380 = vmatpush1.msra.mxu0 0.0
        %1381 = vmatprep.mubr.f32.mxu0 0.0
        %1382 = vmatmul.mubr.f32.gmra.mrb[0].mxu0 %v1315
        %v1383 = vpop.f32.mrb[0].mxu0
        %v1384 = vadd.f32 %v1312, %v1383
        %v1385 = vpop.f32.mrb[0].mxu0
        %1386 = vdwg.mxu0
        %v1387 = vadd.f32 %v436, %v1384
        %v1388 = vsel %vm448, %v1387, 0.0
        %1389 = vadd.xlane.f32.xlu0 %v1388
        %v1390 = vpop.xlane.xlu0 %1389
        %v1391 = vrcp.pop 32.0
        %v1392 = vmul.f32 %v1390, %v1391
        %v1393 = vsub.f32 %v1387, %v1392
        %v1394 = vmul.f32 %v1393, %v1393
        %v1395 = vsel %vm448, %v1394, 0.0
        %1396 = vadd.xlane.f32.xlu0 %v1395
        %v1397 = vpop.xlane.xlu0 %1396
        %v1398 = vmul.f32 %v1397, %v1391
        %v1399 = vadd.f32 %v1398, 1e-05
        %v1400 = vrsqrt.pop %v1399
        %v1401 = vmul.f32 %v1393, %v1400
        %v1402 = vld [vmem:[%s5] sm:$0x1]
        %v1404 = vlaneseq
        %v1405 = vshrl.u32 %v1404, 7
        %v1406 = vsub.s32 0, %v1405
        %v1407 = vrot.slane %v1402, %v1406
        %v1409 = vmul.f32 %v1401, %v1407
        %v1410 = vld [vmem:[%s6] sm:$0x1]
        %v1412 = vlaneseq
        %v1413 = vshrl.u32 %v1412, 7
        %v1414 = vsub.s32 0, %v1413
        %v1415 = vrot.slane %v1410, %v1414
        %v1417 = vadd.f32 %v1409, %v1415
        %v1418 = vld [vmem:[%s7] sm:$0xff]
        %v1419 = vld [vmem:[%s7 + $0x8] sm:$0xff]
        %v1420 = vld [vmem:[%s7 + $0x10] sm:$0xff]
        %v1421 = vld [vmem:[%s7 + $0x18] sm:$0xff]
        %v1422 = vld [vmem:[%s8] sm:$0x1]
        %v1424 = vlaneseq
        %v1425 = vshrl.u32 %v1424, 7
        %v1426 = vsub.s32 0, %v1425
        %v1427 = vrot.slane %v1422, %v1426
        %v1430 = vsel %vm448, %v1417, 0
        %1432 = vmatprep.subr.mxu0 0.0
        %1433 = vmatpush1.msra.mxu0 %v1418
        %1434 = vmatprep.subr.mxu0 0.0
        %1435 = vmatpush1.msra.mxu0 %v1419
        %1436 = vmatprep.subr.mxu0 0.0
        %1437 = vmatpush1.msra.mxu0 %v1420
        %1438 = vmatprep.subr.mxu0 0.0
        %1439 = vmatpush1.msra.mxu0 %v1421
        %1440 = vmatprep.subr.mxu0 0.0
        %1441 = vmatpush1.msra.mxu0 0.0
        %1442 = vmatprep.subr.mxu0 0.0
        %1443 = vmatpush1.msra.mxu0 0.0
        %1444 = vmatprep.subr.mxu0 0.0
        %1445 = vmatpush1.msra.mxu0 0.0
        %1446 = vmatprep.subr.mxu0 0.0
        %1447 = vmatpush1.msra.mxu0 0.0
        %1448 = vmatprep.subr.mxu0 0.0
        %1449 = vmatpush1.msra.mxu0 0.0
        %1450 = vmatprep.subr.mxu0 0.0
        %1451 = vmatpush1.msra.mxu0 0.0
        %1452 = vmatprep.subr.mxu0 0.0
        %1453 = vmatpush1.msra.mxu0 0.0
        %1454 = vmatprep.subr.mxu0 0.0
        %1455 = vmatpush1.msra.mxu0 0.0
        %1456 = vmatprep.subr.mxu0 0.0
        %1457 = vmatpush1.msra.mxu0 0.0
        %1458 = vmatprep.subr.mxu0 0.0
        %1459 = vmatpush1.msra.mxu0 0.0
        %1460 = vmatprep.subr.mxu0 0.0
        %1461 = vmatpush1.msra.mxu0 0.0
        %1462 = vmatprep.subr.mxu0 0.0
        %1463 = vmatpush1.msra.mxu0 0.0
        %1464 = vmatprep.subr.mxu0 0.0
        %1465 = vmatpush1.msra.mxu0 0.0
        %1466 = vmatprep.subr.mxu0 0.0
        %1467 = vmatpush1.msra.mxu0 0.0
        %1468 = vmatprep.subr.mxu0 0.0
        %1469 = vmatpush1.msra.mxu0 0.0
        %1470 = vmatprep.subr.mxu0 0.0
        %1471 = vmatpush1.msra.mxu0 0.0
        %1472 = vmatprep.subr.mxu0 0.0
        %1473 = vmatpush1.msra.mxu0 0.0
        %1474 = vmatprep.subr.mxu0 0.0
        %1475 = vmatpush1.msra.mxu0 0.0
        %1476 = vmatprep.subr.mxu0 0.0
        %1477 = vmatpush1.msra.mxu0 0.0
        %1478 = vmatprep.subr.mxu0 0.0
        %1479 = vmatpush1.msra.mxu0 0.0
        %1480 = vmatprep.subr.mxu0 0.0
        %1481 = vmatpush1.msra.mxu0 0.0
        %1482 = vmatprep.subr.mxu0 0.0
        %1483 = vmatpush1.msra.mxu0 0.0
        %1484 = vmatprep.subr.mxu0 0.0
        %1485 = vmatpush1.msra.mxu0 0.0
        %1486 = vmatprep.subr.mxu0 0.0
        %1487 = vmatpush1.msra.mxu0 0.0
        %1488 = vmatprep.subr.mxu0 0.0
        %1489 = vmatpush1.msra.mxu0 0.0
        %1490 = vmatprep.subr.mxu0 0.0
        %1491 = vmatpush1.msra.mxu0 0.0
        %1492 = vmatprep.subr.mxu0 0.0
        %1493 = vmatpush1.msra.mxu0 0.0
        %1494 = vmatprep.subr.mxu0 0.0
        %1495 = vmatpush1.msra.mxu0 0.0
        %1496 = vmatprep.mubr.f32.mxu0 0.0
        %1497 = vmatmul.mubr.f32.gmra.mrb[0].mxu0 %v1430
        %v1498 = vpop.f32.mrb[0].mxu0
        %v1499 = vadd.f32 %v1427, %v1498
        %v1500 = vpop.f32.mrb[0].mxu0
        %1501 = vdwg.mxu0
        %v1502 = vmax.f32 %v1499, 0.0
        %v1503 = vld [vmem:[%s9] sm:$0xff]
        %v1504 = vld [vmem:[%s9 + $0x8] sm:$0xff]
        %v1505 = vld [vmem:[%s9 + $0x10] sm:$0xff]
        %v1506 = vld [vmem:[%s9 + $0x18] sm:$0xff]
        %v1507 = vld [vmem:[%s9 + $0x20] sm:$0xff]
        %v1508 = vld [vmem:[%s9 + $0x28] sm:$0xff]
        %v1509 = vld [vmem:[%s9 + $0x30] sm:$0xff]
        %v1510 = vld [vmem:[%s9 + $0x38] sm:$0xff]
        %v1511 = vld [vmem:[%s10] sm:$0x1]
        %v1513 = vlaneseq
        %v1514 = vshrl.u32 %v1513, 7
        %v1515 = vsub.s32 0, %v1514
        %v1516 = vrot.slane %v1511, %v1515
        %vm1518 = vcmask 523264
        %v1520 = vsel %vm1518, %v1502, 0
        %1522 = vmatprep.subr.mxu0 0.0
        %1523 = vmatpush1.msra.mxu0 %v1503
        %1524 = vmatprep.subr.mxu0 0.0
        %1525 = vmatpush1.msra.mxu0 %v1504
        %1526 = vmatprep.subr.mxu0 0.0
        %1527 = vmatpush1.msra.mxu0 %v1505
        %1528 = vmatprep.subr.mxu0 0.0
        %1529 = vmatpush1.msra.mxu0 %v1506
        %1530 = vmatprep.subr.mxu0 0.0
        %1531 = vmatpush1.msra.mxu0 %v1507
        %1532 = vmatprep.subr.mxu0 0.0
        %1533 = vmatpush1.msra.mxu0 %v1508
        %1534 = vmatprep.subr.mxu0 0.0
        %1535 = vmatpush1.msra.mxu0 %v1509
        %1536 = vmatprep.subr.mxu0 0.0
        %1537 = vmatpush1.msra.mxu0 %v1510
        %1538 = vmatprep.subr.mxu0 0.0
        %1539 = vmatpush1.msra.mxu0 0.0
        %1540 = vmatprep.subr.mxu0 0.0
        %1541 = vmatpush1.msra.mxu0 0.0
        %1542 = vmatprep.subr.mxu0 0.0
        %1543 = vmatpush1.msra.mxu0 0.0
        %1544 = vmatprep.subr.mxu0 0.0
        %1545 = vmatpush1.msra.mxu0 0.0
        %1546 = vmatprep.subr.mxu0 0.0
        %1547 = vmatpush1.msra.mxu0 0.0
        %1548 = vmatprep.subr.mxu0 0.0
        %1549 = vmatpush1.msra.mxu0 0.0
        %1550 = vmatprep.subr.mxu0 0.0
        %1551 = vmatpush1.msra.mxu0 0.0
        %1552 = vmatprep.subr.mxu0 0.0
        %1553 = vmatpush1.msra.mxu0 0.0
        %1554 = vmatprep.subr.mxu0 0.0
        %1555 = vmatpush1.msra.mxu0 0.0
        %1556 = vmatprep.subr.mxu0 0.0
        %1557 = vmatpush1.msra.mxu0 0.0
        %1558 = vmatprep.subr.mxu0 0.0
        %1559 = vmatpush1.msra.mxu0 0.0
        %1560 = vmatprep.subr.mxu0 0.0
        %1561 = vmatpush1.msra.mxu0 0.0
        %1562 = vmatprep.subr.mxu0 0.0
        %1563 = vmatpush1.msra.mxu0 0.0
        %1564 = vmatprep.subr.mxu0 0.0
        %1565 = vmatpush1.msra.mxu0 0.0
        %1566 = vmatprep.subr.mxu0 0.0
        %1567 = vmatpush1.msra.mxu0 0.0
        %1568 = vmatprep.subr.mxu0 0.0
        %1569 = vmatpush1.msra.mxu0 0.0
        %1570 = vmatprep.subr.mxu0 0.0
        %1571 = vmatpush1.msra.mxu0 0.0
        %1572 = vmatprep.subr.mxu0 0.0
        %1573 = vmatpush1.msra.mxu0 0.0
        %1574 = vmatprep.subr.mxu0 0.0
        %1575 = vmatpush1.msra.mxu0 0.0
        %1576 = vmatprep.subr.mxu0 0.0
        %1577 = vmatpush1.msra.mxu0 0.0
        %1578 = vmatprep.subr.mxu0 0.0
        %1579 = vmatpush1.msra.mxu0 0.0
        %1580 = vmatprep.subr.mxu0 0.0
        %1581 = vmatpush1.msra.mxu0 0.0
        %1582 = vmatprep.subr.mxu0 0.0
        %1583 = vmatpush1.msra.mxu0 0.0
        %1584 = vmatprep.subr.mxu0 0.0
        %1585 = vmatpush1.msra.mxu0 0.0
        %1586 = vmatprep.mubr.f32.mxu0 0.0
        %1587 = vmatmul.mubr.f32.gmra.mrb[0].mxu0 %v1520
        %v1588 = vpop.f32.mrb[0].mxu0
        %v1589 = vadd.f32 %v1516, %v1588
        %v1590 = vpop.f32.mrb[0].mxu0
        %1591 = vdwg.mxu0
        %v1592 = vadd.f32 %v1417, %v1589
        %v1593 = vsel %vm448, %v1592, 0.0
        %1594 = vadd.xlane.f32.xlu0 %v1593
        %v1595 = vpop.xlane.xlu0 %1594
        %v1596 = vmul.f32 %v1595, %v1391
        %v1597 = vsub.f32 %v1592, %v1596
        %v1598 = vmul.f32 %v1597, %v1597
        %v1599 = vsel %vm448, %v1598, 0.0
        %1600 = vadd.xlane.f32.xlu0 %v1599
        %v1601 = vpop.xlane.xlu0 %1600
        %v1602 = vmul.f32 %v1601, %v1391
        %v1603 = vadd.f32 %v1602, 1e-05
        %v1604 = vrsqrt.pop %v1603
        %v1605 = vmul.f32 %v1597, %v1604
        %v1606 = vmul.f32 %v1605, %v1407
        %v1607 = vadd.f32 %v1606, %v1415
        %1608 = vst.msk [vmem:[%s431] sm:$0xff] %vm448, %v1607
        %s1609 = sand.u32 %s313, 1
        %s1610 = scalar_lea.sflag [#allocation3], %s1609
        %s1611 = sand.u32 %s313, 1
        %s1612 = smul.addr %s1611, 8
        %s1613 = scalar_lea.vmem [#allocation2], %s1612
        // Predicated region
        $region73: #{tpu_custom_call.1} parent=71 // pred_check
          %p1614 = pneg %p323
        $region74: #{tpu_custom_call.1} parent=71 // pred_check_branch
          %1616 = sbr.rel (%p1614) target = $region76
        $region75: #{tpu_custom_call.1} parent=71 // pred_region
          %s1618 = ssub.s32 128, 128
          %1619 = vsyncadd %s1610, %s1618
          %s1620 = smul.addr %s27, 128
          %s1621 = scalar_lea.hbm %s13, %s1620
          %s1623 = sshll.u32 %s1613, 4
          %s1624 = int_to_ptr.vmem [resolvable:$true] %s1623
          %1626 = dma.vmem_to_hbm [thread:$0]  %s1624, 128, %s1621, %s1610
        $region76: #{tpu_custom_call.1} parent=71 // pred_fallthru
          _
      $region72: #{tpu_custom_call.1} parent=5 // pred_fallthru
        _
      %p1627 = scmp.le.s32.totalorder 2, %s22
      // Predicated region
      $region77: #{tpu_custom_call.1} parent=5 // pred_check
        %p1628 = pneg %p1627
      $region78: #{tpu_custom_call.1} parent=5 // pred_check_branch
        %1630 = sbr.rel (%p1628) target = $region80
      $region79: #{tpu_custom_call.1} parent=5 // pred_region
        %s1631 = ssub.s32 %s22, 2
        // Predicated region
        $region81: #{tpu_custom_call.1} parent=79 // pred_check
          %p1632 = pneg %p329
        $region82: #{tpu_custom_call.1} parent=79 // pred_check_branch
          %1634 = sbr.rel (%p1632) target = $region84
        $region83: #{tpu_custom_call.1} parent=79 // pred_region
          %s1635 = sand.u32 %s314, 1
          %s1636 = scalar_lea.sflag [#allocation3], %s1635
          %s1637 = sand.u32 %s314, 1
          %s1638 = smul.addr %s1637, 8
          %s1639 = scalar_lea.vmem [#allocation2], %s1638
          %1640 = dma.done %s1636, 128
        $region84: #{tpu_custom_call.1} parent=79 // pred_fallthru
          _
      $region80: #{tpu_custom_call.1} parent=5 // pred_fallthru
        _
    $region6: #{tpu_custom_call.1} parent=1 // loop_footer
      %s26 = sadd.s32 1, %s22
    $region7: #{tpu_custom_call.1} parent=1 // loop_footer_branch
      %21 = sbr.rel target = $region3
    $region8: #{tpu_custom_call.1} parent=1 // loop_exit
      _
    %1641 = vsyncpa [#allocation3], 1
    %s1642 = scalar_lea.sflag [#allocation3], 1
    %1643 = vsyncpa %s1642, 1

// kernel: tpu_custom_call.1
$region0: #{tpu_custom_call.1}
  #allocation0 [shape = 'u32[]', space=smem, size = 0x4, offset = 0x4, fixed_abs, tag = 'smem constant byte address 0x4 - core index']
  #allocation1 [shape = 'u32[144,128]{1,0:T(1,128)}', space=vmem, size = 0x12000, scoped, tag = 'internal scratch']
  %s0 = inlined_call_operand.vmem [shape: f32[16,32], index: 0, kind: input, shape index: {}]
  %s1 = inlined_call_operand.vmem [shape: f32[32,96], index: 1, kind: input, shape index: {}]
  %s2 = inlined_call_operand.vmem [shape: f32[1,96], index: 2, kind: input, shape index: {}]
  %s3 = inlined_call_operand.vmem [shape: f32[32,32], index: 3, kind: input, shape index: {}]
  %s4 = inlined_call_operand.vmem [shape: f32[1,32], index: 4, kind: input, shape index: {}]
  %s5 = inlined_call_operand.vmem [shape: f32[1,32], index: 5, kind: input, shape index: {}]
  %s6 = inlined_call_operand.vmem [shape: f32[1,32], index: 6, kind: input, shape index: {}]
  %s7 = inlined_call_operand.vmem [shape: f32[32,64], index: 7, kind: input, shape index: {}]
  %s8 = inlined_call_operand.vmem [shape: f32[1,64], index: 8, kind: input, shape index: {}]
  %s9 = inlined_call_operand.vmem [shape: f32[64,32], index: 9, kind: input, shape index: {}]
  %s10 = inlined_call_operand.vmem [shape: f32[1,32], index: 10, kind: input, shape index: {}]
  %s11 = inlined_call_operand.vmem [shape: f32[32,4], index: 11, kind: input, shape index: {}]
  %s12 = inlined_call_operand.vmem [shape: f32[4,32], index: 12, kind: input, shape index: {}]
  %s13 = inlined_call_operand.hbm [shape: f32[16,32], index: 13, kind: output, shape index: {}]
  %s14 = sld [smem:[#allocation0]]
  $region85: #{tpu_custom_call.1} parent=0
    _
  %s16 = ssub.s32 1, %s14
  %s17 = scalar_select 0, %s16, %s14
  $region1: #{tpu_custom_call.1} parent=0
    #allocation2 [shape = 'u8[8192]{0}', space=vmem, size = 0x2000, scoped, tag = 'output window, operand 0']
    #allocation3 [shape = 's32[2]{0}', space=sflag, size = 0x8, scoped, tag = 'scoped memory for tpu_custom_call.1']
    %18 = vsyncpa [#allocation3], 0
    %s19 = scalar_lea.sflag [#allocation3], 1
    %20 = vsyncpa %s19, 0
    loop: start=0, step=1, limit=4
    $region2: #{tpu_custom_call.1} parent=1 // loop_pre_header
      _
    $region3: #{tpu_custom_call.1} parent=1 // loop_header
      %s22 = sphi 0, %s26
      %p23 = scmp.ge.s32.totalorder %s22, 4
      %s32 = sphi 0, %s34
      %s35 = sphi 0, %s32
      %s36 = sphi 0, %s35
      %s52 = sphi 0, %s36
      %s56 = sphi 0, %s56
      %s58 = sphi 0, %s56
      %s59 = sphi 0, %s58
      %s73 = sphi 0, %s59
      %s77 = sphi 0, %s77
      %s79 = sphi 0, %s77
      %s80 = sphi 0, %s79
      %s94 = sphi 0, %s80
      %s98 = sphi 0, %s98
      %s100 = sphi 0, %s98
      %s101 = sphi 0, %s100
      %s115 = sphi 0, %s101
      %s119 = sphi 0, %s119
      %s121 = sphi 0, %s119
      %s122 = sphi 0, %s121
      %s136 = sphi 0, %s122
      %s140 = sphi 0, %s140
      %s142 = sphi 0, %s140
      %s143 = sphi 0, %s142
      %s157 = sphi 0, %s143
      %s161 = sphi 0, %s161
      %s163 = sphi 0, %s161
      %s164 = sphi 0, %s163
      %s178 = sphi 0, %s164
      %s182 = sphi 0, %s182
      %s184 = sphi 0, %s182
      %s185 = sphi 0, %s184
      %s199 = sphi 0, %s185
      %s203 = sphi 0, %s203
      %s205 = sphi 0, %s203
      %s206 = sphi 0, %s205
      %s220 = sphi 0, %s206
      %s224 = sphi 0, %s224
      %s226 = sphi 0, %s224
      %s227 = sphi 0, %s226
      %s241 = sphi 0, %s227
      %s245 = sphi 0, %s245
      %s247 = sphi 0, %s245
      %s248 = sphi 0, %s247
      %s262 = sphi 0, %s248
      %s266 = sphi 0, %s266
      %s268 = sphi 0, %s266
      %s269 = sphi 0, %s268
      %s283 = sphi 0, %s269
      %s287 = sphi 0, %s287
      %s289 = sphi 0, %s287
      %s290 = sphi 0, %s289
      %s304 = sphi 0, %s290
      %s310 = sphi 0, %s312
      %s313 = sphi 0, %s310
      %s314 = sphi 0, %s313
      %s330 = sphi 0, %s314
    $region4: #{tpu_custom_call.1} parent=1 // loop_header_branch
      %25 = sbr.rel (%p23) target = $region8
    $region5: #{tpu_custom_call.1} parent=1 // loop_body
      %s27 = ssub.s32 %s22, 1
      %s28 = ssub.s32 %s22, 2
      %s29 = sadd.s32 %s22, 1
      %s30 = ssub.s32 %s22, %s29
      %p31 = scmp.eq.s32.totalorder %s30, 0
      %s33 = sadd.s32 %s32, 1
      %s34 = scalar_select %p31, %s32, %s33
      %p37 = pneg %p31
      %p38 = scmp.eq.s32.totalorder %s22, 1
      %p39 = por %p37, %p38
      %p40 = scmp.ne.s32.totalorder %s32, %s35
      %p41 = scmp.eq.s32.totalorder %s22, 0
      %p42 = por %p40, %p41
      %p43 = scmp.ne.s32.totalorder %s32, %s35
      %p44 = scmp.eq.s32.totalorder %s27, 1
      %p45 = por %p43, %p44
      %p46 = scmp.ne.s32.totalorder %s35, %s36
      %p47 = scmp.eq.s32.totalorder %s27, 0
      %p48 = por %p46, %p47
      %p49 = scmp.ne.s32.totalorder %s35, %s36
      %p50 = scmp.eq.s32.totalorder %s28, 1
      %p51 = por %p49, %p50
      %p53 = scmp.ne.s32.totalorder %s36, %s52
      %p54 = scmp.eq.s32.totalorder %s28, 0
      %p55 = por %p53, %p54
      %s57 = sadd.s32 %s56, 1
      %p60 = scmp.eq.s32.totalorder %s22, 1
      %p61 = scmp.ne.s32.totalorder %s56, %s58
      %p62 = scmp.eq.s32.totalorder %s22, 0
      %p63 = por %p61, %p62
      %p64 = scmp.ne.s32.totalorder %s56, %s58
      %p65 = scmp.eq.s32.totalorder %s27, 1
      %p66 = por %p64, %p65
      %p67 = scmp.ne.s32.totalorder %s58, %s59
      %p68 = scmp.eq.s32.totalorder %s27, 0
      %p69 = por %p67, %p68
      %p70 = scmp.ne.s32.totalorder %s58, %s59
      %p71 = scmp.eq.s32.totalorder %s28, 1
      %p72 = por %p70, %p71
      %p74 = scmp.ne.s32.totalorder %s59, %s73
      %p75 = scmp.eq.s32.totalorder %s28, 0
      %p76 = por %p74, %p75
      %s78 = sadd.s32 %s77, 1
      %p81 = scmp.eq.s32.totalorder %s22, 1
      %p82 = scmp.ne.s32.totalorder %s77, %s79
      %p83 = scmp.eq.s32.totalorder %s22, 0
      %p84 = por %p82, %p83
      %p85 = scmp.ne.s32.totalorder %s77, %s79
      %p86 = scmp.eq.s32.totalorder %s27, 1
      %p87 = por %p85, %p86
      %p88 = scmp.ne.s32.totalorder %s79, %s80
      %p89 = scmp.eq.s32.totalorder %s27, 0
      %p90 = por %p88, %p89
      %p91 = scmp.ne.s32.totalorder %s79, %s80
      %p92 = scmp.eq.s32.totalorder %s28, 1
      %p93 = por %p91, %p92
      %p95 = scmp.ne.s32.totalorder %s80, %s94
      %p96 = scmp.eq.s32.totalorder %s28, 0
      %p97 = por %p95, %p96
      %s99 = sadd.s32 %s98, 1
      %p102 = scmp.eq.s32.totalorder %s22, 1
      %p103 = scmp.ne.s32.totalorder %s98, %s100
      %p104 = scmp.eq.s32.totalorder %s22, 0
      %p105 = por %p103, %p104
      %p106 = scmp.ne.s32.totalorder %s98, %s100
      %p107 = scmp.eq.s32.totalorder %s27, 1
      %p108 = por %p106, %p107
      %p109 = scmp.ne.s32.totalorder %s100, %s101
      %p110 = scmp.eq.s32.totalorder %s27, 0
      %p111 = por %p109, %p110
      %p112 = scmp.ne.s32.totalorder %s100, %s101
      %p113 = scmp.eq.s32.totalorder %s28, 1
      %p114 = por %p112, %p113
      %p116 = scmp.ne.s32.totalorder %s101, %s115
      %p117 = scmp.eq.s32.totalorder %s28, 0
      %p118 = por %p116, %p117
      %s120 = sadd.s32 %s119, 1
      %p123 = scmp.eq.s32.totalorder %s22, 1
      %p124 = scmp.ne.s32.totalorder %s119, %s121
      %p125 = scmp.eq.s32.totalorder %s22, 0
      %p126 = por %p124, %p125
      %p127 = scmp.ne.s32.totalorder %s119, %s121
      %p128 = scmp.eq.s32.totalorder %s27, 1
      %p129 = por %p127, %p128
      %p130 = scmp.ne.s32.totalorder %s121, %s122
      %p131 = scmp.eq.s32.totalorder %s27, 0
      %p132 = por %p130, %p131
      %p133 = scmp.ne.s32.totalorder %s121, %s122
      %p134 = scmp.eq.s32.totalorder %s28, 1
      %p135 = por %p133, %p134
      %p137 = scmp.ne.s32.totalorder %s122, %s136
      %p138 = scmp.eq.s32.totalorder %s28, 0
      %p139 = por %p137, %p138
      %s141 = sadd.s32 %s140, 1
      %p144 = scmp.eq.s32.totalorder %s22, 1
      %p145 = scmp.ne.s32.totalorder %s140, %s142
      %p146 = scmp.eq.s32.totalorder %s22, 0
      %p147 = por %p145, %p146
      %p148 = scmp.ne.s32.totalorder %s140, %s142
      %p149 = scmp.eq.s32.totalorder %s27, 1
      %p150 = por %p148, %p149
      %p151 = scmp.ne.s32.totalorder %s142, %s143
      %p152 = scmp.eq.s32.totalorder %s27, 0
      %p153 = por %p151, %p152
      %p154 = scmp.ne.s32.totalorder %s142, %s143
      %p155 = scmp.eq.s32.totalorder %s28, 1
      %p156 = por %p154, %p155
      %p158 = scmp.ne.s32.totalorder %s143, %s157
      %p159 = scmp.eq.s32.totalorder %s28, 0
      %p160 = por %p158, %p159
      %s162 = sadd.s32 %s161, 1
      %p165 = scmp.eq.s32.totalorder %s22, 1
      %p166 = scmp.ne.s32.totalorder %s161, %s163
      %p167 = scmp.eq.s32.totalorder %s22, 0
      %p168 = por %p166, %p167
      %p169 = scmp.ne.s32.totalorder %s161, %s163
      %p170 = scmp.eq.s32.totalorder %s27, 1
      %p171 = por %p169, %p170
      %p172 = scmp.ne.s32.totalorder %s163, %s164
      %p173 = scmp.eq.s32.totalorder %s27, 0
      %p174 = por %p172, %p173
      %p175 = scmp.ne.s32.totalorder %s163, %s164
      %p176 = scmp.eq.s32.totalorder %s28, 1
      %p177 = por %p175, %p176
      %p179 = scmp.ne.s32.totalorder %s164, %s178
      %p180 = scmp.eq.s32.totalorder %s28, 0
      %p181 = por %p179, %p180
      %s183 = sadd.s32 %s182, 1
      %p186 = scmp.eq.s32.totalorder %s22, 1
      %p187 = scmp.ne.s32.totalorder %s182, %s184
      %p188 = scmp.eq.s32.totalorder %s22, 0
      %p189 = por %p187, %p188
      %p190 = scmp.ne.s32.totalorder %s182, %s184
      %p191 = scmp.eq.s32.totalorder %s27, 1
      %p192 = por %p190, %p191
      %p193 = scmp.ne.s32.totalorder %s184, %s185
      %p194 = scmp.eq.s32.totalorder %s27, 0
      %p195 = por %p193, %p194
      %p196 = scmp.ne.s32.totalorder %s184, %s185
      %p197 = scmp.eq.s32.totalorder %s28, 1
      %p198 = por %p196, %p197
      %p200 = scmp.ne.s32.totalorder %s185, %s199
      %p201 = scmp.eq.s32.totalorder %s28, 0
      %p202 = por %p200, %p201
      %s204 = sadd.s32 %s203, 1
      %p207 = scmp.eq.s32.totalorder %s22, 1
      %p208 = scmp.ne.s32.totalorder %s203, %s205
      %p209 = scmp.eq.s32.totalorder %s22, 0
      %p210 = por %p208, %p209
      %p211 = scmp.ne.s32.totalorder %s203, %s205
      %p212 = scmp.eq.s32.totalorder %s27, 1
      %p213 = por %p211, %p212
      %p214 = scmp.ne.s32.totalorder %s205, %s206
      %p215 = scmp.eq.s32.totalorder %s27, 0
      %p216 = por %p214, %p215
      %p217 = scmp.ne.s32.totalorder %s205, %s206
      %p218 = scmp.eq.s32.totalorder %s28, 1
      %p219 = por %p217, %p218
      %p221 = scmp.ne.s32.totalorder %s206, %s220
      %p222 = scmp.eq.s32.totalorder %s28, 0
      %p223 = por %p221, %p222
      %s225 = sadd.s32 %s224, 1
      %p228 = scmp.eq.s32.totalorder %s22, 1
      %p229 = scmp.ne.s32.totalorder %s224, %s226
      %p230 = scmp.eq.s32.totalorder %s22, 0
      %p231 = por %p229, %p230
      %p232 = scmp.ne.s32.totalorder %s224, %s226
      %p233 = scmp.eq.s32.totalorder %s27, 1
      %p234 = por %p232, %p233
      %p235 = scmp.ne.s32.totalorder %s226, %s227
      %p236 = scmp.eq.s32.totalorder %s27, 0
      %p237 = por %p235, %p236
      %p238 = scmp.ne.s32.totalorder %s226, %s227
      %p239 = scmp.eq.s32.totalorder %s28, 1
      %p240 = por %p238, %p239
      %p242 = scmp.ne.s32.totalorder %s227, %s241
      %p243 = scmp.eq.s32.totalorder %s28, 0
      %p244 = por %p242, %p243
      %s246 = sadd.s32 %s245, 1
      %p249 = scmp.eq.s32.totalorder %s22, 1
      %p250 = scmp.ne.s32.totalorder %s245, %s247
      %p251 = scmp.eq.s32.totalorder %s22, 0
      %p252 = por %p250, %p251
      %p253 = scmp.ne.s32.totalorder %s245, %s247
      %p254 = scmp.eq.s32.totalorder %s27, 1
      %p255 = por %p253, %p254
      %p256 = scmp.ne.s32.totalorder %s247, %s248
      %p257 = scmp.eq.s32.totalorder %s27, 0
      %p258 = por %p256, %p257
      %p259 = scmp.ne.s32.totalorder %s247, %s248
      %p260 = scmp.eq.s32.totalorder %s28, 1
      %p261 = por %p259, %p260
      %p263 = scmp.ne.s32.totalorder %s248, %s262
      %p264 = scmp.eq.s32.totalorder %s28, 0
      %p265 = por %p263, %p264
      %s267 = sadd.s32 %s266, 1
      %p270 = scmp.eq.s32.totalorder %s22, 1
      %p271 = scmp.ne.s32.totalorder %s266, %s268
      %p272 = scmp.eq.s32.totalorder %s22, 0
      %p273 = por %p271, %p272
      %p274 = scmp.ne.s32.totalorder %s266, %s268
      %p275 = scmp.eq.s32.totalorder %s27, 1
      %p276 = por %p274, %p275
      %p277 = scmp.ne.s32.totalorder %s268, %s269
      %p278 = scmp.eq.s32.totalorder %s27, 0
      %p279 = por %p277, %p278
      %p280 = scmp.ne.s32.totalorder %s268, %s269
      %p281 = scmp.eq.s32.totalorder %s28, 1
      %p282 = por %p280, %p281
      %p284 = scmp.ne.s32.totalorder %s269, %s283
      %p285 = scmp.eq.s32.totalorder %s28, 0
      %p286 = por %p284, %p285
      %s288 = sadd.s32 %s287, 1
      %p291 = scmp.eq.s32.totalorder %s22, 1
      %p292 = scmp.ne.s32.totalorder %s287, %s289
      %p293 = scmp.eq.s32.totalorder %s22, 0
      %p294 = por %p292, %p293
      %p295 = scmp.ne.s32.totalorder %s287, %s289
      %p296 = scmp.eq.s32.totalorder %s27, 1
      %p297 = por %p295, %p296
      %p298 = scmp.ne.s32.totalorder %s289, %s290
      %p299 = scmp.eq.s32.totalorder %s27, 0
      %p300 = por %p298, %p299
      %p301 = scmp.ne.s32.totalorder %s289, %s290
      %p302 = scmp.eq.s32.totalorder %s28, 1
      %p303 = por %p301, %p302
      %p305 = scmp.ne.s32.totalorder %s290, %s304
      %p306 = scmp.eq.s32.totalorder %s28, 0
      %p307 = por %p305, %p306
      %s308 = ssub.s32 %s22, %s29
      %p309 = scmp.eq.s32.totalorder %s308, 0
      %s311 = sadd.s32 %s310, 1
      %s312 = scalar_select %p309, %s310, %s311
      %p315 = pneg %p309
      %p316 = scmp.eq.s32.totalorder %s22, 1
      %p317 = por %p315, %p316
      %p318 = scmp.ne.s32.totalorder %s310, %s313
      %p319 = scmp.eq.s32.totalorder %s22, 0
      %p320 = por %p318, %p319
      %p321 = scmp.ne.s32.totalorder %s310, %s313
      %p322 = scmp.eq.s32.totalorder %s27, 1
      %p323 = por %p321, %p322
      %p324 = scmp.ne.s32.totalorder %s313, %s314
      %p325 = scmp.eq.s32.totalorder %s27, 0
      %p326 = por %p324, %p325
      %p327 = scmp.ne.s32.totalorder %s313, %s314
      %p328 = scmp.eq.s32.totalorder %s28, 1
      %p329 = por %p327, %p328
      %p331 = scmp.ne.s32.totalorder %s314, %s330
      %p332 = scmp.eq.s32.totalorder %s28, 0
      %p333 = por %p331, %p332
      %p334 = scmp.le.s32.totalorder 1, %s22
      %p335 = scmp.lt.s32.totalorder %s22, 3
      %p336 = pnand %p334, %p335
      %p337 = pneg %p336
      // Predicated region
      $region9: #{tpu_custom_call.1} parent=5 // pred_check
        _
      $region10: #{tpu_custom_call.1} parent=5 // pred_check_branch
        %339 = sbr.rel (%p336) target = $region12
      $region11: #{tpu_custom_call.1} parent=5 // pred_region
        %s340 = ssub.s32 %s22, 1
        // Predicated region
        $region13: #{tpu_custom_call.1} parent=11 // pred_check
          %p341 = pneg %p69
        $region14: #{tpu_custom_call.1} parent=11 // pred_check_branch
          %343 = sbr.rel (%p341) target = $region16
        $region15: #{tpu_custom_call.1} parent=11 // pred_region
          _
        $region16: #{tpu_custom_call.1} parent=11 // pred_fallthru
          _
        // Predicated region
        $region17: #{tpu_custom_call.1} parent=11 // pred_check
          %p344 = pneg %p90
        $region18: #{tpu_custom_call.1} parent=11 // pred_check_branch
          %346 = sbr.rel (%p344) target = $region20
        $region19: #{tpu_custom_call.1} parent=11 // pred_region
          _
        $region20: #{tpu_custom_call.1} parent=11 // pred_fallthru
          _
        // Predicated region
        $region21: #{tpu_custom_call.1} parent=11 // pred_check
          %p347 = pneg %p111
        $region22: #{tpu_custom_call.1} parent=11 // pred_check_branch
          %349 = sbr.rel (%p347) target = $region24
        $region23: #{tpu_custom_call.1} parent=11 // pred_region
          _
        $region24: #{tpu_custom_call.1} parent=11 // pred_fallthru
          _
        // Predicated region
        $region25: #{tpu_custom_call.1} parent=11 // pred_check
          %p350 = pneg %p132
        $region26: #{tpu_custom_call.1} parent=11 // pred_check_branch
          %352 = sbr.rel (%p350) target = $region28
        $region27: #{tpu_custom_call.1} parent=11 // pred_region
          _
        $region28: #{tpu_custom_call.1} parent=11 // pred_fallthru
          _
        // Predicated region
        $region29: #{tpu_custom_call.1} parent=11 // pred_check
          %p353 = pneg %p153
        $region30: #{tpu_custom_call.1} parent=11 // pred_check_branch
          %355 = sbr.rel (%p353) target = $region32
        $region31: #{tpu_custom_call.1} parent=11 // pred_region
          _
        $region32: #{tpu_custom_call.1} parent=11 // pred_fallthru
          _
        // Predicated region
        $region33: #{tpu_custom_call.1} parent=11 // pred_check
          %p356 = pneg %p174
        $region34: #{tpu_custom_call.1} parent=11 // pred_check_branch
          %358 = sbr.rel (%p356) target = $region36
        $region35: #{tpu_custom_call.1} parent=11 // pred_region
          _
        $region36: #{tpu_custom_call.1} parent=11 // pred_fallthru
          _
        // Predicated region
        $region37: #{tpu_custom_call.1} parent=11 // pred_check
          %p359 = pneg %p195
        $region38: #{tpu_custom_call.1} parent=11 // pred_check_branch
          %361 = sbr.rel (%p359) target = $region40
        $region39: #{tpu_custom_call.1} parent=11 // pred_region
          _
        $region40: #{tpu_custom_call.1} parent=11 // pred_fallthru
          _
        // Predicated region
        $region41: #{tpu_custom_call.1} parent=11 // pred_check
          %p362 = pneg %p216
        $region42: #{tpu_custom_call.1} parent=11 // pred_check_branch
          %364 = sbr.rel (%p362) target = $region44
        $region43: #{tpu_custom_call.1} parent=11 // pred_region
          _
        $region44: #{tpu_custom_call.1} parent=11 // pred_fallthru
          _
        // Predicated region
        $region45: #{tpu_custom_call.1} parent=11 // pred_check
          %p365 = pneg %p237
        $region46: #{tpu_custom_call.1} parent=11 // pred_check_branch
          %367 = sbr.rel (%p365) target = $region48
        $region47: #{tpu_custom_call.1} parent=11 // pred_region
          _
        $region48: #{tpu_custom_call.1} parent=11 // pred_fallthru
          _
        // Predicated region
        $region49: #{tpu_custom_call.1} parent=11 // pred_check
          %p368 = pneg %p258
        $region50: #{tpu_custom_call.1} parent=11 // pred_check_branch
          %370 = sbr.rel (%p368) target = $region52
        $region51: #{tpu_custom_call.1} parent=11 // pred_region
          _
        $region52: #{tpu_custom_call.1} parent=11 // pred_fallthru
          _
        // Predicated region
        $region53: #{tpu_custom_call.1} parent=11 // pred_check
          %p371 = pneg %p279
        $region54: #{tpu_custom_call.1} parent=11 // pred_check_branch
          %373 = sbr.rel (%p371) target = $region56
        $region55: #{tpu_custom_call.1} parent=11 // pred_region
          _
        $region56: #{tpu_custom_call.1} parent=11 // pred_fallthru
          _
        // Predicated region
        $region57: #{tpu_custom_call.1} parent=11 // pred_check
          %p374 = pneg %p300
        $region58: #{tpu_custom_call.1} parent=11 // pred_check_branch
          %376 = sbr.rel (%p374) target = $region60
        $region59: #{tpu_custom_call.1} parent=11 // pred_region
          _
        $region60: #{tpu_custom_call.1} parent=11 // pred_fallthru
          _
      $region12: #{tpu_custom_call.1} parent=5 // pred_fallthru
        _
      %p377 = scmp.lt.s32.totalorder %s22, 2
      // Predicated region
      $region61: #{tpu_custom_call.1} parent=5 // pred_check
        %p378 = pneg %p377
      $region62: #{tpu_custom_call.1} parent=5 // pred_check_branch
        %380 = sbr.rel (%p378) target = $region64
      $region63: #{tpu_custom_call.1} parent=5 // pred_region
        // Predicated region
        $region65: #{tpu_custom_call.1} parent=63 // pred_check
          %p381 = pneg %p42
        $region66: #{tpu_custom_call.1} parent=63 // pred_check_branch
          %383 = sbr.rel (%p381) target = $region68
        $region67: #{tpu_custom_call.1} parent=63 // pred_region
          %p384 = scmp.lt.s32.totalorder %s22, 1
          %s385 = scalar_select %p384, %s22, 1
          %s386 = smul.addr %s385, 8
          %s387 = scalar_lea.vmem %s0, %s386
        $region68: #{tpu_custom_call.1} parent=63 // pred_fallthru
          _
      $region64: #{tpu_custom_call.1} parent=5 // pred_fallthru
        _
      %p388 = scmp.le.s32.totalorder 1, %s22
      %p389 = scmp.lt.s32.totalorder %s22, 3
      %p390 = pnand %p388, %p389
      %p391 = pneg %p390
      // Predicated region
      $region69: #{tpu_custom_call.1} parent=5 // pred_check
        _
      $region70: #{tpu_custom_call.1} parent=5 // pred_check_branch
        %393 = sbr.rel (%p390) target = $region72
      $region71: #{tpu_custom_call.1} parent=5 // pred_region
        %s394 = ssub.s32 %s22, 1
        %p395 = scmp.lt.s32.totalorder %s27, 1
        %s396 = scalar_select %p395, %s27, 1
        %s397 = smul.addr %s396, 8
        %s398 = scalar_lea.vmem %s0, %s397
        %p399 = pneg %p48
        %p400 = pneg %p45
        %p401 = pneg %p69
        %p402 = pneg %p66
        %p403 = pneg %p90
        %p404 = pneg %p87
        %p405 = pneg %p111
        %p406 = pneg %p108
        %p407 = pneg %p132
        %p408 = pneg %p129
        %p409 = pneg %p153
        %p410 = pneg %p150
        %p411 = pneg %p174
        %p412 = pneg %p171
        %p413 = pneg %p195
        %p414 = pneg %p192
        %p415 = pneg %p216
        %p416 = pneg %p213
        %p417 = pneg %p237
        %p418 = pneg %p234
        %p419 = pneg %p258
        %p420 = pneg %p255
        %p421 = pneg %p279
        %p422 = pneg %p276
        %p423 = pneg %p300
        %p424 = pneg %p297
        %p425 = pneg %p326
        %p426 = pneg %p323
        %s427 = sand.u32 %s313, 1
        %s428 = scalar_lea.sflag [#allocation3], %s427
        %s429 = sand.u32 %s313, 1
        %s430 = smul.addr %s429, 8
        %s431 = scalar_lea.vmem [#allocation2], %s430
        %p432 = scmp.lt.s32.totalorder %s27, 1
        %s433 = scalar_select %p432, %s27, 1
        %s434 = smul.addr %s433, 8
        %s435 = scalar_lea.vmem %s0, %s434
        %v436 = vld [vmem:[%s435] sm:$0xff]
        %v437 = vld [vmem:[%s1] sm:$0xff]
        %v438 = vld [vmem:[%s1 + $0x8] sm:$0xff]
        %v439 = vld [vmem:[%s1 + $0x10] sm:$0xff]
        %v440 = vld [vmem:[%s1 + $0x18] sm:$0xff]
        %v441 = vld [vmem:[%s2] sm:$0x1]
        %v443 = vlaneseq
        %v444 = vshrl.u32 %v443, 7
        %v445 = vsub.s32 0, %v444
        %v446 = vrot.slane %v441, %v445
        %vm448 = vcmask 261120
        %v450 = vsel %vm448, %v436, 0
        %452 = vmatprep.subr.mxu0 0.0
        %453 = vmatpush1.msra.mxu0 %v437
        %454 = vmatprep.subr.mxu0 0.0
        %455 = vmatpush1.msra.mxu0 %v438
        %456 = vmatprep.subr.mxu0 0.0
        %457 = vmatpush1.msra.mxu0 %v439
        %458 = vmatprep.subr.mxu0 0.0
        %459 = vmatpush1.msra.mxu0 %v440
        %460 = vmatprep.subr.mxu0 0.0
        %461 = vmatpush1.msra.mxu0 0.0
        %462 = vmatprep.subr.mxu0 0.0
        %463 = vmatpush1.msra.mxu0 0.0
        %464 = vmatprep.subr.mxu0 0.0
        %465 = vmatpush1.msra.mxu0 0.0
        %466 = vmatprep.subr.mxu0 0.0
        %467 = vmatpush1.msra.mxu0 0.0
        %468 = vmatprep.subr.mxu0 0.0
        %469 = vmatpush1.msra.mxu0 0.0
        %470 = vmatprep.subr.mxu0 0.0
        %471 = vmatpush1.msra.mxu0 0.0
        %472 = vmatprep.subr.mxu0 0.0
        %473 = vmatpush1.msra.mxu0 0.0
        %474 = vmatprep.subr.mxu0 0.0
        %475 = vmatpush1.msra.mxu0 0.0
        %476 = vmatprep.subr.mxu0 0.0
        %477 = vmatpush1.msra.mxu0 0.0
        %478 = vmatprep.subr.mxu0 0.0
        %479 = vmatpush1.msra.mxu0 0.0
        %480 = vmatprep.subr.mxu0 0.0
        %481 = vmatpush1.msra.mxu0 0.0
        %482 = vmatprep.subr.mxu0 0.0
        %483 = vmatpush1.msra.mxu0 0.0
        %484 = vmatprep.subr.mxu0 0.0
        %485 = vmatpush1.msra.mxu0 0.0
        %486 = vmatprep.subr.mxu0 0.0
        %487 = vmatpush1.msra.mxu0 0.0
        %488 = vmatprep.subr.mxu0 0.0
        %489 = vmatpush1.msra.mxu0 0.0
        %490 = vmatprep.subr.mxu0 0.0
        %491 = vmatpush1.msra.mxu0 0.0
        %492 = vmatprep.subr.mxu0 0.0
        %493 = vmatpush1.msra.mxu0 0.0
        %494 = vmatprep.subr.mxu0 0.0
        %495 = vmatpush1.msra.mxu0 0.0
        %496 = vmatprep.subr.mxu0 0.0
        %497 = vmatpush1.msra.mxu0 0.0
        %498 = vmatprep.subr.mxu0 0.0
        %499 = vmatpush1.msra.mxu0 0.0
        %500 = vmatprep.subr.mxu0 0.0
        %501 = vmatpush1.msra.mxu0 0.0
        %502 = vmatprep.subr.mxu0 0.0
        %503 = vmatpush1.msra.mxu0 0.0
        %504 = vmatprep.subr.mxu0 0.0
        %505 = vmatpush1.msra.mxu0 0.0
        %506 = vmatprep.subr.mxu0 0.0
        %507 = vmatpush1.msra.mxu0 0.0
        %508 = vmatprep.subr.mxu0 0.0
        %509 = vmatpush1.msra.mxu0 0.0
        %510 = vmatprep.subr.mxu0 0.0
        %511 = vmatpush1.msra.mxu0 0.0
        %512 = vmatprep.subr.mxu0 0.0
        %513 = vmatpush1.msra.mxu0 0.0
        %514 = vmatprep.subr.mxu0 0.0
        %515 = vmatpush1.msra.mxu0 0.0
        %516 = vmatprep.mubr.f32.mxu0 0.0
        %517 = vmatmul.mubr.f32.gmra.mrb[0].mxu0 %v450
        %v518 = vpop.f32.mrb[0].mxu0
        %v519 = vadd.f32 %v446, %v518
        %v520 = vpop.f32.mrb[0].mxu0
        %521 = vdwg.mxu0
        %v522 = vld [vmem:[%s11] sm:$0xff]
        %v523 = vld [vmem:[%s11 + $0x8] sm:$0xff]
        %v524 = vld [vmem:[%s11 + $0x10] sm:$0xff]
        %v525 = vld [vmem:[%s11 + $0x18] sm:$0xff]
        %v526 = vld [vmem:[%s12] sm:$0xf]
        %528 = vrot.lane.b32.xlu0 %v519, 96
        %v529 = vpop.permute.xlu0 %528
        %531 = vrot.lane.b32.xlu0 %v519, 104
        %v532 = vpop.permute.xlu0 %531
        %534 = vrot.lane.b32.xlu0 %v519, 112
        %v535 = vpop.permute.xlu0 %534
        %537 = vrot.lane.b32.xlu0 %v519, 120
        %v538 = vpop.permute.xlu0 %537
        %vm540 = vcmask 64512
        %v541 = vsel %vm540, %v529, %v532
        %vm542 = vcmask 130048
        %v543 = vsel %vm542, %v541, %v535
        %vm544 = vcmask 195584
        %v545 = vsel %vm544, %v543, %v538
        %v546 = vmul.f32 %v519, %v545
        %v548 = vsel %vm448, %v546, 0
        %550 = vmatprep.subr.mxu0 0.0
        %551 = vmatpush1.msra.mxu0 %v522
        %552 = vmatprep.subr.mxu0 0.0
        %553 = vmatpush1.msra.mxu0 %v523
        %554 = vmatprep.subr.mxu0 0.0
        %555 = vmatpush1.msra.mxu0 %v524
        %556 = vmatprep.subr.mxu0 0.0
        %557 = vmatpush1.msra.mxu0 %v525
        %558 = vmatprep.subr.mxu0 0.0
        %559 = vmatpush1.msra.mxu0 0.0
        %560 = vmatprep.subr.mxu0 0.0
        %561 = vmatpush1.msra.mxu0 0.0
        %562 = vmatprep.subr.mxu0 0.0
        %563 = vmatpush1.msra.mxu0 0.0
        %564 = vmatprep.subr.mxu0 0.0
        %565 = vmatpush1.msra.mxu0 0.0
        %566 = vmatprep.subr.mxu0 0.0
        %567 = vmatpush1.msra.mxu0 0.0
        %568 = vmatprep.subr.mxu0 0.0
        %569 = vmatpush1.msra.mxu0 0.0
        %570 = vmatprep.subr.mxu0 0.0
        %571 = vmatpush1.msra.mxu0 0.0
        %572 = vmatprep.subr.mxu0 0.0
        %573 = vmatpush1.msra.mxu0 0.0
        %574 = vmatprep.subr.mxu0 0.0
        %575 = vmatpush1.msra.mxu0 0.0
        %576 = vmatprep.subr.mxu0 0.0
        %577 = vmatpush1.msra.mxu0 0.0
        %578 = vmatprep.subr.mxu0 0.0
        %579 = vmatpush1.msra.mxu0 0.0
        %580 = vmatprep.subr.mxu0 0.0
        %581 = vmatpush1.msra.mxu0 0.0
        %582 = vmatprep.subr.mxu0 0.0
        %583 = vmatpush1.msra.mxu0 0.0
        %584 = vmatprep.subr.mxu0 0.0
        %585 = vmatpush1.msra.mxu0 0.0
        %586 = vmatprep.subr.mxu0 0.0
        %587 = vmatpush1.msra.mxu0 0.0
        %588 = vmatprep.subr.mxu0 0.0
        %589 = vmatpush1.msra.mxu0 0.0
        %590 = vmatprep.subr.mxu0 0.0
        %591 = vmatpush1.msra.mxu0 0.0
        %592 = vmatprep.subr.mxu0 0.0
        %593 = vmatpush1.msra.mxu0 0.0
        %594 = vmatprep.subr.mxu0 0.0
        %595 = vmatpush1.msra.mxu0 0.0
        %596 = vmatprep.subr.mxu0 0.0
        %597 = vmatpush1.msra.mxu0 0.0
        %598 = vmatprep.subr.mxu0 0.0
        %599 = vmatpush1.msra.mxu0 0.0
        %600 = vmatprep.subr.mxu0 0.0
        %601 = vmatpush1.msra.mxu0 0.0
        %602 = vmatprep.subr.mxu0 0.0
        %603 = vmatpush1.msra.mxu0 0.0
        %604 = vmatprep.subr.mxu0 0.0
        %605 = vmatpush1.msra.mxu0 0.0
        %606 = vmatprep.subr.mxu0 0.0
        %607 = vmatpush1.msra.mxu0 0.0
        %608 = vmatprep.subr.mxu0 0.0
        %609 = vmatpush1.msra.mxu0 0.0
        %610 = vmatprep.subr.mxu0 0.0
        %611 = vmatpush1.msra.mxu0 0.0
        %612 = vmatprep.subr.mxu0 0.0
        %613 = vmatpush1.msra.mxu0 0.0
        %614 = vmatprep.mubr.f32.mxu0 0.0
        %615 = vmatmul.mubr.f32.gmra.mrb[0].mxu0 %v548
        %v616 = vpop.f32.mrb[0].mxu0
        %v617 = vadd.f32 0.0, %v616
        %v618 = vpop.f32.mrb[0].mxu0
        %619 = vdwg.mxu0
        %v620 = vmul.f32 %v617, 0.35355338
        %621 = vrot.lane.b32.xlu0 %v519, 88
        %v622 = vpop.permute.xlu0 %621
        %v624 = vsel %vm540, %v622, %v529
        %v625 = vsel %vm542, %v624, %v532
        %v626 = vsel %vm544, %v625, %v535
        %v627 = vmul.f32 %v519, %v626
        %v629 = vsel %vm448, %v627, 0
        %631 = vmatprep.subr.mxu0 0.0
        %632 = vmatpush1.msra.mxu0 %v522
        %633 = vmatprep.subr.mxu0 0.0
        %634 = vmatpush1.msra.mxu0 %v523
        %635 = vmatprep.subr.mxu0 0.0
        %636 = vmatpush1.msra.mxu0 %v524
        %637 = vmatprep.subr.mxu0 0.0
        %638 = vmatpush1.msra.mxu0 %v525
        %639 = vmatprep.subr.mxu0 0.0
        %640 = vmatpush1.msra.mxu0 0.0
        %641 = vmatprep.subr.mxu0 0.0
        %642 = vmatpush1.msra.mxu0 0.0
        %643 = vmatprep.subr.mxu0 0.0
        %644 = vmatpush1.msra.mxu0 0.0
        %645 = vmatprep.subr.mxu0 0.0
        %646 = vmatpush1.msra.mxu0 0.0
        %647 = vmatprep.subr.mxu0 0.0
        %648 = vmatpush1.msra.mxu0 0.0
        %649 = vmatprep.subr.mxu0 0.0
        %650 = vmatpush1.msra.mxu0 0.0
        %651 = vmatprep.subr.mxu0 0.0
        %652 = vmatpush1.msra.mxu0 0.0
        %653 = vmatprep.subr.mxu0 0.0
        %654 = vmatpush1.msra.mxu0 0.0
        %655 = vmatprep.subr.mxu0 0.0
        %656 = vmatpush1.msra.mxu0 0.0
        %657 = vmatprep.subr.mxu0 0.0
        %658 = vmatpush1.msra.mxu0 0.0
        %659 = vmatprep.subr.mxu0 0.0
        %660 = vmatpush1.msra.mxu0 0.0
        %661 = vmatprep.subr.mxu0 0.0
        %662 = vmatpush1.msra.mxu0 0.0
        %663 = vmatprep.subr.mxu0 0.0
        %664 = vmatpush1.msra.mxu0 0.0
        %665 = vmatprep.subr.mxu0 0.0
        %666 = vmatpush1.msra.mxu0 0.0
        %667 = vmatprep.subr.mxu0 0.0
        %668 = vmatpush1.msra.mxu0 0.0
        %669 = vmatprep.subr.mxu0 0.0
        %670 = vmatpush1.msra.mxu0 0.0
        %671 = vmatprep.subr.mxu0 0.0
        %672 = vmatpush1.msra.mxu0 0.0
        %673 = vmatprep.subr.mxu0 0.0
        %674 = vmatpush1.msra.mxu0 0.0
        %675 = vmatprep.subr.mxu0 0.0
        %676 = vmatpush1.msra.mxu0 0.0
        %677 = vmatprep.subr.mxu0 0.0
        %678 = vmatpush1.msra.mxu0 0.0
        %679 = vmatprep.subr.mxu0 0.0
        %680 = vmatpush1.msra.mxu0 0.0
        %681 = vmatprep.subr.mxu0 0.0
        %682 = vmatpush1.msra.mxu0 0.0
        %683 = vmatprep.subr.mxu0 0.0
        %684 = vmatpush1.msra.mxu0 0.0
        %685 = vmatprep.subr.mxu0 0.0
        %686 = vmatpush1.msra.mxu0 0.0
        %687 = vmatprep.subr.mxu0 0.0
        %688 = vmatpush1.msra.mxu0 0.0
        %689 = vmatprep.subr.mxu0 0.0
        %690 = vmatpush1.msra.mxu0 0.0
        %691 = vmatprep.subr.mxu0 0.0
        %692 = vmatpush1.msra.mxu0 0.0
        %693 = vmatprep.subr.mxu0 0.0
        %694 = vmatpush1.msra.mxu0 0.0
        %695 = vmatprep.mubr.f32.mxu0 0.0
        %696 = vmatmul.mubr.f32.gmra.mrb[0].mxu0 %v629
        %v697 = vpop.f32.mrb[0].mxu0
        %v698 = vadd.f32 0.0, %v697
        %v699 = vpop.f32.mrb[0].mxu0
        %700 = vdwg.mxu0
        %v701 = vmul.f32 %v698, 0.35355338
        %702 = vrot.lane.b32.xlu0 %v519, 80
        %v703 = vpop.permute.xlu0 %702
        %v705 = vsel %vm540, %v703, %v622
        %v706 = vsel %vm542, %v705, %v529
        %v707 = vsel %vm544, %v706, %v532
        %v708 = vmul.f32 %v519, %v707
        %v710 = vsel %vm448, %v708, 0
        %712 = vmatprep.subr.mxu0 0.0
        %713 = vmatpush1.msra.mxu0 %v522
        %714 = vmatprep.subr.mxu0 0.0
        %715 = vmatpush1.msra.mxu0 %v523
        %716 = vmatprep.subr.mxu0 0.0
        %717 = vmatpush1.msra.mxu0 %v524
        %718 = vmatprep.subr.mxu0 0.0
        %719 = vmatpush1.msra.mxu0 %v525
        %720 = vmatprep.subr.mxu0 0.0
        %721 = vmatpush1.msra.mxu0 0.0
        %722 = vmatprep.subr.mxu0 0.0
        %723 = vmatpush1.msra.mxu0 0.0
        %724 = vmatprep.subr.mxu0 0.0
        %725 = vmatpush1.msra.mxu0 0.0
        %726 = vmatprep.subr.mxu0 0.0
        %727 = vmatpush1.msra.mxu0 0.0
        %728 = vmatprep.subr.mxu0 0.0
        %729 = vmatpush1.msra.mxu0 0.0
        %730 = vmatprep.subr.mxu0 0.0
        %731 = vmatpush1.msra.mxu0 0.0
        %732 = vmatprep.subr.mxu0 0.0
        %733 = vmatpush1.msra.mxu0 0.0
        %734 = vmatprep.subr.mxu0 0.0
        %735 = vmatpush1.msra.mxu0 0.0
        %736 = vmatprep.subr.mxu0 0.0
        %737 = vmatpush1.msra.mxu0 0.0
        %738 = vmatprep.subr.mxu0 0.0
        %739 = vmatpush1.msra.mxu0 0.0
        %740 = vmatprep.subr.mxu0 0.0
        %741 = vmatpush1.msra.mxu0 0.0
        %742 = vmatprep.subr.mxu0 0.0
        %743 = vmatpush1.msra.mxu0 0.0
        %744 = vmatprep.subr.mxu0 0.0
        %745 = vmatpush1.msra.mxu0 0.0
        %746 = vmatprep.subr.mxu0 0.0
        %747 = vmatpush1.msra.mxu0 0.0
        %748 = vmatprep.subr.mxu0 0.0
        %749 = vmatpush1.msra.mxu0 0.0
        %750 = vmatprep.subr.mxu0 0.0
        %751 = vmatpush1.msra.mxu0 0.0
        %752 = vmatprep.subr.mxu0 0.0
        %753 = vmatpush1.msra.mxu0 0.0
        %754 = vmatprep.subr.mxu0 0.0
        %755 = vmatpush1.msra.mxu0 0.0
        %756 = vmatprep.subr.mxu0 0.0
        %757 = vmatpush1.msra.mxu0 0.0
        %758 = vmatprep.subr.mxu0 0.0
        %759 = vmatpush1.msra.mxu0 0.0
        %760 = vmatprep.subr.mxu0 0.0
        %761 = vmatpush1.msra.mxu0 0.0
        %762 = vmatprep.subr.mxu0 0.0
        %763 = vmatpush1.msra.mxu0 0.0
        %764 = vmatprep.subr.mxu0 0.0
        %765 = vmatpush1.msra.mxu0 0.0
        %766 = vmatprep.subr.mxu0 0.0
        %767 = vmatpush1.msra.mxu0 0.0
        %768 = vmatprep.subr.mxu0 0.0
        %769 = vmatpush1.msra.mxu0 0.0
        %770 = vmatprep.subr.mxu0 0.0
        %771 = vmatpush1.msra.mxu0 0.0
        %772 = vmatprep.subr.mxu0 0.0
        %773 = vmatpush1.msra.mxu0 0.0
        %774 = vmatprep.subr.mxu0 0.0
        %775 = vmatpush1.msra.mxu0 0.0
        %776 = vmatprep.mubr.f32.mxu0 0.0
        %777 = vmatmul.mubr.f32.gmra.mrb[0].mxu0 %v710
        %v778 = vpop.f32.mrb[0].mxu0
        %v779 = vadd.f32 0.0, %v778
        %v780 = vpop.f32.mrb[0].mxu0
        %781 = vdwg.mxu0
        %v782 = vmul.f32 %v779, 0.35355338
        %783 = vrot.lane.b32.xlu0 %v519, 72
        %v784 = vpop.permute.xlu0 %783
        %v786 = vsel %vm540, %v784, %v703
        %v787 = vsel %vm542, %v786, %v622
        %v788 = vsel %vm544, %v787, %v529
        %v789 = vmul.f32 %v519, %v788
        %v791 = vsel %vm448, %v789, 0
        %793 = vmatprep.subr.mxu0 0.0
        %794 = vmatpush1.msra.mxu0 %v522
        %795 = vmatprep.subr.mxu0 0.0
        %796 = vmatpush1.msra.mxu0 %v523
        %797 = vmatprep.subr.mxu0 0.0
        %798 = vmatpush1.msra.mxu0 %v524
        %799 = vmatprep.subr.mxu0 0.0
        %800 = vmatpush1.msra.mxu0 %v525
        %801 = vmatprep.subr.mxu0 0.0
        %802 = vmatpush1.msra.mxu0 0.0
        %803 = vmatprep.subr.mxu0 0.0
        %804 = vmatpush1.msra.mxu0 0.0
        %805 = vmatprep.subr.mxu0 0.0
        %806 = vmatpush1.msra.mxu0 0.0
        %807 = vmatprep.subr.mxu0 0.0
        %808 = vmatpush1.msra.mxu0 0.0
        %809 = vmatprep.subr.mxu0 0.0
        %810 = vmatpush1.msra.mxu0 0.0
        %811 = vmatprep.subr.mxu0 0.0
        %812 = vmatpush1.msra.mxu0 0.0
        %813 = vmatprep.subr.mxu0 0.0
        %814 = vmatpush1.msra.mxu0 0.0
        %815 = vmatprep.subr.mxu0 0.0
        %816 = vmatpush1.msra.mxu0 0.0
        %817 = vmatprep.subr.mxu0 0.0
        %818 = vmatpush1.msra.mxu0 0.0
        %819 = vmatprep.subr.mxu0 0.0
        %820 = vmatpush1.msra.mxu0 0.0
        %821 = vmatprep.subr.mxu0 0.0
        %822 = vmatpush1.msra.mxu0 0.0
        %823 = vmatprep.subr.mxu0 0.0
        %824 = vmatpush1.msra.mxu0 0.0
        %825 = vmatprep.subr.mxu0 0.0
        %826 = vmatpush1.msra.mxu0 0.0
        %827 = vmatprep.subr.mxu0 0.0
        %828 = vmatpush1.msra.mxu0 0.0
        %829 = vmatprep.subr.mxu0 0.0
        %830 = vmatpush1.msra.mxu0 0.0
        %831 = vmatprep.subr.mxu0 0.0
        %832 = vmatpush1.msra.mxu0 0.0
        %833 = vmatprep.subr.mxu0 0.0
        %834 = vmatpush1.msra.mxu0 0.0
        %835 = vmatprep.subr.mxu0 0.0
        %836 = vmatpush1.msra.mxu0 0.0
        %837 = vmatprep.subr.mxu0 0.0
        %838 = vmatpush1.msra.mxu0 0.0
        %839 = vmatprep.subr.mxu0 0.0
        %840 = vmatpush1.msra.mxu0 0.0
        %841 = vmatprep.subr.mxu0 0.0
        %842 = vmatpush1.msra.mxu0 0.0
        %843 = vmatprep.subr.mxu0 0.0
        %844 = vmatpush1.msra.mxu0 0.0
        %845 = vmatprep.subr.mxu0 0.0
        %846 = vmatpush1.msra.mxu0 0.0
        %847 = vmatprep.subr.mxu0 0.0
        %848 = vmatpush1.msra.mxu0 0.0
        %849 = vmatprep.subr.mxu0 0.0
        %850 = vmatpush1.msra.mxu0 0.0
        %851 = vmatprep.subr.mxu0 0.0
        %852 = vmatpush1.msra.mxu0 0.0
        %853 = vmatprep.subr.mxu0 0.0
        %854 = vmatpush1.msra.mxu0 0.0
        %855 = vmatprep.subr.mxu0 0.0
        %856 = vmatpush1.msra.mxu0 0.0
        %857 = vmatprep.mubr.f32.mxu0 0.0
        %858 = vmatmul.mubr.f32.gmra.mrb[0].mxu0 %v791
        %v859 = vpop.f32.mrb[0].mxu0
        %v860 = vadd.f32 0.0, %v859
        %v861 = vpop.f32.mrb[0].mxu0
        %862 = vdwg.mxu0
        %v863 = vmul.f32 %v860, 0.35355338
        %v864 = vmax.f32 %v620, %v701
        %v865 = vmax.f32 %v864, %v782
        %v866 = vmax.f32 %v865, %v863
        %v867 = vsub.f32 %v620, %v866
        %v868 = vmul.f32 %v867, 1.442695
        %v869 = vpow.pop %v868
        %v870 = vsub.f32 %v701, %v866
        %v871 = vmul.f32 %v870, 1.442695
        %v872 = vpow.pop %v871
        %v873 = vsub.f32 %v782, %v866
        %v874 = vmul.f32 %v873, 1.442695
        %v875 = vpow.pop %v874
        %v876 = vsub.f32 %v863, %v866
        %v877 = vmul.f32 %v876, 1.442695
        %v878 = vpow.pop %v877
        %v879 = vadd.f32 %v869, %v872
        %v880 = vadd.f32 %v879, %v875
        %v881 = vadd.f32 %v880, %v878
        %v882 = vrcp.pop %v881
        %v883 = vmul.f32 1.0, %v882
        %v884 = vmul.f32 %v869, %v883
        %vm885 = vcmask 31744
        %v887 = vsel %vm885, %v884, 0
        %vm889 = vcmask 1043456
        %v891 = vsel %vm889, %v526, 0
        %893 = vmatprep.subr.mxu0 0.0
        %894 = vmatpush1.msra.mxu0 %v891
        %895 = vmatprep.subr.mxu0 0.0
        %896 = vmatpush1.msra.mxu0 0.0
        %897 = vmatprep.subr.mxu0 0.0
        %898 = vmatpush1.msra.mxu0 0.0
        %899 = vmatprep.subr.mxu0 0.0
        %900 = vmatpush1.msra.mxu0 0.0
        %901 = vmatprep.subr.mxu0 0.0
        %902 = vmatpush1.msra.mxu0 0.0
        %903 = vmatprep.subr.mxu0 0.0
        %904 = vmatpush1.msra.mxu0 0.0
        %905 = vmatprep.subr.mxu0 0.0
        %906 = vmatpush1.msra.mxu0 0.0
        %907 = vmatprep.subr.mxu0 0.0
        %908 = vmatpush1.msra.mxu0 0.0
        %909 = vmatprep.subr.mxu0 0.0
        %910 = vmatpush1.msra.mxu0 0.0
        %911 = vmatprep.subr.mxu0 0.0
        %912 = vmatpush1.msra.mxu0 0.0
        %913 = vmatprep.subr.mxu0 0.0
        %914 = vmatpush1.msra.mxu0 0.0
        %915 = vmatprep.subr.mxu0 0.0
        %916 = vmatpush1.msra.mxu0 0.0
        %917 = vmatprep.subr.mxu0 0.0
        %918 = vmatpush1.msra.mxu0 0.0
        %919 = vmatprep.subr.mxu0 0.0
        %920 = vmatpush1.msra.mxu0 0.0
        %921 = vmatprep.subr.mxu0 0.0
        %922 = vmatpush1.msra.mxu0 0.0
        %923 = vmatprep.subr.mxu0 0.0
        %924 = vmatpush1.msra.mxu0 0.0
        %925 = vmatprep.subr.mxu0 0.0
        %926 = vmatpush1.msra.mxu0 0.0
        %927 = vmatprep.subr.mxu0 0.0
        %928 = vmatpush1.msra.mxu0 0.0
        %929 = vmatprep.subr.mxu0 0.0
        %930 = vmatpush1.msra.mxu0 0.0
        %931 = vmatprep.subr.mxu0 0.0
        %932 = vmatpush1.msra.mxu0 0.0
        %933 = vmatprep.subr.mxu0 0.0
        %934 = vmatpush1.msra.mxu0 0.0
        %935 = vmatprep.subr.mxu0 0.0
        %936 = vmatpush1.msra.mxu0 0.0
        %937 = vmatprep.subr.mxu0 0.0
        %938 = vmatpush1.msra.mxu0 0.0
        %939 = vmatprep.subr.mxu0 0.0
        %940 = vmatpush1.msra.mxu0 0.0
        %941 = vmatprep.subr.mxu0 0.0
        %942 = vmatpush1.msra.mxu0 0.0
        %943 = vmatprep.subr.mxu0 0.0
        %944 = vmatpush1.msra.mxu0 0.0
        %945 = vmatprep.subr.mxu0 0.0
        %946 = vmatpush1.msra.mxu0 0.0
        %947 = vmatprep.subr.mxu0 0.0
        %948 = vmatpush1.msra.mxu0 0.0
        %949 = vmatprep.subr.mxu0 0.0
        %950 = vmatpush1.msra.mxu0 0.0
        %951 = vmatprep.subr.mxu0 0.0
        %952 = vmatpush1.msra.mxu0 0.0
        %953 = vmatprep.subr.mxu0 0.0
        %954 = vmatpush1.msra.mxu0 0.0
        %955 = vmatprep.subr.mxu0 0.0
        %956 = vmatpush1.msra.mxu0 0.0
        %957 = vmatprep.mubr.f32.mxu0 0.0
        %958 = vmatmul.mubr.f32.gmra.mrb[0].mxu0 %v887
        %v959 = vpop.f32.mrb[0].mxu0
        %v960 = vadd.f32 0.0, %v959
        %v961 = vpop.f32.mrb[0].mxu0
        %962 = vdwg.mxu0
        %963 = vrot.lane.b32.xlu0 %v519, 64
        %v964 = vpop.permute.xlu0 %963
        %v966 = vsel %vm540, %v964, %v784
        %v967 = vsel %vm542, %v966, %v703
        %v968 = vsel %vm544, %v967, %v622
        %v969 = vmul.f32 %v960, %v968
        %v970 = vadd.f32 %v969, 0.0
        %v971 = vmul.f32 %v872, %v883
        %v973 = vsel %vm885, %v971, 0
        %975 = vmatprep.subr.mxu0 0.0
        %976 = vmatpush1.msra.mxu0 %v891
        %977 = vmatprep.subr.mxu0 0.0
        %978 = vmatpush1.msra.mxu0 0.0
        %979 = vmatprep.subr.mxu0 0.0
        %980 = vmatpush1.msra.mxu0 0.0
        %981 = vmatprep.subr.mxu0 0.0
        %982 = vmatpush1.msra.mxu0 0.0
        %983 = vmatprep.subr.mxu0 0.0
        %984 = vmatpush1.msra.mxu0 0.0
        %985 = vmatprep.subr.mxu0 0.0
        %986 = vmatpush1.msra.mxu0 0.0
        %987 = vmatprep.subr.mxu0 0.0
        %988 = vmatpush1.msra.mxu0 0.0
        %989 = vmatprep.subr.mxu0 0.0
        %990 = vmatpush1.msra.mxu0 0.0
        %991 = vmatprep.subr.mxu0 0.0
        %992 = vmatpush1.msra.mxu0 0.0
        %993 = vmatprep.subr.mxu0 0.0
        %994 = vmatpush1.msra.mxu0 0.0
        %995 = vmatprep.subr.mxu0 0.0
        %996 = vmatpush1.msra.mxu0 0.0
        %997 = vmatprep.subr.mxu0 0.0
        %998 = vmatpush1.msra.mxu0 0.0
        %999 = vmatprep.subr.mxu0 0.0
        %1000 = vmatpush1.msra.mxu0 0.0
        %1001 = vmatprep.subr.mxu0 0.0
        %1002 = vmatpush1.msra.mxu0 0.0
        %1003 = vmatprep.subr.mxu0 0.0
        %1004 = vmatpush1.msra.mxu0 0.0
        %1005 = vmatprep.subr.mxu0 0.0
        %1006 = vmatpush1.msra.mxu0 0.0
        %1007 = vmatprep.subr.mxu0 0.0
        %1008 = vmatpush1.msra.mxu0 0.0
        %1009 = vmatprep.subr.mxu0 0.0
        %1010 = vmatpush1.msra.mxu0 0.0
        %1011 = vmatprep.subr.mxu0 0.0
        %1012 = vmatpush1.msra.mxu0 0.0
        %1013 = vmatprep.subr.mxu0 0.0
        %1014 = vmatpush1.msra.mxu0 0.0
        %1015 = vmatprep.subr.mxu0 0.0
        %1016 = vmatpush1.msra.mxu0 0.0
        %1017 = vmatprep.subr.mxu0 0.0
        %1018 = vmatpush1.msra.mxu0 0.0
        %1019 = vmatprep.subr.mxu0 0.0
        %1020 = vmatpush1.msra.mxu0 0.0
        %1021 = vmatprep.subr.mxu0 0.0
        %1022 = vmatpush1.msra.mxu0 0.0
        %1023 = vmatprep.subr.mxu0 0.0
        %1024 = vmatpush1.msra.mxu0 0.0
        %1025 = vmatprep.subr.mxu0 0.0
        %1026 = vmatpush1.msra.mxu0 0.0
        %1027 = vmatprep.subr.mxu0 0.0
        %1028 = vmatpush1.msra.mxu0 0.0
        %1029 = vmatprep.subr.mxu0 0.0
        %1030 = vmatpush1.msra.mxu0 0.0
        %1031 = vmatprep.subr.mxu0 0.0
        %1032 = vmatpush1.msra.mxu0 0.0
        %1033 = vmatprep.subr.mxu0 0.0
        %1034 = vmatpush1.msra.mxu0 0.0
        %1035 = vmatprep.subr.mxu0 0.0
        %1036 = vmatpush1.msra.mxu0 0.0
        %1037 = vmatprep.subr.mxu0 0.0
        %1038 = vmatpush1.msra.mxu0 0.0
        %1039 = vmatprep.mubr.f32.mxu0 0.0
        %1040 = vmatmul.mubr.f32.gmra.mrb[0].mxu0 %v973
        %v1041 = vpop.f32.mrb[0].mxu0
        %v1042 = vadd.f32 0.0, %v1041
        %v1043 = vpop.f32.mrb[0].mxu0
        %1044 = vdwg.mxu0
        %1045 = vrot.lane.b32.xlu0 %v519, 56
        %v1046 = vpop.permute.xlu0 %1045
        %v1048 = vsel %vm540, %v1046, %v964
        %v1049 = vsel %vm542, %v1048, %v784
        %v1050 = vsel %vm544, %v1049, %v703
        %v1051 = vmul.f32 %v1042, %v1050
        %v1052 = vadd.f32 %v970, %v1051
        %v1053 = vmul.f32 %v875, %v883
        %v1055 = vsel %vm885, %v1053, 0
        %1057 = vmatprep.subr.mxu0 0.0
        %1058 = vmatpush1.msra.mxu0 %v891
        %1059 = vmatprep.subr.mxu0 0.0
        %1060 = vmatpush1.msra.mxu0 0.0
        %1061 = vmatprep.subr.mxu0 0.0
        %1062 = vmatpush1.msra.mxu0 0.0
        %1063 = vmatprep.subr.mxu0 0.0
        %1064 = vmatpush1.msra.mxu0 0.0
        %1065 = vmatprep.subr.mxu0 0.0
        %1066 = vmatpush1.msra.mxu0 0.0
        %1067 = vmatprep.subr.mxu0 0.0
        %1068 = vmatpush1.msra.mxu0 0.0
        %1069 = vmatprep.subr.mxu0 0.0
        %1070 = vmatpush1.msra.mxu0 0.0
        %1071 = vmatprep.subr.mxu0 0.0
        %1072 = vmatpush1.msra.mxu0 0.0
        %1073 = vmatprep.subr.mxu0 0.0
        %1074 = vmatpush1.msra.mxu0 0.0
        %1075 = vmatprep.subr.mxu0 0.0
        %1076 = vmatpush1.msra.mxu0 0.0
        %1077 = vmatprep.subr.mxu0 0.0
        %1078 = vmatpush1.msra.mxu0 0.0
        %1079 = vmatprep.subr.mxu0 0.0
        %1080 = vmatpush1.msra.mxu0 0.0
        %1081 = vmatprep.subr.mxu0 0.0
        %1082 = vmatpush1.msra.mxu0 0.0
        %1083 = vmatprep.subr.mxu0 0.0
        %1084 = vmatpush1.msra.mxu0 0.0
        %1085 = vmatprep.subr.mxu0 0.0
        %1086 = vmatpush1.msra.mxu0 0.0
        %1087 = vmatprep.subr.mxu0 0.0
        %1088 = vmatpush1.msra.mxu0 0.0
        %1089 = vmatprep.subr.mxu0 0.0
        %1090 = vmatpush1.msra.mxu0 0.0
        %1091 = vmatprep.subr.mxu0 0.0
        %1092 = vmatpush1.msra.mxu0 0.0
        %1093 = vmatprep.subr.mxu0 0.0
        %1094 = vmatpush1.msra.mxu0 0.0
        %1095 = vmatprep.subr.mxu0 0.0
        %1096 = vmatpush1.msra.mxu0 0.0
        %1097 = vmatprep.subr.mxu0 0.0
        %1098 = vmatpush1.msra.mxu0 0.0
        %1099 = vmatprep.subr.mxu0 0.0
        %1100 = vmatpush1.msra.mxu0 0.0
        %1101 = vmatprep.subr.mxu0 0.0
        %1102 = vmatpush1.msra.mxu0 0.0
        %1103 = vmatprep.subr.mxu0 0.0
        %1104 = vmatpush1.msra.mxu0 0.0
        %1105 = vmatprep.subr.mxu0 0.0
        %1106 = vmatpush1.msra.mxu0 0.0
        %1107 = vmatprep.subr.mxu0 0.0
        %1108 = vmatpush1.msra.mxu0 0.0
        %1109 = vmatprep.subr.mxu0 0.0
        %1110 = vmatpush1.msra.mxu0 0.0
        %1111 = vmatprep.subr.mxu0 0.0
        %1112 = vmatpush1.msra.mxu0 0.0
        %1113 = vmatprep.subr.mxu0 0.0
        %1114 = vmatpush1.msra.mxu0 0.0
        %1115 = vmatprep.subr.mxu0 0.0
        %1116 = vmatpush1.msra.mxu0 0.0
        %1117 = vmatprep.subr.mxu0 0.0
        %1118 = vmatpush1.msra.mxu0 0.0
        %1119 = vmatprep.subr.mxu0 0.0
        %1120 = vmatpush1.msra.mxu0 0.0
        %1121 = vmatprep.mubr.f32.mxu0 0.0
        %1122 = vmatmul.mubr.f32.gmra.mrb[0].mxu0 %v1055
        %v1123 = vpop.f32.mrb[0].mxu0
        %v1124 = vadd.f32 0.0, %v1123
        %v1125 = vpop.f32.mrb[0].mxu0
        %1126 = vdwg.mxu0
        %1127 = vrot.lane.b32.xlu0 %v519, 48
        %v1128 = vpop.permute.xlu0 %1127
        %v1130 = vsel %vm540, %v1128, %v1046
        %v1131 = vsel %vm542, %v1130, %v964
        %v1132 = vsel %vm544, %v1131, %v784
        %v1133 = vmul.f32 %v1124, %v1132
        %v1134 = vadd.f32 %v1052, %v1133
        %v1135 = vmul.f32 %v878, %v883
        %v1137 = vsel %vm885, %v1135, 0
        %1139 = vmatprep.subr.mxu0 0.0
        %1140 = vmatpush1.msra.mxu0 %v891
        %1141 = vmatprep.subr.mxu0 0.0
        %1142 = vmatpush1.msra.mxu0 0.0
        %1143 = vmatprep.subr.mxu0 0.0
        %1144 = vmatpush1.msra.mxu0 0.0
        %1145 = vmatprep.subr.mxu0 0.0
        %1146 = vmatpush1.msra.mxu0 0.0
        %1147 = vmatprep.subr.mxu0 0.0
        %1148 = vmatpush1.msra.mxu0 0.0
        %1149 = vmatprep.subr.mxu0 0.0
        %1150 = vmatpush1.msra.mxu0 0.0
        %1151 = vmatprep.subr.mxu0 0.0
        %1152 = vmatpush1.msra.mxu0 0.0
        %1153 = vmatprep.subr.mxu0 0.0
        %1154 = vmatpush1.msra.mxu0 0.0
        %1155 = vmatprep.subr.mxu0 0.0
        %1156 = vmatpush1.msra.mxu0 0.0
        %1157 = vmatprep.subr.mxu0 0.0
        %1158 = vmatpush1.msra.mxu0 0.0
        %1159 = vmatprep.subr.mxu0 0.0
        %1160 = vmatpush1.msra.mxu0 0.0
        %1161 = vmatprep.subr.mxu0 0.0
        %1162 = vmatpush1.msra.mxu0 0.0
        %1163 = vmatprep.subr.mxu0 0.0
        %1164 = vmatpush1.msra.mxu0 0.0
        %1165 = vmatprep.subr.mxu0 0.0
        %1166 = vmatpush1.msra.mxu0 0.0
        %1167 = vmatprep.subr.mxu0 0.0
        %1168 = vmatpush1.msra.mxu0 0.0
        %1169 = vmatprep.subr.mxu0 0.0
        %1170 = vmatpush1.msra.mxu0 0.0
        %1171 = vmatprep.subr.mxu0 0.0
        %1172 = vmatpush1.msra.mxu0 0.0
        %1173 = vmatprep.subr.mxu0 0.0
        %1174 = vmatpush1.msra.mxu0 0.0
        %1175 = vmatprep.subr.mxu0 0.0
        %1176 = vmatpush1.msra.mxu0 0.0
        %1177 = vmatprep.subr.mxu0 0.0
        %1178 = vmatpush1.msra.mxu0 0.0
        %1179 = vmatprep.subr.mxu0 0.0
        %1180 = vmatpush1.msra.mxu0 0.0
        %1181 = vmatprep.subr.mxu0 0.0
        %1182 = vmatpush1.msra.mxu0 0.0
        %1183 = vmatprep.subr.mxu0 0.0
        %1184 = vmatpush1.msra.mxu0 0.0
        %1185 = vmatprep.subr.mxu0 0.0
        %1186 = vmatpush1.msra.mxu0 0.0
        %1187 = vmatprep.subr.mxu0 0.0
        %1188 = vmatpush1.msra.mxu0 0.0
        %1189 = vmatprep.subr.mxu0 0.0
        %1190 = vmatpush1.msra.mxu0 0.0
        %1191 = vmatprep.subr.mxu0 0.0
        %1192 = vmatpush1.msra.mxu0 0.0
        %1193 = vmatprep.subr.mxu0 0.0
        %1194 = vmatpush1.msra.mxu0 0.0
        %1195 = vmatprep.subr.mxu0 0.0
        %1196 = vmatpush1.msra.mxu0 0.0
        %1197 = vmatprep.subr.mxu0 0.0
        %1198 = vmatpush1.msra.mxu0 0.0
        %1199 = vmatprep.subr.mxu0 0.0
        %1200 = vmatpush1.msra.mxu0 0.0
        %1201 = vmatprep.subr.mxu0 0.0
        %1202 = vmatpush1.msra.mxu0 0.0
        %1203 = vmatprep.mubr.f32.mxu0 0.0
        %1204 = vmatmul.mubr.f32.gmra.mrb[0].mxu0 %v1137
        %v1205 = vpop.f32.mrb[0].mxu0
        %v1206 = vadd.f32 0.0, %v1205
        %v1207 = vpop.f32.mrb[0].mxu0
        %1208 = vdwg.mxu0
        %1209 = vrot.lane.b32.xlu0 %v519, 40
        %v1210 = vpop.permute.xlu0 %1209
        %v1212 = vsel %vm540, %v1210, %v1128
        %v1213 = vsel %vm542, %v1212, %v1046
        %v1214 = vsel %vm544, %v1213, %v964
        %v1215 = vmul.f32 %v1206, %v1214
        %v1216 = vadd.f32 %v1134, %v1215
        %v1218 = vrot.slane %v1216, 1
        %1219 = vrot.lane.b32.xlu0 %v1218, 8
        %v1220 = vpop.permute.xlu0 %1219
        %v1222 = vrot.slane %v1216, 2
        %1223 = vrot.lane.b32.xlu0 %v1222, 16
        %v1224 = vpop.permute.xlu0 %1223
        %v1226 = vrot.slane %v1216, 3
        %1227 = vrot.lane.b32.xlu0 %v1226, 24
        %v1228 = vpop.permute.xlu0 %1227
        %v1230 = vsel %vm540, %v1216, %v1220
        %v1231 = vsel %vm542, %v1230, %v1224
        %v1232 = vsel %vm544, %v1231, %v1228
        %1233 = vrot.lane.b32.xlu0 %v1216, 120
        %v1234 = vpop.permute.xlu0 %1233
        %1237 = vrot.lane.b32.xlu0 %v1222, 8
        %v1238 = vpop.permute.xlu0 %1237
        %1240 = vrot.lane.b32.xlu0 %v1226, 16
        %v1241 = vpop.permute.xlu0 %1240
        %v1243 = vsel %vm540, %v1234, %v1218
        %v1244 = vsel %vm542, %v1243, %v1238
        %v1245 = vsel %vm544, %v1244, %v1241
        %1246 = vrot.lane.b32.xlu0 %v1216, 112
        %v1247 = vpop.permute.xlu0 %1246
        %1249 = vrot.lane.b32.xlu0 %v1218, 120
        %v1250 = vpop.permute.xlu0 %1249
        %1253 = vrot.lane.b32.xlu0 %v1226, 8
        %v1254 = vpop.permute.xlu0 %1253
        %v1256 = vsel %vm540, %v1247, %v1250
        %v1257 = vsel %vm542, %v1256, %v1222
        %v1258 = vsel %vm544, %v1257, %v1254
        %1259 = vrot.lane.b32.xlu0 %v1216, 104
        %v1260 = vpop.permute.xlu0 %1259
        %1262 = vrot.lane.b32.xlu0 %v1218, 112
        %v1263 = vpop.permute.xlu0 %1262
        %1265 = vrot.lane.b32.xlu0 %v1222, 120
        %v1266 = vpop.permute.xlu0 %1265
        %v1269 = vsel %vm540, %v1260, %v1263
        %v1270 = vsel %vm542, %v1269, %v1266
        %v1271 = vsel %vm544, %v1270, %v1226
        %v1273 = vrot.slane %v1232, 3
        %v1276 = vrot.slane %v1245, 6
        %v1278 = vrot.slane %v1245, 1
        %v1281 = vrot.slane %v1258, 4
        %v1283 = vrot.slane %v1258, 7
        %v1286 = vrot.slane %v1271, 2
        %v1288 = vrot.slane %v1271, 5
        %vm1290 = vcmask 1040384
        %v1291 = vsel %vm1290, %v1232, %v1273
        %vm1292 = vcmask 1041408
        %v1293 = vsel %vm1292, %v1291, %v1276
        %vm1294 = vcmask 1042432
        %v1295 = vsel %vm1294, %v1293, %v1278
        %v1296 = vsel %vm889, %v1295, %v1281
        %vm1297 = vcmask 1044480
        %v1298 = vsel %vm1297, %v1296, %v1283
        %vm1299 = vcmask 1045504
        %v1300 = vsel %vm1299, %v1298, %v1286
        %vm1301 = vcmask 1046528
        %v1302 = vsel %vm1301, %v1300, %v1288
        %v1303 = vld [vmem:[%s3] sm:$0xff]
        %v1304 = vld [vmem:[%s3 + $0x8] sm:$0xff]
        %v1305 = vld [vmem:[%s3 + $0x10] sm:$0xff]
        %v1306 = vld [vmem:[%s3 + $0x18] sm:$0xff]
        %v1307 = vld [vmem:[%s4] sm:$0x1]
        %v1309 = vlaneseq
        %v1310 = vshrl.u32 %v1309, 7
        %v1311 = vsub.s32 0, %v1310
        %v1312 = vrot.slane %v1307, %v1311
        %v1315 = vsel %vm448, %v1302, 0
        %1317 = vmatprep.subr.mxu0 0.0
        %1318 = vmatpush1.msra.mxu0 %v1303
        %1319 = vmatprep.subr.mxu0 0.0
        %1320 = vmatpush1.msra.mxu0 %v1304
        %1321 = vmatprep.subr.mxu0 0.0
        %1322 = vmatpush1.msra.mxu0 %v1305
        %1323 = vmatprep.subr.mxu0 0.0
        %1324 = vmatpush1.msra.mxu0 %v1306
        %1325 = vmatprep.subr.mxu0 0.0
        %1326 = vmatpush1.msra.mxu0 0.0
        %1327 = vmatprep.subr.mxu0 0.0
        %1328 = vmatpush1.msra.mxu0 0.0
        %1329 = vmatprep.subr.mxu0 0.0
        %1330 = vmatpush1.msra.mxu0 0.0
        %1331 = vmatprep.subr.mxu0 0.0
        %1332 = vmatpush1.msra.mxu0 0.0
        %1333 = vmatprep.subr.mxu0 0.0
        %1334 = vmatpush1.msra.mxu0 0.0
        %1335 = vmatprep.subr.mxu0 0.0
        %1336 = vmatpush1.msra.mxu0 0.0
        %1337 = vmatprep.subr.mxu0 0.0
        %1338 = vmatpush1.msra.mxu0 0.0
        %1339 = vmatprep.subr.mxu0 0.0
        %1340 = vmatpush1.msra.mxu0 0.0
        %1341 = vmatprep.subr.mxu0 0.0
        %1342 = vmatpush1.msra.mxu0 0.0
        %1343 = vmatprep.subr.mxu0 0.0
        %1344 = vmatpush1.msra.mxu0 0.0
        %1345 = vmatprep.subr.mxu0 0.0
        %1346 = vmatpush1.msra.mxu0 0.0
        %1347 = vmatprep.subr.mxu0 0.0
        %1348 = vmatpush1.msra.mxu0 0.0
        %1349 = vmatprep.subr.mxu0 0.0
        %1350 = vmatpush1.msra.mxu0 0.0
        %1351 = vmatprep.subr.mxu0 0.0
        %1352 = vmatpush1.msra.mxu0 0.0
        %1353 = vmatprep.subr.mxu0 0.0
        %1354 = vmatpush1.msra.mxu0 0.0
        %1355 = vmatprep.subr.mxu0 0.0
        %1356 = vmatpush1.msra.mxu0 0.0
        %1357 = vmatprep.subr.mxu0 0.0
        %1358 = vmatpush1.msra.mxu0 0.0
        %1359 = vmatprep.subr.mxu0 0.0
        %1360 = vmatpush1.msra.mxu0 0.0
        %1361 = vmatprep.subr.mxu0 0.0
        %1362 = vmatpush1.msra.mxu0 0.0
        %1363 = vmatprep.subr.mxu0 0.0
        %1364 = vmatpush1.msra.mxu0 0.0
        %1365 = vmatprep.subr.mxu0 0.0
        %1366 = vmatpush1.msra.mxu0 0.0
        %1367 = vmatprep.subr.mxu0 0.0
        %1368 = vmatpush1.msra.mxu0 0.0
        %1369 = vmatprep.subr.mxu0 0.0
        %1370 = vmatpush1.msra.mxu0 0.0
        %1371 = vmatprep.subr.mxu0 0.0
        %1372 = vmatpush1.msra.mxu0 0.0
        %1373 = vmatprep.subr.mxu0 0.0
        %1374 = vmatpush1.msra.mxu0 0.0
        %1375 = vmatprep.subr.mxu0 0.0
        %1376 = vmatpush1.msra.mxu0 0.0
        %1377 = vmatprep.subr.mxu0 0.0
        %1378 = vmatpush1.msra.mxu0 0.0
        %1379 = vmatprep.subr.mxu0 0.0
        %1380 = vmatpush1.msra.mxu0 0.0
        %1381 = vmatprep.mubr.f32.mxu0 0.0
        %1382 = vmatmul.mubr.f32.gmra.mrb[0].mxu0 %v1315
        %v1383 = vpop.f32.mrb[0].mxu0
        %v1384 = vadd.f32 %v1312, %v1383
        %v1385 = vpop.f32.mrb[0].mxu0
        %1386 = vdwg.mxu0
        %v1387 = vadd.f32 %v436, %v1384
        %v1388 = vsel %vm448, %v1387, 0.0
        %1389 = vadd.xlane.f32.xlu0 %v1388
        %v1390 = vpop.xlane.xlu0 %1389
        %v1391 = vrcp.pop 32.0
        %v1392 = vmul.f32 %v1390, %v1391
        %v1393 = vsub.f32 %v1387, %v1392
        %v1394 = vmul.f32 %v1393, %v1393
        %v1395 = vsel %vm448, %v1394, 0.0
        %1396 = vadd.xlane.f32.xlu0 %v1395
        %v1397 = vpop.xlane.xlu0 %1396
        %v1398 = vmul.f32 %v1397, %v1391
        %v1399 = vadd.f32 %v1398, 1e-05
        %v1400 = vrsqrt.pop %v1399
        %v1401 = vmul.f32 %v1393, %v1400
        %v1402 = vld [vmem:[%s5] sm:$0x1]
        %v1404 = vlaneseq
        %v1405 = vshrl.u32 %v1404, 7
        %v1406 = vsub.s32 0, %v1405
        %v1407 = vrot.slane %v1402, %v1406
        %v1409 = vmul.f32 %v1401, %v1407
        %v1410 = vld [vmem:[%s6] sm:$0x1]
        %v1412 = vlaneseq
        %v1413 = vshrl.u32 %v1412, 7
        %v1414 = vsub.s32 0, %v1413
        %v1415 = vrot.slane %v1410, %v1414
        %v1417 = vadd.f32 %v1409, %v1415
        %v1418 = vld [vmem:[%s7] sm:$0xff]
        %v1419 = vld [vmem:[%s7 + $0x8] sm:$0xff]
        %v1420 = vld [vmem:[%s7 + $0x10] sm:$0xff]
        %v1421 = vld [vmem:[%s7 + $0x18] sm:$0xff]
        %v1422 = vld [vmem:[%s8] sm:$0x1]
        %v1424 = vlaneseq
        %v1425 = vshrl.u32 %v1424, 7
        %v1426 = vsub.s32 0, %v1425
        %v1427 = vrot.slane %v1422, %v1426
        %v1430 = vsel %vm448, %v1417, 0
        %1432 = vmatprep.subr.mxu0 0.0
        %1433 = vmatpush1.msra.mxu0 %v1418
        %1434 = vmatprep.subr.mxu0 0.0
        %1435 = vmatpush1.msra.mxu0 %v1419
        %1436 = vmatprep.subr.mxu0 0.0
        %1437 = vmatpush1.msra.mxu0 %v1420
        %1438 = vmatprep.subr.mxu0 0.0
        %1439 = vmatpush1.msra.mxu0 %v1421
        %1440 = vmatprep.subr.mxu0 0.0
        %1441 = vmatpush1.msra.mxu0 0.0
        %1442 = vmatprep.subr.mxu0 0.0
        %1443 = vmatpush1.msra.mxu0 0.0
        %1444 = vmatprep.subr.mxu0 0.0
        %1445 = vmatpush1.msra.mxu0 0.0
        %1446 = vmatprep.subr.mxu0 0.0
        %1447 = vmatpush1.msra.mxu0 0.0
        %1448 = vmatprep.subr.mxu0 0.0
        %1449 = vmatpush1.msra.mxu0 0.0
        %1450 = vmatprep.subr.mxu0 0.0
        %1451 = vmatpush1.msra.mxu0 0.0
        %1452 = vmatprep.subr.mxu0 0.0
        %1453 = vmatpush1.msra.mxu0 0.0
        %1454 = vmatprep.subr.mxu0 0.0
        %1455 = vmatpush1.msra.mxu0 0.0
        %1456 = vmatprep.subr.mxu0 0.0
        %1457 = vmatpush1.msra.mxu0 0.0
        %1458 = vmatprep.subr.mxu0 0.0
        %1459 = vmatpush1.msra.mxu0 0.0
        %1460 = vmatprep.subr.mxu0 0.0
        %1461 = vmatpush1.msra.mxu0 0.0
        %1462 = vmatprep.subr.mxu0 0.0
        %1463 = vmatpush1.msra.mxu0 0.0
        %1464 = vmatprep.subr.mxu0 0.0
        %1465 = vmatpush1.msra.mxu0 0.0
        %1466 = vmatprep.subr.mxu0 0.0
        %1467 = vmatpush1.msra.mxu0 0.0
        %1468 = vmatprep.subr.mxu0 0.0
        %1469 = vmatpush1.msra.mxu0 0.0
        %1470 = vmatprep.subr.mxu0 0.0
        %1471 = vmatpush1.msra.mxu0 0.0
        %1472 = vmatprep.subr.mxu0 0.0
        %1473 = vmatpush1.msra.mxu0 0.0
        %1474 = vmatprep.subr.mxu0 0.0
        %1475 = vmatpush1.msra.mxu0 0.0
        %1476 = vmatprep.subr.mxu0 0.0
        %1477 = vmatpush1.msra.mxu0 0.0
        %1478 = vmatprep.subr.mxu0 0.0
        %1479 = vmatpush1.msra.mxu0 0.0
        %1480 = vmatprep.subr.mxu0 0.0
        %1481 = vmatpush1.msra.mxu0 0.0
        %1482 = vmatprep.subr.mxu0 0.0
        %1483 = vmatpush1.msra.mxu0 0.0
        %1484 = vmatprep.subr.mxu0 0.0
        %1485 = vmatpush1.msra.mxu0 0.0
        %1486 = vmatprep.subr.mxu0 0.0
        %1487 = vmatpush1.msra.mxu0 0.0
        %1488 = vmatprep.subr.mxu0 0.0
        %1489 = vmatpush1.msra.mxu0 0.0
        %1490 = vmatprep.subr.mxu0 0.0
        %1491 = vmatpush1.msra.mxu0 0.0
        %1492 = vmatprep.subr.mxu0 0.0
        %1493 = vmatpush1.msra.mxu0 0.0
        %1494 = vmatprep.subr.mxu0 0.0
        %1495 = vmatpush1.msra.mxu0 0.0
        %1496 = vmatprep.mubr.f32.mxu0 0.0
        %1497 = vmatmul.mubr.f32.gmra.mrb[0].mxu0 %v1430
        %v1498 = vpop.f32.mrb[0].mxu0
        %v1499 = vadd.f32 %v1427, %v1498
        %v1500 = vpop.f32.mrb[0].mxu0
        %1501 = vdwg.mxu0
        %v1502 = vmax.f32 %v1499, 0.0
        %v1503 = vld [vmem:[%s9] sm:$0xff]
        %v1504 = vld [vmem:[%s9 + $0x8] sm:$0xff]
        %v1505 = vld [vmem:[%s9 + $0x10] sm:$0xff]
        %v1506 = vld [vmem:[%s9 + $0x18] sm:$0xff]
        %v1507 = vld [vmem:[%s9 + $0x20] sm:$0xff]
        %v1508 = vld [vmem:[%s9 + $0x28] sm:$0xff]
        %v1509 = vld [vmem:[%s9 + $0x30] sm:$0xff]
        %v1510 = vld [vmem:[%s9 + $0x38] sm:$0xff]
        %v1511 = vld [vmem:[%s10] sm:$0x1]
        %v1513 = vlaneseq
        %v1514 = vshrl.u32 %v1513, 7
        %v1515 = vsub.s32 0, %v1514
        %v1516 = vrot.slane %v1511, %v1515
        %vm1518 = vcmask 523264
        %v1520 = vsel %vm1518, %v1502, 0
        %1522 = vmatprep.subr.mxu0 0.0
        %1523 = vmatpush1.msra.mxu0 %v1503
        %1524 = vmatprep.subr.mxu0 0.0
        %1525 = vmatpush1.msra.mxu0 %v1504
        %1526 = vmatprep.subr.mxu0 0.0
        %1527 = vmatpush1.msra.mxu0 %v1505
        %1528 = vmatprep.subr.mxu0 0.0
        %1529 = vmatpush1.msra.mxu0 %v1506
        %1530 = vmatprep.subr.mxu0 0.0
        %1531 = vmatpush1.msra.mxu0 %v1507
        %1532 = vmatprep.subr.mxu0 0.0
        %1533 = vmatpush1.msra.mxu0 %v1508
        %1534 = vmatprep.subr.mxu0 0.0
        %1535 = vmatpush1.msra.mxu0 %v1509
        %1536 = vmatprep.subr.mxu0 0.0
        %1537 = vmatpush1.msra.mxu0 %v1510
        %1538 = vmatprep.subr.mxu0 0.0
        %1539 = vmatpush1.msra.mxu0 0.0
        %1540 = vmatprep.subr.mxu0 0.0
        %1541 = vmatpush1.msra.mxu0 0.0
        %1542 = vmatprep.subr.mxu0 0.0
        %1543 = vmatpush1.msra.mxu0 0.0
        %1544 = vmatprep.subr.mxu0 0.0
        %1545 = vmatpush1.msra.mxu0 0.0
        %1546 = vmatprep.subr.mxu0 0.0
        %1547 = vmatpush1.msra.mxu0 0.0
        %1548 = vmatprep.subr.mxu0 0.0
        %1549 = vmatpush1.msra.mxu0 0.0
        %1550 = vmatprep.subr.mxu0 0.0
        %1551 = vmatpush1.msra.mxu0 0.0
        %1552 = vmatprep.subr.mxu0 0.0
        %1553 = vmatpush1.msra.mxu0 0.0
        %1554 = vmatprep.subr.mxu0 0.0
        %1555 = vmatpush1.msra.mxu0 0.0
        %1556 = vmatprep.subr.mxu0 0.0
        %1557 = vmatpush1.msra.mxu0 0.0
        %1558 = vmatprep.subr.mxu0 0.0
        %1559 = vmatpush1.msra.mxu0 0.0
        %1560 = vmatprep.subr.mxu0 0.0
        %1561 = vmatpush1.msra.mxu0 0.0
        %1562 = vmatprep.subr.mxu0 0.0
        %1563 = vmatpush1.msra.mxu0 0.0
        %1564 = vmatprep.subr.mxu0 0.0
        %1565 = vmatpush1.msra.mxu0 0.0
        %1566 = vmatprep.subr.mxu0 0.0
        %1567 = vmatpush1.msra.mxu0 0.0
        %1568 = vmatprep.subr.mxu0 0.0
        %1569 = vmatpush1.msra.mxu0 0.0
        %1570 = vmatprep.subr.mxu0 0.0
        %1571 = vmatpush1.msra.mxu0 0.0
        %1572 = vmatprep.subr.mxu0 0.0
        %1573 = vmatpush1.msra.mxu0 0.0
        %1574 = vmatprep.subr.mxu0 0.0
        %1575 = vmatpush1.msra.mxu0 0.0
        %1576 = vmatprep.subr.mxu0 0.0
        %1577 = vmatpush1.msra.mxu0 0.0
        %1578 = vmatprep.subr.mxu0 0.0
        %1579 = vmatpush1.msra.mxu0 0.0
        %1580 = vmatprep.subr.mxu0 0.0
        %1581 = vmatpush1.msra.mxu0 0.0
        %1582 = vmatprep.subr.mxu0 0.0
        %1583 = vmatpush1.msra.mxu0 0.0
        %1584 = vmatprep.subr.mxu0 0.0
        %1585 = vmatpush1.msra.mxu0 0.0
        %1586 = vmatprep.mubr.f32.mxu0 0.0
        %1587 = vmatmul.mubr.f32.gmra.mrb[0].mxu0 %v1520
        %v1588 = vpop.f32.mrb[0].mxu0
        %v1589 = vadd.f32 %v1516, %v1588
        %v1590 = vpop.f32.mrb[0].mxu0
        %1591 = vdwg.mxu0
        %v1592 = vadd.f32 %v1417, %v1589
        %v1593 = vsel %vm448, %v1592, 0.0
        %1594 = vadd.xlane.f32.xlu0 %v1593
        %v1595 = vpop.xlane.xlu0 %1594
        %v1596 = vmul.f32 %v1595, %v1391
        %v1597 = vsub.f32 %v1592, %v1596
        %v1598 = vmul.f32 %v1597, %v1597
        %v1599 = vsel %vm448, %v1598, 0.0
        %1600 = vadd.xlane.f32.xlu0 %v1599
        %v1601 = vpop.xlane.xlu0 %1600
        %v1602 = vmul.f32 %v1601, %v1391
        %v1603 = vadd.f32 %v1602, 1e-05
        %v1604 = vrsqrt.pop %v1603
        %v1605 = vmul.f32 %v1597, %v1604
        %v1606 = vmul.f32 %v1605, %v1407
        %v1607 = vadd.f32 %v1606, %v1415
        %1608 = vst.msk [vmem:[%s431] sm:$0xff] %vm448, %v1607
        %s1609 = sand.u32 %s313, 1
        %s1610 = scalar_lea.sflag [#allocation3], %s1609
        %s1611 = sand.u32 %s313, 1
        %s1612 = smul.addr %s1611, 8
        %s1613 = scalar_lea.vmem [#allocation2], %s1612
        // Predicated region
        $region73: #{tpu_custom_call.1} parent=71 // pred_check
          %p1614 = pneg %p323
        $region74: #{tpu_custom_call.1} parent=71 // pred_check_branch
          %1616 = sbr.rel (%p1614) target = $region76
        $region75: #{tpu_custom_call.1} parent=71 // pred_region
          %s1618 = ssub.s32 128, 128
          %1619 = vsyncadd %s1610, %s1618
          %s1620 = smul.addr %s27, 128
          %s1621 = scalar_lea.hbm %s13, %s1620
          %s1623 = sshll.u32 %s1613, 4
          %s1624 = int_to_ptr.vmem [resolvable:$true] %s1623
          %1626 = dma.vmem_to_hbm [thread:$0]  %s1624, 128, %s1621, %s1610
        $region76: #{tpu_custom_call.1} parent=71 // pred_fallthru
          _
      $region72: #{tpu_custom_call.1} parent=5 // pred_fallthru
        _
      %p1627 = scmp.le.s32.totalorder 2, %s22
      // Predicated region
      $region77: #{tpu_custom_call.1} parent=5 // pred_check
        %p1628 = pneg %p1627
      $region78: #{tpu_custom_call.1} parent=5 // pred_check_branch
        %1630 = sbr.rel (%p1628) target = $region80
      $region79: #{tpu_custom_call.1} parent=5 // pred_region
        %s1631 = ssub.s32 %s22, 2
        // Predicated region
        $region81: #{tpu_custom_call.1} parent=79 // pred_check
          %p1632 = pneg %p329
        $region82: #{tpu_custom_call.1} parent=79 // pred_check_branch
          %1634 = sbr.rel (%p1632) target = $region84
        $region83: #{tpu_custom_call.1} parent=79 // pred_region
          %s1635 = sand.u32 %s314, 1
          %s1636 = scalar_lea.sflag [#allocation3], %s1635
          %s1637 = sand.u32 %s314, 1
          %s1638 = smul.addr %s1637, 8
          %s1639 = scalar_lea.vmem [#allocation2], %s1638
          %1640 = dma.done %s1636, 128
        $region84: #{tpu_custom_call.1} parent=79 // pred_fallthru
          _
      $region80: #{tpu_custom_call.1} parent=5 // pred_fallthru
        _
    $region6: #{tpu_custom_call.1} parent=1 // loop_footer
      %s26 = sadd.s32 1, %s22
    $region7: #{tpu_custom_call.1} parent=1 // loop_footer_branch
      %21 = sbr.rel target = $region3
    $region8: #{tpu_custom_call.1} parent=1 // loop_exit
      _
    %1641 = vsyncpa [#allocation3], 1
    %s1642 = scalar_lea.sflag [#allocation3], 1
    %1643 = vsyncpa %s1642, 1

</llo_original>
